<compile_context>
chip_gen: v6e
topology: v6e:2x2x1
jax: 0.10.0
libtpu: 0.0.40
codegen_flags: <defaults>
</compile_context>

<pallas_src>
import functools

import jax
import jax.numpy as jnp
from jax.experimental import pallas as pl
from jax.experimental.pallas import tpu as pltpu


def _round_up(x, m):
    return ((x + m - 1) // m) * m


# ----------------------------------------------------------------------------
# Kernel: one (BN, M*D) tile of nodes, full SemanticAttention fused.
# ----------------------------------------------------------------------------
def _sem_att_kernel(z_ref, w1_ref, b1_ref, w2_ref, o_ref, *, num_branches, in_dim):
    """z_ref : (BN, M*D)  node tile; branch m lives in lanes [m*D, (m+1)*D)
    w1_ref: (D, H)       project[0].weight^T (same dtype as z)
    b1_ref: (1, H)       project[0].bias     (f32)
    w2_ref: (1, H)       project[2].weight   (f32; Linear(H, 1, bias=False))
    o_ref : (BN, D)      (beta * z).sum over branches
    """
    d = in_dim
    w1 = w1_ref[...]
    b1 = b1_ref[...]
    w2 = w2_ref[...]

    # Per-branch attention logits: tanh(z_m @ W1 + b1) . w2
    # The w2 contraction is a VPU multiply + lane reduce (XLU slot), not a
    # 1-lane-wide MXU matmul.  MXU accumulates in f32.
    logits = []
    for m in range(num_branches):
        zm = z_ref[:, m * d:(m + 1) * d]
        hm = jnp.tanh(jnp.dot(zm, w1, preferred_element_type=jnp.float32) + b1)
        logits.append(jnp.sum(hm * w2, axis=-1, keepdims=True))       # (BN, 1) f32

    # Concat-free, numerically-stable softmax over the branch axis
    # (pure VPU/EUP on data already in vregs; no (BN, M) concat or column slices).
    mx = logits[0]
    for m in range(1, num_branches):
        mx = jnp.maximum(mx, logits[m])
    exps = [jnp.exp(lg - mx) for lg in logits]
    tot = exps[0]
    for m in range(1, num_branches):
        tot = tot + exps[m]
    # EUP reciprocal (free slot); ~1e-3 relative deviation from exact softmax.
    inv = pl.reciprocal(tot, approx=True)

    # Weighted sum over branches; f32 accumulation, lane-dense (BN, D) store.
    acc = (exps[0] * inv) * z_ref[:, 0:d].astype(jnp.float32)
    for m in range(1, num_branches):
        acc = acc + (exps[m] * inv) * z_ref[:, m * d:(m + 1) * d].astype(jnp.float32)
    o_ref[...] = acc.astype(o_ref.dtype)


# ----------------------------------------------------------------------------
# Wrapper: tiling, layout, dtype handling.
# ----------------------------------------------------------------------------
def semantic_attention(z, w1, b1, w2, *, block_n=2048, out_dtype=None):
    """SemanticAttention forward.  z: (N, M, D) -> (N, 1, D) (keepdim, as in torch).

    z's dtype drives the streaming/MXU dtype: pass bf16 z (and out_dtype=bf16)
    for the memory-bound fast path; the wrapper never casts z (that would cost
    a full HBM round trip).  tanh/softmax/weighted-sum accumulate in f32.
    """
    n, m, d = z.shape
    h = w1.shape[1]
    mm_dtype = z.dtype
    out_dtype = out_dtype if out_dtype is not None else z.dtype

    # FREE metadata reshape (contiguous): branch m occupies lanes [m*D, (m+1)*D).
    z2 = z.reshape(n, m * d)
    w1c = w1.astype(mm_dtype)                               # tiny
    b1r = jnp.asarray(b1, jnp.float32).reshape(1, h)
    w2r = jnp.asarray(w2, jnp.float32).reshape(1, h)        # Linear(H, 1, bias=False)

    # Generation-aware VMEM budget (v7x: 64 MiB/TC physical; v5e/v6e: 128 MiB).
    try:
        vmem_cap = int(pltpu.get_tpu_info().vmem_capacity_bytes)
    except Exception:
        vmem_cap = 64 * 1024 * 1024                         # conservative (v7x per-TC)
    vmem_limit = min(48 * 1024 * 1024, (vmem_cap * 3) // 4)
    budget = vmem_limit - 8 * 1024 * 1024                   # headroom: weights + scratch

    z_bytes = jnp.dtype(mm_dtype).itemsize
    o_bytes = jnp.dtype(out_dtype).itemsize

    bn = min(_round_up(block_n, 8), _round_up(n, 8))
    # Keep >= 2 grid steps when possible so the v7x megacore shards the N axis.
    if n > 8 and pl.cdiv(n, bn) < 2:
        bn = min(bn, _round_up(pl.cdiv(n, 2), 8))

    def _pipeline_bytes(b):                                 # double-buffered in + out
        return 2 * (b * m * d * z_bytes) + 2 * (b * d * o_bytes)

    while bn > 8 and _pipeline_bytes(bn) > budget:
        bn = max(8, _round_up(bn // 2, 8))

    grid = (pl.cdiv(n, bn),)                                # edge block handled by Pallas

    out = pl.pallas_call(
        functools.partial(_sem_att_kernel, num_branches=m, in_dim=d),
        out_shape=jax.ShapeDtypeStruct((n, d), out_dtype),
        grid_spec=pltpu.PrefetchScalarGridSpec(
            num_scalar_prefetch=0,
            grid=grid,
            in_specs=[
                pl.BlockSpec((bn, m * d), lambda i: (i, 0)),   # z tile (pipelined, contiguous DMA)
                pl.BlockSpec((d, h), lambda i: (0, 0)),        # W1 (VMEM-resident)
                pl.BlockSpec((1, h), lambda i: (0, 0)),        # b1 (resident)
                pl.BlockSpec((1, h), lambda i: (0, 0)),        # w2 (resident)
            ],
            out_specs=pl.BlockSpec((bn, d), lambda i: (i, 0)),
        ),
        compiler_params=pltpu.CompilerParams(
            dimension_semantics=("parallel",),   # shard N tiles across v7x TensorCores
            vmem_limit_bytes=vmem_limit,
        ),
    )(z2, w1c, b1r, w2r)

    return out.reshape(n, 1, d)


# ----------------------------------------------------------------------------
# Pure-JAX reference (same math as the torch module).
# ----------------------------------------------------------------------------
def semantic_attention_reference(z, w1, b1, w2):
    w = jnp.tanh(jnp.einsum("nmd,dh->nmh", z, w1) + b1)
    logits = jnp.einsum("nmh,ho->nmo", w, w2)
    beta = jax.nn.softmax(logits, axis=1)
    return jnp.sum(beta * z, axis=1, keepdims=True)


if __name__ == "__main__":
    # N nodes, M branches (metapaths / hops), D features, H hidden.
    # D is a lane-dense multiple of 128; N is deliberately NOT a multiple of
    # the tile so Pallas's implicit edge-block handling is exercised.
    N, M, D, H = 1000, 3, 128, 64

    key = jax.random.PRNGKey(0)
    kz, k1, k2, k3 = jax.random.split(key, 4)
    z = jax.random.normal(kz, (N, M, D), dtype=jnp.float32)
    bd = 1.0 / jnp.sqrt(D)
    bh = 1.0 / jnp.sqrt(H)
    w1 = jax.random.uniform(k1, (D, H), jnp.float32, -bd, bd)
    b1 = jax.random.uniform(k2, (H,), jnp.float32, -bd, bd)
    w2 = jax.random.uniform(k3, (H, 1), jnp.float32, -bh, bh)

    # f32 path.  Tolerance 3e-2 (observed ~7e-3) covers TPU default-precision
    # (bf16-pass) MXU matmuls in the reference, EUP tanh, and the approximate
    # reciprocal — deliberate, documented deviations from exact f32 torch math.
    out = jax.block_until_ready(semantic_attention(z, w1, b1, w2))
    ref = semantic_attention_reference(z, w1, b1, w2)
    assert out.shape == (N, 1, D), out.shape
    assert jnp.allclose(out, ref, atol=3e-2, rtol=3e-2), \
        ("f32 mismatch", float(jnp.max(jnp.abs(out - ref))))

    # bf16 fast path: the CALLER supplies bf16 z (no hidden cast round trip)
    # and a bf16 output; checked against the reference on bf16-quantized inputs.
    out_bf16 = jax.block_until_ready(
        semantic_attention(z.astype(jnp.bfloat16), w1, b1, w2,
                           out_dtype=jnp.bfloat16))
    z_q = z.astype(jnp.bfloat16).astype(jnp.float32)
    w1_q = w1.astype(jnp.bfloat16).astype(jnp.float32)
    ref_q = semantic_attention_reference(z_q, w1_q, b1, w2)
    assert out_bf16.shape == (N, 1, D), out_bf16.shape
    assert jnp.allclose(out_bf16.astype(jnp.float32), ref_q, atol=6e-2, rtol=6e-2), \
        ("bf16 mismatch", float(jnp.max(jnp.abs(out_bf16.astype(jnp.float32) - ref_q))))

    print("KERNEL_OK")
</pallas_src>

<mosaic_0001>
module attributes {stable_mosaic.version = 11 : i64} {
  func.func @_sem_att_kernel(%arg0: i32, %arg1: memref<504x384xf32, #tpu.memory_space<vmem>>, %arg2: memref<128x64xf32, #tpu.memory_space<vmem>>, %arg3: memref<1x64xf32, #tpu.memory_space<vmem>>, %arg4: memref<1x64xf32, #tpu.memory_space<vmem>>, %arg5: memref<504x128xf32, #tpu.memory_space<vmem>>) attributes {dimension_semantics = [#tpu.dimension_semantics<parallel>], iteration_bounds = array<i64: 2>, scalar_prefetch = 0 : i64, scratch_operands = 0 : i64, tpu.core_type = #tpu.core_type<tc>, window_params = [{transform_indices = @transform_0, window_bounds = array<i64: 504, 384>}, {pipeline_mode = #tpu.pipeline_mode<synchronous>, transform_indices = @transform_1, window_bounds = array<i64: 128, 64>}, {pipeline_mode = #tpu.pipeline_mode<synchronous>, transform_indices = @transform_2, window_bounds = array<i64: 1, 64>}, {pipeline_mode = #tpu.pipeline_mode<synchronous>, transform_indices = @transform_3, window_bounds = array<i64: 1, 64>}, {transform_indices = @transform_4, window_bounds = array<i64: 504, 128>}]} {
    %c0 = arith.constant 0 : index
    %c0_0 = arith.constant 0 : index
    %0 = vector.load %arg2[%c0, %c0_0] : memref<128x64xf32, #tpu.memory_space<vmem>>, vector<128x64xf32>
    %c0_1 = arith.constant 0 : index
    %c0_2 = arith.constant 0 : index
    %1 = vector.load %arg3[%c0_1, %c0_2] : memref<1x64xf32, #tpu.memory_space<vmem>>, vector<1x64xf32>
    %c0_3 = arith.constant 0 : index
    %c0_4 = arith.constant 0 : index
    %2 = vector.load %arg4[%c0_3, %c0_4] : memref<1x64xf32, #tpu.memory_space<vmem>>, vector<1x64xf32>
    %c0_5 = arith.constant 0 : index
    %c0_6 = arith.constant 0 : index
    %3 = vector.load %arg1[%c0_5, %c0_6] : memref<504x384xf32, #tpu.memory_space<vmem>>, vector<504x128xf32>
    %cst = arith.constant dense<0.000000e+00> : vector<504x64xf32>
    %4 = tpu.matmul %3, %0, %cst {dimension_numbers = #tpu.dot_dimension_numbers<[1], [0], [0], [1], [0, 0, 1, 1], [], []>} : vector<504x128xf32>, vector<128x64xf32>, vector<504x64xf32> -> vector<504x64xf32>
    %5 = vector.broadcast %1 : vector<1x64xf32> to vector<504x64xf32>
    %6 = arith.addf %4, %5 : vector<504x64xf32>
    %7 = math.tanh %6 : vector<504x64xf32>
    %8 = vector.broadcast %2 : vector<1x64xf32> to vector<504x64xf32>
    %9 = arith.mulf %7, %8 : vector<504x64xf32>
    %cst_7 = arith.constant dense<0.000000e+00> : vector<504xf32>
    %10 = vector.multi_reduction <add>, %9, %cst_7 [1] : vector<504x64xf32> to vector<504xf32>
    %11 = vector.shape_cast %10 : vector<504xf32> to vector<504x1xf32>
    %c0_8 = arith.constant 0 : index
    %c128 = arith.constant 128 : index
    %12 = vector.load %arg1[%c0_8, %c128] : memref<504x384xf32, #tpu.memory_space<vmem>>, vector<504x128xf32>
    %cst_9 = arith.constant dense<0.000000e+00> : vector<504x64xf32>
    %13 = tpu.matmul %12, %0, %cst_9 {dimension_numbers = #tpu.dot_dimension_numbers<[1], [0], [0], [1], [0, 0, 1, 1], [], []>} : vector<504x128xf32>, vector<128x64xf32>, vector<504x64xf32> -> vector<504x64xf32>
    %14 = vector.broadcast %1 : vector<1x64xf32> to vector<504x64xf32>
    %15 = arith.addf %13, %14 : vector<504x64xf32>
    %16 = math.tanh %15 : vector<504x64xf32>
    %17 = vector.broadcast %2 : vector<1x64xf32> to vector<504x64xf32>
    %18 = arith.mulf %16, %17 : vector<504x64xf32>
    %cst_10 = arith.constant dense<0.000000e+00> : vector<504xf32>
    %19 = vector.multi_reduction <add>, %18, %cst_10 [1] : vector<504x64xf32> to vector<504xf32>
    %20 = vector.shape_cast %19 : vector<504xf32> to vector<504x1xf32>
    %c0_11 = arith.constant 0 : index
    %c256 = arith.constant 256 : index
    %21 = vector.load %arg1[%c0_11, %c256] : memref<504x384xf32, #tpu.memory_space<vmem>>, vector<504x128xf32>
    %cst_12 = arith.constant dense<0.000000e+00> : vector<504x64xf32>
    %22 = tpu.matmul %21, %0, %cst_12 {dimension_numbers = #tpu.dot_dimension_numbers<[1], [0], [0], [1], [0, 0, 1, 1], [], []>} : vector<504x128xf32>, vector<128x64xf32>, vector<504x64xf32> -> vector<504x64xf32>
    %23 = vector.broadcast %1 : vector<1x64xf32> to vector<504x64xf32>
    %24 = arith.addf %22, %23 : vector<504x64xf32>
    %25 = math.tanh %24 : vector<504x64xf32>
    %26 = vector.broadcast %2 : vector<1x64xf32> to vector<504x64xf32>
    %27 = arith.mulf %25, %26 : vector<504x64xf32>
    %cst_13 = arith.constant dense<0.000000e+00> : vector<504xf32>
    %28 = vector.multi_reduction <add>, %27, %cst_13 [1] : vector<504x64xf32> to vector<504xf32>
    %29 = vector.shape_cast %28 : vector<504xf32> to vector<504x1xf32>
    %30 = arith.maximumf %11, %20 : vector<504x1xf32>
    %31 = arith.maximumf %30, %29 : vector<504x1xf32>
    %32 = arith.subf %11, %31 : vector<504x1xf32>
    %33 = math.exp %32 : vector<504x1xf32>
    %34 = arith.subf %20, %31 : vector<504x1xf32>
    %35 = math.exp %34 : vector<504x1xf32>
    %36 = arith.subf %29, %31 : vector<504x1xf32>
    %37 = math.exp %36 : vector<504x1xf32>
    %38 = arith.addf %33, %35 : vector<504x1xf32>
    %39 = arith.addf %38, %37 : vector<504x1xf32>
    %40 = tpu.reciprocal %39 {approx = true} : vector<504x1xf32> -> vector<504x1xf32>
    %41 = arith.mulf %33, %40 : vector<504x1xf32>
    %c0_14 = arith.constant 0 : index
    %c0_15 = arith.constant 0 : index
    %42 = vector.load %arg1[%c0_14, %c0_15] : memref<504x384xf32, #tpu.memory_space<vmem>>, vector<504x128xf32>
    %43 = vector.broadcast %41 : vector<504x1xf32> to vector<504x128xf32>
    %44 = arith.mulf %43, %42 : vector<504x128xf32>
    %45 = arith.mulf %35, %40 : vector<504x1xf32>
    %c0_16 = arith.constant 0 : index
    %c128_17 = arith.constant 128 : index
    %46 = vector.load %arg1[%c0_16, %c128_17] : memref<504x384xf32, #tpu.memory_space<vmem>>, vector<504x128xf32>
    %47 = vector.broadcast %45 : vector<504x1xf32> to vector<504x128xf32>
    %48 = arith.mulf %47, %46 : vector<504x128xf32>
    %49 = arith.addf %44, %48 : vector<504x128xf32>
    %50 = arith.mulf %37, %40 : vector<504x1xf32>
    %c0_18 = arith.constant 0 : index
    %c256_19 = arith.constant 256 : index
    %51 = vector.load %arg1[%c0_18, %c256_19] : memref<504x384xf32, #tpu.memory_space<vmem>>, vector<504x128xf32>
    %52 = vector.broadcast %50 : vector<504x1xf32> to vector<504x128xf32>
    %53 = arith.mulf %52, %51 : vector<504x128xf32>
    %54 = arith.addf %49, %53 : vector<504x128xf32>
    %c0_20 = arith.constant 0 : index
    %c0_21 = arith.constant 0 : index
    %55 = vector.load %arg5[%c0_20, %c0_21] : memref<504x128xf32, #tpu.memory_space<vmem>>, vector<504x128xf32>
    tpu.vector_store %arg5[%c0_20, %c0_21], %54 {strides = array<i32>} : memref<504x128xf32, #tpu.memory_space<vmem>>, vector<504x128xf32>,
    return
  }
  func.func @transform_0(%arg0: i32) -> (i32, i32) {
    %c0_i32 = arith.constant 0 : i32
    %c0_i32_0 = arith.constant 0 : i32
    return %arg0, %c0_i32 : i32, i32
  }
  func.func @transform_1(%arg0: i32) -> (i32, i32) {
    %c0_i32 = arith.constant 0 : i32
    %c0_i32_0 = arith.constant 0 : i32
    %c0_i32_1 = arith.constant 0 : i32
    return %c0_i32, %c0_i32_0 : i32, i32
  }
  func.func @transform_2(%arg0: i32) -> (i32, i32) {
    %c0_i32 = arith.constant 0 : i32
    %c0_i32_0 = arith.constant 0 : i32
    %c0_i32_1 = arith.constant 0 : i32
    return %c0_i32, %c0_i32_0 : i32, i32
  }
  func.func @transform_3(%arg0: i32) -> (i32, i32) {
    %c0_i32 = arith.constant 0 : i32
    %c0_i32_0 = arith.constant 0 : i32
    %c0_i32_1 = arith.constant 0 : i32
    return %c0_i32, %c0_i32_0 : i32, i32
  }
  func.func @transform_4(%arg0: i32) -> (i32, i32) {
    %c0_i32 = arith.constant 0 : i32
    %c0_i32_0 = arith.constant 0 : i32
    return %arg0, %c0_i32 : i32, i32
  }
}

</mosaic_0001>

<llo_original>
// kernel: tpu_custom_call.1
$region0: #{tpu_custom_call.1}
  #allocation0 [shape = 'u32[]', space=smem, size = 0x4, offset = 0x4, fixed_abs, tag = 'smem constant byte address 0x4 - core index']
  #allocation1 [shape = 'u32[144,128]{1,0:T(1,128)}', space=vmem, size = 0x12000, scoped, tag = 'internal scratch']
  %s0 = inlined_call_operand.hbm [shape: f32[1000,384], index: 0, kind: input, shape index: {}]
  %s1 = inlined_call_operand.vmem [shape: f32[128,64], index: 1, kind: input, shape index: {}]
  %s2 = inlined_call_operand.hbm [shape: f32[1,64], index: 2, kind: input, shape index: {}]
  %s3 = inlined_call_operand.hbm [shape: f32[1,64], index: 3, kind: input, shape index: {}]
  %s4 = inlined_call_operand.hbm [shape: f32[1000,128], index: 4, kind: output, shape index: {}]
  %s5 = sld [smem:[#allocation0]]
  $region61: #{tpu_custom_call.1} parent=0
    _
  %s7 = ssub.s32 1, %s5
  %s8 = scalar_select 0, %s7, %s5
  $region1: #{tpu_custom_call.1} parent=0
    #allocation2 [shape = 'u8[1548288]{0}', space=vmem, size = 0x17a000, scoped, tag = 'input window, operand 0']
    #allocation3 [shape = 's32[2]{0}', space=sflag, size = 0x8, scoped, tag = 'scoped memory for tpu_custom_call.1']
    #allocation4 [shape = 's32[2]{0}', space=sflag, size = 0x8, scoped, tag = 'scoped memory for tpu_custom_call.1']
    #allocation5 [shape = 'u8[512]{0}', space=vmem, size = 0x400, scoped, tag = 'input window, operand 2, single buffered']
    #allocation6 [shape = 's32[1]{0}', space=sflag, size = 0x4, scoped, tag = 'scoped memory for tpu_custom_call.1']
    #allocation7 [shape = 'u8[512]{0}', space=vmem, size = 0x400, scoped, tag = 'input window, operand 3, single buffered']
    #allocation8 [shape = 'u8[516096]{0}', space=vmem, size = 0x7e000, scoped, tag = 'output window, operand 0']
    %9 = vsyncpa [#allocation3], 0
    %s10 = scalar_lea.sflag [#allocation3], 1
    %11 = vsyncpa %s10, 0
    %12 = vsyncpa [#allocation6], 0
    %13 = vsyncpa [#allocation4], 0
    %s14 = scalar_lea.sflag [#allocation4], 1
    %15 = vsyncpa %s14, 0
    loop: start=0, step=1, limit=4
    $region2: #{tpu_custom_call.1} parent=1 // loop_pre_header
      _
    $region3: #{tpu_custom_call.1} parent=1 // loop_header
      %s17 = sphi 0, %s21
      %p18 = scmp.ge.s32.totalorder %s17, 4
      %s27 = sphi 0, %s29
      %s30 = sphi 0, %s27
      %s31 = sphi 0, %s30
      %s47 = sphi 0, %s31
      %s51 = sphi 0, %s51
      %s53 = sphi 0, %s51
      %s54 = sphi 0, %s53
      %s68 = sphi 0, %s54
      %s72 = sphi 0, %s72
      %s74 = sphi 0, %s72
      %s75 = sphi 0, %s74
      %s89 = sphi 0, %s75
      %s93 = sphi 0, %s93
      %s95 = sphi 0, %s93
      %s96 = sphi 0, %s95
      %s110 = sphi 0, %s96
      %s116 = sphi 0, %s118
      %s119 = sphi 0, %s116
      %s120 = sphi 0, %s119
      %s136 = sphi 0, %s120
    $region4: #{tpu_custom_call.1} parent=1 // loop_header_branch
      %20 = sbr.rel (%p18) target = $region8
    $region5: #{tpu_custom_call.1} parent=1 // loop_body
      %s22 = ssub.s32 %s17, 1
      %s23 = ssub.s32 %s17, 2
      %s24 = sadd.s32 %s17, 1
      %s25 = ssub.s32 %s17, %s24
      %p26 = scmp.eq.s32.totalorder %s25, 0
      %s28 = sadd.s32 %s27, 1
      %s29 = scalar_select %p26, %s27, %s28
      %p32 = pneg %p26
      %p33 = scmp.eq.s32.totalorder %s17, 1
      %p34 = por %p32, %p33
      %p35 = scmp.ne.s32.totalorder %s27, %s30
      %p36 = scmp.eq.s32.totalorder %s17, 0
      %p37 = por %p35, %p36
      %p38 = scmp.ne.s32.totalorder %s27, %s30
      %p39 = scmp.eq.s32.totalorder %s22, 1
      %p40 = por %p38, %p39
      %p41 = scmp.ne.s32.totalorder %s30, %s31
      %p42 = scmp.eq.s32.totalorder %s22, 0
      %p43 = por %p41, %p42
      %p44 = scmp.ne.s32.totalorder %s30, %s31
      %p45 = scmp.eq.s32.totalorder %s23, 1
      %p46 = por %p44, %p45
      %p48 = scmp.ne.s32.totalorder %s31, %s47
      %p49 = scmp.eq.s32.totalorder %s23, 0
      %p50 = por %p48, %p49
      %s52 = sadd.s32 %s51, 1
      %p55 = scmp.eq.s32.totalorder %s17, 1
      %p56 = scmp.ne.s32.totalorder %s51, %s53
      %p57 = scmp.eq.s32.totalorder %s17, 0
      %p58 = por %p56, %p57
      %p59 = scmp.ne.s32.totalorder %s51, %s53
      %p60 = scmp.eq.s32.totalorder %s22, 1
      %p61 = por %p59, %p60
      %p62 = scmp.ne.s32.totalorder %s53, %s54
      %p63 = scmp.eq.s32.totalorder %s22, 0
      %p64 = por %p62, %p63
      %p65 = scmp.ne.s32.totalorder %s53, %s54
      %p66 = scmp.eq.s32.totalorder %s23, 1
      %p67 = por %p65, %p66
      %p69 = scmp.ne.s32.totalorder %s54, %s68
      %p70 = scmp.eq.s32.totalorder %s23, 0
      %p71 = por %p69, %p70
      %s73 = sadd.s32 %s72, 1
      %p76 = scmp.eq.s32.totalorder %s17, 1
      %p77 = scmp.ne.s32.totalorder %s72, %s74
      %p78 = scmp.eq.s32.totalorder %s17, 0
      %p79 = por %p77, %p78
      %p80 = scmp.ne.s32.totalorder %s72, %s74
      %p81 = scmp.eq.s32.totalorder %s22, 1
      %p82 = por %p80, %p81
      %p83 = scmp.ne.s32.totalorder %s74, %s75
      %p84 = scmp.eq.s32.totalorder %s22, 0
      %p85 = por %p83, %p84
      %p86 = scmp.ne.s32.totalorder %s74, %s75
      %p87 = scmp.eq.s32.totalorder %s23, 1
      %p88 = por %p86, %p87
      %p90 = scmp.ne.s32.totalorder %s75, %s89
      %p91 = scmp.eq.s32.totalorder %s23, 0
      %p92 = por %p90, %p91
      %s94 = sadd.s32 %s93, 1
      %p97 = scmp.eq.s32.totalorder %s17, 1
      %p98 = scmp.ne.s32.totalorder %s93, %s95
      %p99 = scmp.eq.s32.totalorder %s17, 0
      %p100 = por %p98, %p99
      %p101 = scmp.ne.s32.totalorder %s93, %s95
      %p102 = scmp.eq.s32.totalorder %s22, 1
      %p103 = por %p101, %p102
      %p104 = scmp.ne.s32.totalorder %s95, %s96
      %p105 = scmp.eq.s32.totalorder %s22, 0
      %p106 = por %p104, %p105
      %p107 = scmp.ne.s32.totalorder %s95, %s96
      %p108 = scmp.eq.s32.totalorder %s23, 1
      %p109 = por %p107, %p108
      %p111 = scmp.ne.s32.totalorder %s96, %s110
      %p112 = scmp.eq.s32.totalorder %s23, 0
      %p113 = por %p111, %p112
      %s114 = ssub.s32 %s17, %s24
      %p115 = scmp.eq.s32.totalorder %s114, 0
      %s117 = sadd.s32 %s116, 1
      %s118 = scalar_select %p115, %s116, %s117
      %p121 = pneg %p115
      %p122 = scmp.eq.s32.totalorder %s17, 1
      %p123 = por %p121, %p122
      %p124 = scmp.ne.s32.totalorder %s116, %s119
      %p125 = scmp.eq.s32.totalorder %s17, 0
      %p126 = por %p124, %p125
      %p127 = scmp.ne.s32.totalorder %s116, %s119
      %p128 = scmp.eq.s32.totalorder %s22, 1
      %p129 = por %p127, %p128
      %p130 = scmp.ne.s32.totalorder %s119, %s120
      %p131 = scmp.eq.s32.totalorder %s22, 0
      %p132 = por %p130, %p131
      %p133 = scmp.ne.s32.totalorder %s119, %s120
      %p134 = scmp.eq.s32.totalorder %s23, 1
      %p135 = por %p133, %p134
      %p137 = scmp.ne.s32.totalorder %s120, %s136
      %p138 = scmp.eq.s32.totalorder %s23, 0
      %p139 = por %p137, %p138
      %p140 = scmp.le.s32.totalorder 1, %s17
      %p141 = scmp.lt.s32.totalorder %s17, 3
      %p142 = pnand %p140, %p141
      %p143 = pneg %p142
      // Predicated region
      $region9: #{tpu_custom_call.1} parent=5 // pred_check
        _
      $region10: #{tpu_custom_call.1} parent=5 // pred_check_branch
        %145 = sbr.rel (%p142) target = $region12
      $region11: #{tpu_custom_call.1} parent=5 // pred_region
        %s146 = ssub.s32 %s17, 1
        // Predicated region
        $region13: #{tpu_custom_call.1} parent=11 // pred_check
          %p147 = pneg %p64
        $region14: #{tpu_custom_call.1} parent=11 // pred_check_branch
          %149 = sbr.rel (%p147) target = $region16
        $region15: #{tpu_custom_call.1} parent=11 // pred_region
          _
        $region16: #{tpu_custom_call.1} parent=11 // pred_fallthru
          _
        // Predicated region
        $region17: #{tpu_custom_call.1} parent=11 // pred_check
          %p150 = pneg %p85
        $region18: #{tpu_custom_call.1} parent=11 // pred_check_branch
          %152 = sbr.rel (%p150) target = $region20
        $region19: #{tpu_custom_call.1} parent=11 // pred_region
          %s154 = ssub.s32 16, 16
          %155 = vsyncadd [#allocation6], %s154
          %s157 = sshll.u32 [#allocation5], 4
          %s158 = int_to_ptr.vmem [resolvable:$true] %s157
          %160 = dma.hbm_to_vmem [thread:$0]  %s2, 16, %s158, [#allocation6]
        $region20: #{tpu_custom_call.1} parent=11 // pred_fallthru
          _
        // Predicated region
        $region21: #{tpu_custom_call.1} parent=11 // pred_check
          %p161 = pneg %p106
        $region22: #{tpu_custom_call.1} parent=11 // pred_check_branch
          %163 = sbr.rel (%p161) target = $region24
        $region23: #{tpu_custom_call.1} parent=11 // pred_region
          %s165 = ssub.s32 16, 16
          %166 = vsyncadd [#allocation6], %s165
          %s168 = sshll.u32 [#allocation7], 4
          %s169 = int_to_ptr.vmem [resolvable:$true] %s168
          %171 = dma.hbm_to_vmem [thread:$0]  %s3, 16, %s169, [#allocation6]
        $region24: #{tpu_custom_call.1} parent=11 // pred_fallthru
          _
      $region12: #{tpu_custom_call.1} parent=5 // pred_fallthru
        _
      %p172 = scmp.lt.s32.totalorder %s17, 2
      // Predicated region
      $region25: #{tpu_custom_call.1} parent=5 // pred_check
        %p173 = pneg %p172
      $region26: #{tpu_custom_call.1} parent=5 // pred_check_branch
        %175 = sbr.rel (%p173) target = $region28
      $region27: #{tpu_custom_call.1} parent=5 // pred_region
        // Predicated region
        $region29: #{tpu_custom_call.1} parent=27 // pred_check
          %p176 = pneg %p37
        $region30: #{tpu_custom_call.1} parent=27 // pred_check_branch
          %178 = sbr.rel (%p176) target = $region32
        $region31: #{tpu_custom_call.1} parent=27 // pred_region
          %s179 = sand.u32 %s27, 1
          %s180 = scalar_lea.sflag [#allocation3], %s179
          %s181 = sand.u32 %s27, 1
          %s182 = smul.addr %s181, 1512
          %s183 = scalar_lea.vmem [#allocation2], %s182
          %s184 = smul.u32 63, %s17
          %s185 = ssub.s32 125, %s184
          %p186 = scmp.lt.s32.totalorder %s185, 63
          %s187 = scalar_select %p186, %s185, 63
          %s188 = smul.u32 128, %s187
          %s189 = smul.u32 %s188, 3
          %s191 = ssub.s32 24192, %s189
          %192 = vsyncadd %s180, %s191
          %p193 = scmp.ne.s32.totalorder 0, %s189
          %s194 = smul.addr %s184, 3
          %s195 = smul.addr %s194, 128
          %s196 = scalar_lea.hbm %s0, %s195
          %s197 = smul.u32 24, %s187
          %s198 = sshll.u32 %s183, 4
          %s199 = int_to_ptr.vmem [resolvable:$true] %s198
          %s200 = sshll.u32 %s197, 4
          %204 = dma.hbm_to_vmem [thread:$0]  (%p193), %s196, %s200, %s199, %s180, 384, 384, 24
        $region32: #{tpu_custom_call.1} parent=27 // pred_fallthru
          _
      $region28: #{tpu_custom_call.1} parent=5 // pred_fallthru
        _
      %p205 = scmp.le.s32.totalorder 1, %s17
      %p206 = scmp.lt.s32.totalorder %s17, 3
      %p207 = pnand %p205, %p206
      %p208 = pneg %p207
      // Predicated region
      $region33: #{tpu_custom_call.1} parent=5 // pred_check
        _
      $region34: #{tpu_custom_call.1} parent=5 // pred_check_branch
        %210 = sbr.rel (%p207) target = $region36
      $region35: #{tpu_custom_call.1} parent=5 // pred_region
        %s211 = ssub.s32 %s17, 1
        %s212 = sand.u32 %s30, 1
        %s213 = scalar_lea.sflag [#allocation3], %s212
        %s214 = sand.u32 %s30, 1
        %s215 = smul.addr %s214, 1512
        %s216 = scalar_lea.vmem [#allocation2], %s215
        // Predicated region
        $region37: #{tpu_custom_call.1} parent=35 // pred_check
          %p217 = pneg %p43
        $region38: #{tpu_custom_call.1} parent=35 // pred_check_branch
          %219 = sbr.rel (%p217) target = $region40
        $region39: #{tpu_custom_call.1} parent=35 // pred_region
          %220 = dma.done %s213, 24192
        $region40: #{tpu_custom_call.1} parent=35 // pred_fallthru
          _
        // Predicated region
        $region41: #{tpu_custom_call.1} parent=35 // pred_check
          %p221 = pneg %p85
        $region42: #{tpu_custom_call.1} parent=35 // pred_check_branch
          %223 = sbr.rel (%p221) target = $region44
        $region43: #{tpu_custom_call.1} parent=35 // pred_region
          %224 = dma.done [#allocation6], 16
        $region44: #{tpu_custom_call.1} parent=35 // pred_fallthru
          _
        // Predicated region
        $region45: #{tpu_custom_call.1} parent=35 // pred_check
          %p225 = pneg %p106
        $region46: #{tpu_custom_call.1} parent=35 // pred_check_branch
          %227 = sbr.rel (%p225) target = $region48
        $region47: #{tpu_custom_call.1} parent=35 // pred_region
          %228 = dma.done [#allocation6], 16
        $region48: #{tpu_custom_call.1} parent=35 // pred_fallthru
          _
        %s229 = sand.u32 %s30, 1
        %s230 = scalar_lea.sflag [#allocation3], %s229
        %s231 = sand.u32 %s30, 1
        %s232 = smul.addr %s231, 1512
        %s233 = scalar_lea.vmem [#allocation2], %s232
        %p234 = pneg %p43
        %p235 = pneg %p40
        %p236 = pneg %p64
        %p237 = pneg %p61
        %p238 = pneg %p85
        %p239 = pneg %p82
        %p240 = pneg %p106
        %p241 = pneg %p103
        %p242 = pneg %p132
        %p243 = pneg %p129
        %s244 = sand.u32 %s119, 1
        %s245 = scalar_lea.sflag [#allocation4], %s244
        %s246 = sand.u32 %s119, 1
        %s247 = smul.addr %s246, 504
        %s248 = scalar_lea.vmem [#allocation8], %s247
        %s249 = smul.u32 63, %s22
        %s250 = ssub.s32 125, %s249
        %p251 = scmp.lt.s32.totalorder %s250, 63
        %s252 = scalar_select %p251, %s250, 63
        %s253 = smul.u32 128, %s252
        %s254 = smul.u32 %s253, 3
        %s255 = smul.u32 63, %s22
        %s256 = ssub.s32 125, %s255
        %p257 = scmp.lt.s32.totalorder %s256, 63
        %s258 = scalar_select %p257, %s256, 63
        %s259 = smul.u32 128, %s258
        %v260 = vld [vmem:[%s1] sm:$0xff]
        %v261 = vld [vmem:[%s1 + $0x8] sm:$0xff]
        %v262 = vld [vmem:[%s1 + $0x10] sm:$0xff]
        %v263 = vld [vmem:[%s1 + $0x18] sm:$0xff]
        %v264 = vld [vmem:[%s1 + $0x20] sm:$0xff]
        %v265 = vld [vmem:[%s1 + $0x28] sm:$0xff]
        %v266 = vld [vmem:[%s1 + $0x30] sm:$0xff]
        %v267 = vld [vmem:[%s1 + $0x38] sm:$0xff]
        %v268 = vld [vmem:[%s1 + $0x40] sm:$0xff]
        %v269 = vld [vmem:[%s1 + $0x48] sm:$0xff]
        %v270 = vld [vmem:[%s1 + $0x50] sm:$0xff]
        %v271 = vld [vmem:[%s1 + $0x58] sm:$0xff]
        %v272 = vld [vmem:[%s1 + $0x60] sm:$0xff]
        %v273 = vld [vmem:[%s1 + $0x68] sm:$0xff]
        %v274 = vld [vmem:[%s1 + $0x70] sm:$0xff]
        %v275 = vld [vmem:[%s1 + $0x78] sm:$0xff]
        %v276 = vld [vmem:[#allocation5] sm:$0x1]
        %v277 = vld [vmem:[#allocation7] sm:$0x1]
        %v278 = vld [vmem:[%s216] sm:$0xff]
        %v279 = vld [vmem:[%s216 + $0x18] sm:$0xff]
        %v280 = vld [vmem:[%s216 + $0x30] sm:$0xff]
        %v281 = vld [vmem:[%s216 + $0x48] sm:$0xff]
        %v282 = vld [vmem:[%s216 + $0x60] sm:$0xff]
        %v283 = vld [vmem:[%s216 + $0x78] sm:$0xff]
        %v284 = vld [vmem:[%s216 + $0x90] sm:$0xff]
        %v285 = vld [vmem:[%s216 + $0xa8] sm:$0xff]
        %v286 = vld [vmem:[%s216 + $0xc0] sm:$0xff]
        %v287 = vld [vmem:[%s216 + $0xd8] sm:$0xff]
        %v288 = vld [vmem:[%s216 + $0xf0] sm:$0xff]
        %v289 = vld [vmem:[%s216 + $0x108] sm:$0xff]
        %v290 = vld [vmem:[%s216 + $0x120] sm:$0xff]
        %v291 = vld [vmem:[%s216 + $0x138] sm:$0xff]
        %v292 = vld [vmem:[%s216 + $0x150] sm:$0xff]
        %v293 = vld [vmem:[%s216 + $0x168] sm:$0xff]
        %v294 = vld [vmem:[%s216 + $0x180] sm:$0xff]
        %v295 = vld [vmem:[%s216 + $0x198] sm:$0xff]
        %v296 = vld [vmem:[%s216 + $0x1b0] sm:$0xff]
        %v297 = vld [vmem:[%s216 + $0x1c8] sm:$0xff]
        %v298 = vld [vmem:[%s216 + $0x1e0] sm:$0xff]
        %v299 = vld [vmem:[%s216 + $0x1f8] sm:$0xff]
        %v300 = vld [vmem:[%s216 + $0x210] sm:$0xff]
        %v301 = vld [vmem:[%s216 + $0x228] sm:$0xff]
        %v302 = vld [vmem:[%s216 + $0x240] sm:$0xff]
        %v303 = vld [vmem:[%s216 + $0x258] sm:$0xff]
        %v304 = vld [vmem:[%s216 + $0x270] sm:$0xff]
        %v305 = vld [vmem:[%s216 + $0x288] sm:$0xff]
        %v306 = vld [vmem:[%s216 + $0x2a0] sm:$0xff]
        %v307 = vld [vmem:[%s216 + $0x2b8] sm:$0xff]
        %v308 = vld [vmem:[%s216 + $0x2d0] sm:$0xff]
        %v309 = vld [vmem:[%s216 + $0x2e8] sm:$0xff]
        %v310 = vld [vmem:[%s216 + $0x300] sm:$0xff]
        %v311 = vld [vmem:[%s216 + $0x318] sm:$0xff]
        %v312 = vld [vmem:[%s216 + $0x330] sm:$0xff]
        %v313 = vld [vmem:[%s216 + $0x348] sm:$0xff]
        %v314 = vld [vmem:[%s216 + $0x360] sm:$0xff]
        %v315 = vld [vmem:[%s216 + $0x378] sm:$0xff]
        %v316 = vld [vmem:[%s216 + $0x390] sm:$0xff]
        %v317 = vld [vmem:[%s216 + $0x3a8] sm:$0xff]
        %v318 = vld [vmem:[%s216 + $0x3c0] sm:$0xff]
        %v319 = vld [vmem:[%s216 + $0x3d8] sm:$0xff]
        %v320 = vld [vmem:[%s216 + $0x3f0] sm:$0xff]
        %v321 = vld [vmem:[%s216 + $0x408] sm:$0xff]
        %v322 = vld [vmem:[%s216 + $0x420] sm:$0xff]
        %v323 = vld [vmem:[%s216 + $0x438] sm:$0xff]
        %v324 = vld [vmem:[%s216 + $0x450] sm:$0xff]
        %v325 = vld [vmem:[%s216 + $0x468] sm:$0xff]
        %v326 = vld [vmem:[%s216 + $0x480] sm:$0xff]
        %v327 = vld [vmem:[%s216 + $0x498] sm:$0xff]
        %v328 = vld [vmem:[%s216 + $0x4b0] sm:$0xff]
        %v329 = vld [vmem:[%s216 + $0x4c8] sm:$0xff]
        %v330 = vld [vmem:[%s216 + $0x4e0] sm:$0xff]
        %v331 = vld [vmem:[%s216 + $0x4f8] sm:$0xff]
        %v332 = vld [vmem:[%s216 + $0x510] sm:$0xff]
        %v333 = vld [vmem:[%s216 + $0x528] sm:$0xff]
        %v334 = vld [vmem:[%s216 + $0x540] sm:$0xff]
        %v335 = vld [vmem:[%s216 + $0x558] sm:$0xff]
        %v336 = vld [vmem:[%s216 + $0x570] sm:$0xff]
        %v337 = vld [vmem:[%s216 + $0x588] sm:$0xff]
        %v338 = vld [vmem:[%s216 + $0x5a0] sm:$0xff]
        %v339 = vld [vmem:[%s216 + $0x5b8] sm:$0xff]
        %v340 = vld [vmem:[%s216 + $0x5d0] sm:$0xff]
        %v342 = vlaneseq
        %v343 = vshrl.u32 %v342, 7
        %v344 = vsub.s32 0, %v343
        %v345 = vrot.slane %v276, %v344
        %347 = vmatprep.subr.mxu0 0.0
        %348 = vmatpush1.msra.mxu0 %v275
        %349 = vmatprep.subr.mxu0 0.0
        %350 = vmatpush1.msra.mxu0 %v274
        %351 = vmatprep.subr.mxu0 0.0
        %352 = vmatpush1.msra.mxu0 %v273
        %353 = vmatprep.subr.mxu0 0.0
        %354 = vmatpush1.msra.mxu0 %v272
        %355 = vmatprep.subr.mxu0 0.0
        %356 = vmatpush1.msra.mxu0 %v271
        %357 = vmatprep.subr.mxu0 0.0
        %358 = vmatpush1.msra.mxu0 %v270
        %359 = vmatprep.subr.mxu0 0.0
        %360 = vmatpush1.msra.mxu0 %v269
        %361 = vmatprep.subr.mxu0 0.0
        %362 = vmatpush1.msra.mxu0 %v268
        %363 = vmatprep.subr.mxu0 0.0
        %364 = vmatpush1.msra.mxu0 %v267
        %365 = vmatprep.subr.mxu0 0.0
        %366 = vmatpush1.msra.mxu0 %v266
        %367 = vmatprep.subr.mxu0 0.0
        %368 = vmatpush1.msra.mxu0 %v265
        %369 = vmatprep.subr.mxu0 0.0
        %370 = vmatpush1.msra.mxu0 %v264
        %371 = vmatprep.subr.mxu0 0.0
        %372 = vmatpush1.msra.mxu0 %v263
        %373 = vmatprep.subr.mxu0 0.0
        %374 = vmatpush1.msra.mxu0 %v262
        %375 = vmatprep.subr.mxu0 0.0
        %376 = vmatpush1.msra.mxu0 %v261
        %377 = vmatprep.subr.mxu0 0.0
        %378 = vmatpush1.msra.mxu0 %v260
        %379 = vmatprep.subr.mxu0 0.0
        %380 = vmatpush2.msra.mxu0 0.0
        %381 = vmatprep.subr.mxu0 0.0
        %382 = vmatpush2.msra.mxu0 0.0
        %383 = vmatprep.subr.mxu0 0.0
        %384 = vmatpush2.msra.mxu0 0.0
        %385 = vmatprep.subr.mxu0 0.0
        %386 = vmatpush2.msra.mxu0 0.0
        %387 = vmatprep.subr.mxu0 0.0
        %388 = vmatpush2.msra.mxu0 0.0
        %389 = vmatprep.subr.mxu0 0.0
        %390 = vmatpush2.msra.mxu0 0.0
        %391 = vmatprep.subr.mxu0 0.0
        %392 = vmatpush2.msra.mxu0 0.0
        %393 = vmatprep.subr.mxu0 0.0
        %394 = vmatpush2.msra.mxu0 0.0
        %395 = vmatprep.subr.mxu0 0.0
        %396 = vmatpush2.msra.mxu0 0.0
        %397 = vmatprep.subr.mxu0 0.0
        %398 = vmatpush2.msra.mxu0 0.0
        %399 = vmatprep.subr.mxu0 0.0
        %400 = vmatpush2.msra.mxu0 0.0
        %401 = vmatprep.subr.mxu0 0.0
        %402 = vmatpush2.msra.mxu0 0.0
        %403 = vmatprep.subr.mxu0 0.0
        %404 = vmatpush2.msra.mxu0 0.0
        %405 = vmatprep.subr.mxu0 0.0
        %406 = vmatpush2.msra.mxu0 0.0
        %407 = vmatprep.subr.mxu0 0.0
        %408 = vmatpush2.msra.mxu0 0.0
        %409 = vmatprep.subr.mxu0 0.0
        %410 = vmatpush2.msra.mxu0 0.0
        %411 = vmatprep.mubr.f32.mxu0 0.0
        %412 = vmatmul.mubr.f32.gmra.mxu0 %v278
        %v413 = vpop.f32.mrf.mxu0
        %v414 = vadd.f32 %v345, %v413
        %v415 = vpop.f32.mrf.mxu0
        %416 = vmatprep.mubr.f32.mxu0 0.0
        %417 = vmatmul.mubr.f32.gmra.mxu0 %v279
        %v418 = vpop.f32.mrf.mxu0
        %v419 = vadd.f32 %v345, %v418
        %v420 = vpop.f32.mrf.mxu0
        %421 = vmatprep.mubr.f32.mxu0 0.0
        %422 = vmatmul.mubr.f32.gmra.mxu0 %v280
        %v423 = vpop.f32.mrf.mxu0
        %v424 = vadd.f32 %v345, %v423
        %v425 = vpop.f32.mrf.mxu0
        %426 = vmatprep.mubr.f32.mxu0 0.0
        %427 = vmatmul.mubr.f32.gmra.mxu0 %v281
        %v428 = vpop.f32.mrf.mxu0
        %v429 = vadd.f32 %v345, %v428
        %v430 = vpop.f32.mrf.mxu0
        %431 = vmatprep.mubr.f32.mxu0 0.0
        %432 = vmatmul.mubr.f32.gmra.mxu0 %v282
        %v433 = vpop.f32.mrf.mxu0
        %v434 = vadd.f32 %v345, %v433
        %v435 = vpop.f32.mrf.mxu0
        %436 = vmatprep.mubr.f32.mxu0 0.0
        %437 = vmatmul.mubr.f32.gmra.mxu0 %v283
        %v438 = vpop.f32.mrf.mxu0
        %v439 = vadd.f32 %v345, %v438
        %v440 = vpop.f32.mrf.mxu0
        %441 = vmatprep.mubr.f32.mxu0 0.0
        %442 = vmatmul.mubr.f32.gmra.mxu0 %v284
        %v443 = vpop.f32.mrf.mxu0
        %v444 = vadd.f32 %v345, %v443
        %v445 = vpop.f32.mrf.mxu0
        %446 = vmatprep.mubr.f32.mxu0 0.0
        %447 = vmatmul.mubr.f32.gmra.mxu0 %v285
        %v448 = vpop.f32.mrf.mxu0
        %v449 = vadd.f32 %v345, %v448
        %v450 = vpop.f32.mrf.mxu0
        %451 = vmatprep.mubr.f32.mxu0 0.0
        %452 = vmatmul.mubr.f32.gmra.mxu0 %v286
        %v453 = vpop.f32.mrf.mxu0
        %v454 = vadd.f32 %v345, %v453
        %v455 = vpop.f32.mrf.mxu0
        %456 = vmatprep.mubr.f32.mxu0 0.0
        %457 = vmatmul.mubr.f32.gmra.mxu0 %v287
        %v458 = vpop.f32.mrf.mxu0
        %v459 = vadd.f32 %v345, %v458
        %v460 = vpop.f32.mrf.mxu0
        %461 = vmatprep.mubr.f32.mxu0 0.0
        %462 = vmatmul.mubr.f32.gmra.mxu0 %v288
        %v463 = vpop.f32.mrf.mxu0
        %v464 = vadd.f32 %v345, %v463
        %v465 = vpop.f32.mrf.mxu0
        %466 = vmatprep.mubr.f32.mxu0 0.0
        %467 = vmatmul.mubr.f32.gmra.mxu0 %v289
        %v468 = vpop.f32.mrf.mxu0
        %v469 = vadd.f32 %v345, %v468
        %v470 = vpop.f32.mrf.mxu0
        %471 = vmatprep.mubr.f32.mxu0 0.0
        %472 = vmatmul.mubr.f32.gmra.mxu0 %v290
        %v473 = vpop.f32.mrf.mxu0
        %v474 = vadd.f32 %v345, %v473
        %v475 = vpop.f32.mrf.mxu0
        %476 = vmatprep.mubr.f32.mxu0 0.0
        %477 = vmatmul.mubr.f32.gmra.mxu0 %v291
        %v478 = vpop.f32.mrf.mxu0
        %v479 = vadd.f32 %v345, %v478
        %v480 = vpop.f32.mrf.mxu0
        %481 = vmatprep.mubr.f32.mxu0 0.0
        %482 = vmatmul.mubr.f32.gmra.mxu0 %v292
        %v483 = vpop.f32.mrf.mxu0
        %v484 = vadd.f32 %v345, %v483
        %v485 = vpop.f32.mrf.mxu0
        %486 = vmatprep.mubr.f32.mxu0 0.0
        %487 = vmatmul.mubr.f32.gmra.mxu0 %v293
        %v488 = vpop.f32.mrf.mxu0
        %v489 = vadd.f32 %v345, %v488
        %v490 = vpop.f32.mrf.mxu0
        %491 = vmatprep.mubr.f32.mxu0 0.0
        %492 = vmatmul.mubr.f32.gmra.mxu0 %v294
        %v493 = vpop.f32.mrf.mxu0
        %v494 = vadd.f32 %v345, %v493
        %v495 = vpop.f32.mrf.mxu0
        %496 = vmatprep.mubr.f32.mxu0 0.0
        %497 = vmatmul.mubr.f32.gmra.mxu0 %v295
        %v498 = vpop.f32.mrf.mxu0
        %v499 = vadd.f32 %v345, %v498
        %v500 = vpop.f32.mrf.mxu0
        %501 = vmatprep.mubr.f32.mxu0 0.0
        %502 = vmatmul.mubr.f32.gmra.mxu0 %v296
        %v503 = vpop.f32.mrf.mxu0
        %v504 = vadd.f32 %v345, %v503
        %v505 = vpop.f32.mrf.mxu0
        %506 = vmatprep.mubr.f32.mxu0 0.0
        %507 = vmatmul.mubr.f32.gmra.mxu0 %v297
        %v508 = vpop.f32.mrf.mxu0
        %v509 = vadd.f32 %v345, %v508
        %v510 = vpop.f32.mrf.mxu0
        %511 = vmatprep.mubr.f32.mxu0 0.0
        %512 = vmatmul.mubr.f32.gmra.mxu0 %v298
        %v513 = vpop.f32.mrf.mxu0
        %v514 = vadd.f32 %v345, %v513
        %v515 = vpop.f32.mrf.mxu0
        %516 = vmatprep.mubr.f32.mxu0 0.0
        %517 = vmatmul.mubr.f32.gmra.mxu0 %v299
        %v518 = vpop.f32.mrf.mxu0
        %v519 = vadd.f32 %v345, %v518
        %v520 = vpop.f32.mrf.mxu0
        %521 = vmatprep.mubr.f32.mxu0 0.0
        %522 = vmatmul.mubr.f32.gmra.mxu0 %v300
        %v523 = vpop.f32.mrf.mxu0
        %v524 = vadd.f32 %v345, %v523
        %v525 = vpop.f32.mrf.mxu0
        %526 = vmatprep.mubr.f32.mxu0 0.0
        %527 = vmatmul.mubr.f32.gmra.mxu0 %v301
        %v528 = vpop.f32.mrf.mxu0
        %v529 = vadd.f32 %v345, %v528
        %v530 = vpop.f32.mrf.mxu0
        %531 = vmatprep.mubr.f32.mxu0 0.0
        %532 = vmatmul.mubr.f32.gmra.mxu0 %v302
        %v533 = vpop.f32.mrf.mxu0
        %v534 = vadd.f32 %v345, %v533
        %v535 = vpop.f32.mrf.mxu0
        %536 = vmatprep.mubr.f32.mxu0 0.0
        %537 = vmatmul.mubr.f32.gmra.mxu0 %v303
        %v538 = vpop.f32.mrf.mxu0
        %v539 = vadd.f32 %v345, %v538
        %v540 = vpop.f32.mrf.mxu0
        %541 = vmatprep.mubr.f32.mxu0 0.0
        %542 = vmatmul.mubr.f32.gmra.mxu0 %v304
        %v543 = vpop.f32.mrf.mxu0
        %v544 = vadd.f32 %v345, %v543
        %v545 = vpop.f32.mrf.mxu0
        %546 = vmatprep.mubr.f32.mxu0 0.0
        %547 = vmatmul.mubr.f32.gmra.mxu0 %v305
        %v548 = vpop.f32.mrf.mxu0
        %v549 = vadd.f32 %v345, %v548
        %v550 = vpop.f32.mrf.mxu0
        %551 = vmatprep.mubr.f32.mxu0 0.0
        %552 = vmatmul.mubr.f32.gmra.mxu0 %v306
        %v553 = vpop.f32.mrf.mxu0
        %v554 = vadd.f32 %v345, %v553
        %v555 = vpop.f32.mrf.mxu0
        %556 = vmatprep.mubr.f32.mxu0 0.0
        %557 = vmatmul.mubr.f32.gmra.mxu0 %v307
        %v558 = vpop.f32.mrf.mxu0
        %v559 = vadd.f32 %v345, %v558
        %v560 = vpop.f32.mrf.mxu0
        %561 = vmatprep.mubr.f32.mxu0 0.0
        %562 = vmatmul.mubr.f32.gmra.mxu0 %v308
        %v563 = vpop.f32.mrf.mxu0
        %v564 = vadd.f32 %v345, %v563
        %v565 = vpop.f32.mrf.mxu0
        %566 = vmatprep.mubr.f32.mxu0 0.0
        %567 = vmatmul.mubr.f32.gmra.mxu0 %v309
        %v568 = vpop.f32.mrf.mxu0
        %v569 = vadd.f32 %v345, %v568
        %v570 = vpop.f32.mrf.mxu0
        %571 = vmatprep.mubr.f32.mxu0 0.0
        %572 = vmatmul.mubr.f32.gmra.mxu0 %v310
        %v573 = vpop.f32.mrf.mxu0
        %v574 = vadd.f32 %v345, %v573
        %v575 = vpop.f32.mrf.mxu0
        %576 = vmatprep.mubr.f32.mxu0 0.0
        %577 = vmatmul.mubr.f32.gmra.mxu0 %v311
        %v578 = vpop.f32.mrf.mxu0
        %v579 = vadd.f32 %v345, %v578
        %v580 = vpop.f32.mrf.mxu0
        %581 = vmatprep.mubr.f32.mxu0 0.0
        %582 = vmatmul.mubr.f32.gmra.mxu0 %v312
        %v583 = vpop.f32.mrf.mxu0
        %v584 = vadd.f32 %v345, %v583
        %v585 = vpop.f32.mrf.mxu0
        %586 = vmatprep.mubr.f32.mxu0 0.0
        %587 = vmatmul.mubr.f32.gmra.mxu0 %v313
        %v588 = vpop.f32.mrf.mxu0
        %v589 = vadd.f32 %v345, %v588
        %v590 = vpop.f32.mrf.mxu0
        %591 = vmatprep.mubr.f32.mxu0 0.0
        %592 = vmatmul.mubr.f32.gmra.mxu0 %v314
        %v593 = vpop.f32.mrf.mxu0
        %v594 = vadd.f32 %v345, %v593
        %v595 = vpop.f32.mrf.mxu0
        %596 = vmatprep.mubr.f32.mxu0 0.0
        %597 = vmatmul.mubr.f32.gmra.mxu0 %v315
        %v598 = vpop.f32.mrf.mxu0
        %v599 = vadd.f32 %v345, %v598
        %v600 = vpop.f32.mrf.mxu0
        %601 = vmatprep.mubr.f32.mxu0 0.0
        %602 = vmatmul.mubr.f32.gmra.mxu0 %v316
        %v603 = vpop.f32.mrf.mxu0
        %v604 = vadd.f32 %v345, %v603
        %v605 = vpop.f32.mrf.mxu0
        %606 = vmatprep.mubr.f32.mxu0 0.0
        %607 = vmatmul.mubr.f32.gmra.mxu0 %v317
        %v608 = vpop.f32.mrf.mxu0
        %v609 = vadd.f32 %v345, %v608
        %v610 = vpop.f32.mrf.mxu0
        %611 = vmatprep.mubr.f32.mxu0 0.0
        %612 = vmatmul.mubr.f32.gmra.mxu0 %v318
        %v613 = vpop.f32.mrf.mxu0
        %v614 = vadd.f32 %v345, %v613
        %v615 = vpop.f32.mrf.mxu0
        %616 = vmatprep.mubr.f32.mxu0 0.0
        %617 = vmatmul.mubr.f32.gmra.mxu0 %v319
        %v618 = vpop.f32.mrf.mxu0
        %v619 = vadd.f32 %v345, %v618
        %v620 = vpop.f32.mrf.mxu0
        %621 = vmatprep.mubr.f32.mxu0 0.0
        %622 = vmatmul.mubr.f32.gmra.mxu0 %v320
        %v623 = vpop.f32.mrf.mxu0
        %v624 = vadd.f32 %v345, %v623
        %v625 = vpop.f32.mrf.mxu0
        %626 = vmatprep.mubr.f32.mxu0 0.0
        %627 = vmatmul.mubr.f32.gmra.mxu0 %v321
        %v628 = vpop.f32.mrf.mxu0
        %v629 = vadd.f32 %v345, %v628
        %v630 = vpop.f32.mrf.mxu0
        %631 = vmatprep.mubr.f32.mxu0 0.0
        %632 = vmatmul.mubr.f32.gmra.mxu0 %v322
        %v633 = vpop.f32.mrf.mxu0
        %v634 = vadd.f32 %v345, %v633
        %v635 = vpop.f32.mrf.mxu0
        %636 = vmatprep.mubr.f32.mxu0 0.0
        %637 = vmatmul.mubr.f32.gmra.mxu0 %v323
        %v638 = vpop.f32.mrf.mxu0
        %v639 = vadd.f32 %v345, %v638
        %v640 = vpop.f32.mrf.mxu0
        %641 = vmatprep.mubr.f32.mxu0 0.0
        %642 = vmatmul.mubr.f32.gmra.mxu0 %v324
        %v643 = vpop.f32.mrf.mxu0
        %v644 = vadd.f32 %v345, %v643
        %v645 = vpop.f32.mrf.mxu0
        %646 = vmatprep.mubr.f32.mxu0 0.0
        %647 = vmatmul.mubr.f32.gmra.mxu0 %v325
        %v648 = vpop.f32.mrf.mxu0
        %v649 = vadd.f32 %v345, %v648
        %v650 = vpop.f32.mrf.mxu0
        %651 = vmatprep.mubr.f32.mxu0 0.0
        %652 = vmatmul.mubr.f32.gmra.mxu0 %v326
        %v653 = vpop.f32.mrf.mxu0
        %v654 = vadd.f32 %v345, %v653
        %v655 = vpop.f32.mrf.mxu0
        %656 = vmatprep.mubr.f32.mxu0 0.0
        %657 = vmatmul.mubr.f32.gmra.mxu0 %v327
        %v658 = vpop.f32.mrf.mxu0
        %v659 = vadd.f32 %v345, %v658
        %v660 = vpop.f32.mrf.mxu0
        %661 = vmatprep.mubr.f32.mxu0 0.0
        %662 = vmatmul.mubr.f32.gmra.mxu0 %v328
        %v663 = vpop.f32.mrf.mxu0
        %v664 = vadd.f32 %v345, %v663
        %v665 = vpop.f32.mrf.mxu0
        %666 = vmatprep.mubr.f32.mxu0 0.0
        %667 = vmatmul.mubr.f32.gmra.mxu0 %v329
        %v668 = vpop.f32.mrf.mxu0
        %v669 = vadd.f32 %v345, %v668
        %v670 = vpop.f32.mrf.mxu0
        %671 = vmatprep.mubr.f32.mxu0 0.0
        %672 = vmatmul.mubr.f32.gmra.mxu0 %v330
        %v673 = vpop.f32.mrf.mxu0
        %v674 = vadd.f32 %v345, %v673
        %v675 = vpop.f32.mrf.mxu0
        %676 = vmatprep.mubr.f32.mxu0 0.0
        %677 = vmatmul.mubr.f32.gmra.mxu0 %v331
        %v678 = vpop.f32.mrf.mxu0
        %v679 = vadd.f32 %v345, %v678
        %v680 = vpop.f32.mrf.mxu0
        %681 = vmatprep.mubr.f32.mxu0 0.0
        %682 = vmatmul.mubr.f32.gmra.mxu0 %v332
        %v683 = vpop.f32.mrf.mxu0
        %v684 = vadd.f32 %v345, %v683
        %v685 = vpop.f32.mrf.mxu0
        %686 = vmatprep.mubr.f32.mxu0 0.0
        %687 = vmatmul.mubr.f32.gmra.mxu0 %v333
        %v688 = vpop.f32.mrf.mxu0
        %v689 = vadd.f32 %v345, %v688
        %v690 = vpop.f32.mrf.mxu0
        %691 = vmatprep.mubr.f32.mxu0 0.0
        %692 = vmatmul.mubr.f32.gmra.mxu0 %v334
        %v693 = vpop.f32.mrf.mxu0
        %v694 = vadd.f32 %v345, %v693
        %v695 = vpop.f32.mrf.mxu0
        %696 = vmatprep.mubr.f32.mxu0 0.0
        %697 = vmatmul.mubr.f32.gmra.mxu0 %v335
        %v698 = vpop.f32.mrf.mxu0
        %v699 = vadd.f32 %v345, %v698
        %v700 = vpop.f32.mrf.mxu0
        %701 = vmatprep.mubr.f32.mxu0 0.0
        %702 = vmatmul.mubr.f32.gmra.mxu0 %v336
        %v703 = vpop.f32.mrf.mxu0
        %v704 = vadd.f32 %v345, %v703
        %v705 = vpop.f32.mrf.mxu0
        %706 = vmatprep.mubr.f32.mxu0 0.0
        %707 = vmatmul.mubr.f32.gmra.mxu0 %v337
        %v708 = vpop.f32.mrf.mxu0
        %v709 = vadd.f32 %v345, %v708
        %v710 = vpop.f32.mrf.mxu0
        %711 = vmatprep.mubr.f32.mxu0 0.0
        %712 = vmatmul.mubr.f32.gmra.mxu0 %v338
        %v713 = vpop.f32.mrf.mxu0
        %v714 = vadd.f32 %v345, %v713
        %v715 = vpop.f32.mrf.mxu0
        %716 = vmatprep.mubr.f32.mxu0 0.0
        %717 = vmatmul.mubr.f32.gmra.mxu0 %v339
        %v718 = vpop.f32.mrf.mxu0
        %v719 = vadd.f32 %v345, %v718
        %v720 = vpop.f32.mrf.mxu0
        %721 = vmatprep.mubr.f32.mxu0 0.0
        %722 = vmatmul.mubr.f32.gmra.mxu0 %v340
        %v723 = vpop.f32.mrf.mxu0
        %v724 = vadd.f32 %v345, %v723
        %v725 = vpop.f32.mrf.mxu0
        %726 = vdwg.mxu0
        %v727 = vtanh.pop %v414
        %v728 = vtanh.pop %v419
        %v729 = vtanh.pop %v424
        %v730 = vtanh.pop %v429
        %v731 = vtanh.pop %v434
        %v732 = vtanh.pop %v439
        %v733 = vtanh.pop %v444
        %v734 = vtanh.pop %v449
        %v735 = vtanh.pop %v454
        %v736 = vtanh.pop %v459
        %v737 = vtanh.pop %v464
        %v738 = vtanh.pop %v469
        %v739 = vtanh.pop %v474
        %v740 = vtanh.pop %v479
        %v741 = vtanh.pop %v484
        %v742 = vtanh.pop %v489
        %v743 = vtanh.pop %v494
        %v744 = vtanh.pop %v499
        %v745 = vtanh.pop %v504
        %v746 = vtanh.pop %v509
        %v747 = vtanh.pop %v514
        %v748 = vtanh.pop %v519
        %v749 = vtanh.pop %v524
        %v750 = vtanh.pop %v529
        %v751 = vtanh.pop %v534
        %v752 = vtanh.pop %v539
        %v753 = vtanh.pop %v544
        %v754 = vtanh.pop %v549
        %v755 = vtanh.pop %v554
        %v756 = vtanh.pop %v559
        %v757 = vtanh.pop %v564
        %v758 = vtanh.pop %v569
        %v759 = vtanh.pop %v574
        %v760 = vtanh.pop %v579
        %v761 = vtanh.pop %v584
        %v762 = vtanh.pop %v589
        %v763 = vtanh.pop %v594
        %v764 = vtanh.pop %v599
        %v765 = vtanh.pop %v604
        %v766 = vtanh.pop %v609
        %v767 = vtanh.pop %v614
        %v768 = vtanh.pop %v619
        %v769 = vtanh.pop %v624
        %v770 = vtanh.pop %v629
        %v771 = vtanh.pop %v634
        %v772 = vtanh.pop %v639
        %v773 = vtanh.pop %v644
        %v774 = vtanh.pop %v649
        %v775 = vtanh.pop %v654
        %v776 = vtanh.pop %v659
        %v777 = vtanh.pop %v664
        %v778 = vtanh.pop %v669
        %v779 = vtanh.pop %v674
        %v780 = vtanh.pop %v679
        %v781 = vtanh.pop %v684
        %v782 = vtanh.pop %v689
        %v783 = vtanh.pop %v694
        %v784 = vtanh.pop %v699
        %v785 = vtanh.pop %v704
        %v786 = vtanh.pop %v709
        %v787 = vtanh.pop %v714
        %v788 = vtanh.pop %v719
        %v789 = vtanh.pop %v724
        %v791 = vlaneseq
        %v792 = vshrl.u32 %v791, 7
        %v793 = vsub.s32 0, %v792
        %v794 = vrot.slane %v277, %v793
        %v796 = vmul.f32 %v727, %v794
        %v797 = vmul.f32 %v728, %v794
        %v798 = vmul.f32 %v729, %v794
        %v799 = vmul.f32 %v730, %v794
        %v800 = vmul.f32 %v731, %v794
        %v801 = vmul.f32 %v732, %v794
        %v802 = vmul.f32 %v733, %v794
        %v803 = vmul.f32 %v734, %v794
        %v804 = vmul.f32 %v735, %v794
        %v805 = vmul.f32 %v736, %v794
        %v806 = vmul.f32 %v737, %v794
        %v807 = vmul.f32 %v738, %v794
        %v808 = vmul.f32 %v739, %v794
        %v809 = vmul.f32 %v740, %v794
        %v810 = vmul.f32 %v741, %v794
        %v811 = vmul.f32 %v742, %v794
        %v812 = vmul.f32 %v743, %v794
        %v813 = vmul.f32 %v744, %v794
        %v814 = vmul.f32 %v745, %v794
        %v815 = vmul.f32 %v746, %v794
        %v816 = vmul.f32 %v747, %v794
        %v817 = vmul.f32 %v748, %v794
        %v818 = vmul.f32 %v749, %v794
        %v819 = vmul.f32 %v750, %v794
        %v820 = vmul.f32 %v751, %v794
        %v821 = vmul.f32 %v752, %v794
        %v822 = vmul.f32 %v753, %v794
        %v823 = vmul.f32 %v754, %v794
        %v824 = vmul.f32 %v755, %v794
        %v825 = vmul.f32 %v756, %v794
        %v826 = vmul.f32 %v757, %v794
        %v827 = vmul.f32 %v758, %v794
        %v828 = vmul.f32 %v759, %v794
        %v829 = vmul.f32 %v760, %v794
        %v830 = vmul.f32 %v761, %v794
        %v831 = vmul.f32 %v762, %v794
        %v832 = vmul.f32 %v763, %v794
        %v833 = vmul.f32 %v764, %v794
        %v834 = vmul.f32 %v765, %v794
        %v835 = vmul.f32 %v766, %v794
        %v836 = vmul.f32 %v767, %v794
        %v837 = vmul.f32 %v768, %v794
        %v838 = vmul.f32 %v769, %v794
        %v839 = vmul.f32 %v770, %v794
        %v840 = vmul.f32 %v771, %v794
        %v841 = vmul.f32 %v772, %v794
        %v842 = vmul.f32 %v773, %v794
        %v843 = vmul.f32 %v774, %v794
        %v844 = vmul.f32 %v775, %v794
        %v845 = vmul.f32 %v776, %v794
        %v846 = vmul.f32 %v777, %v794
        %v847 = vmul.f32 %v778, %v794
        %v848 = vmul.f32 %v779, %v794
        %v849 = vmul.f32 %v780, %v794
        %v850 = vmul.f32 %v781, %v794
        %v851 = vmul.f32 %v782, %v794
        %v852 = vmul.f32 %v783, %v794
        %v853 = vmul.f32 %v784, %v794
        %v854 = vmul.f32 %v785, %v794
        %v855 = vmul.f32 %v786, %v794
        %v856 = vmul.f32 %v787, %v794
        %v857 = vmul.f32 %v788, %v794
        %v858 = vmul.f32 %v789, %v794
        %vm859 = vcmask 523264
        %v860 = vsel %vm859, %v796, 0.0
        %861 = vadd.xlane.f32.xlu0 %v860
        %v862 = vpop.xlane.xlu0 %861
        %v863 = vsel %vm859, %v797, 0.0
        %864 = vadd.xlane.f32.xlu0 %v863
        %v865 = vpop.xlane.xlu0 %864
        %v866 = vsel %vm859, %v798, 0.0
        %867 = vadd.xlane.f32.xlu0 %v866
        %v868 = vpop.xlane.xlu0 %867
        %v869 = vsel %vm859, %v799, 0.0
        %870 = vadd.xlane.f32.xlu0 %v869
        %v871 = vpop.xlane.xlu0 %870
        %v872 = vsel %vm859, %v800, 0.0
        %873 = vadd.xlane.f32.xlu0 %v872
        %v874 = vpop.xlane.xlu0 %873
        %v875 = vsel %vm859, %v801, 0.0
        %876 = vadd.xlane.f32.xlu0 %v875
        %v877 = vpop.xlane.xlu0 %876
        %v878 = vsel %vm859, %v802, 0.0
        %879 = vadd.xlane.f32.xlu0 %v878
        %v880 = vpop.xlane.xlu0 %879
        %v881 = vsel %vm859, %v803, 0.0
        %882 = vadd.xlane.f32.xlu0 %v881
        %v883 = vpop.xlane.xlu0 %882
        %v884 = vsel %vm859, %v804, 0.0
        %885 = vadd.xlane.f32.xlu0 %v884
        %v886 = vpop.xlane.xlu0 %885
        %v887 = vsel %vm859, %v805, 0.0
        %888 = vadd.xlane.f32.xlu0 %v887
        %v889 = vpop.xlane.xlu0 %888
        %v890 = vsel %vm859, %v806, 0.0
        %891 = vadd.xlane.f32.xlu0 %v890
        %v892 = vpop.xlane.xlu0 %891
        %v893 = vsel %vm859, %v807, 0.0
        %894 = vadd.xlane.f32.xlu0 %v893
        %v895 = vpop.xlane.xlu0 %894
        %v896 = vsel %vm859, %v808, 0.0
        %897 = vadd.xlane.f32.xlu0 %v896
        %v898 = vpop.xlane.xlu0 %897
        %v899 = vsel %vm859, %v809, 0.0
        %900 = vadd.xlane.f32.xlu0 %v899
        %v901 = vpop.xlane.xlu0 %900
        %v902 = vsel %vm859, %v810, 0.0
        %903 = vadd.xlane.f32.xlu0 %v902
        %v904 = vpop.xlane.xlu0 %903
        %v905 = vsel %vm859, %v811, 0.0
        %906 = vadd.xlane.f32.xlu0 %v905
        %v907 = vpop.xlane.xlu0 %906
        %v908 = vsel %vm859, %v812, 0.0
        %909 = vadd.xlane.f32.xlu0 %v908
        %v910 = vpop.xlane.xlu0 %909
        %v911 = vsel %vm859, %v813, 0.0
        %912 = vadd.xlane.f32.xlu0 %v911
        %v913 = vpop.xlane.xlu0 %912
        %v914 = vsel %vm859, %v814, 0.0
        %915 = vadd.xlane.f32.xlu0 %v914
        %v916 = vpop.xlane.xlu0 %915
        %v917 = vsel %vm859, %v815, 0.0
        %918 = vadd.xlane.f32.xlu0 %v917
        %v919 = vpop.xlane.xlu0 %918
        %v920 = vsel %vm859, %v816, 0.0
        %921 = vadd.xlane.f32.xlu0 %v920
        %v922 = vpop.xlane.xlu0 %921
        %v923 = vsel %vm859, %v817, 0.0
        %924 = vadd.xlane.f32.xlu0 %v923
        %v925 = vpop.xlane.xlu0 %924
        %v926 = vsel %vm859, %v818, 0.0
        %927 = vadd.xlane.f32.xlu0 %v926
        %v928 = vpop.xlane.xlu0 %927
        %v929 = vsel %vm859, %v819, 0.0
        %930 = vadd.xlane.f32.xlu0 %v929
        %v931 = vpop.xlane.xlu0 %930
        %v932 = vsel %vm859, %v820, 0.0
        %933 = vadd.xlane.f32.xlu0 %v932
        %v934 = vpop.xlane.xlu0 %933
        %v935 = vsel %vm859, %v821, 0.0
        %936 = vadd.xlane.f32.xlu0 %v935
        %v937 = vpop.xlane.xlu0 %936
        %v938 = vsel %vm859, %v822, 0.0
        %939 = vadd.xlane.f32.xlu0 %v938
        %v940 = vpop.xlane.xlu0 %939
        %v941 = vsel %vm859, %v823, 0.0
        %942 = vadd.xlane.f32.xlu0 %v941
        %v943 = vpop.xlane.xlu0 %942
        %v944 = vsel %vm859, %v824, 0.0
        %945 = vadd.xlane.f32.xlu0 %v944
        %v946 = vpop.xlane.xlu0 %945
        %v947 = vsel %vm859, %v825, 0.0
        %948 = vadd.xlane.f32.xlu0 %v947
        %v949 = vpop.xlane.xlu0 %948
        %v950 = vsel %vm859, %v826, 0.0
        %951 = vadd.xlane.f32.xlu0 %v950
        %v952 = vpop.xlane.xlu0 %951
        %v953 = vsel %vm859, %v827, 0.0
        %954 = vadd.xlane.f32.xlu0 %v953
        %v955 = vpop.xlane.xlu0 %954
        %v956 = vsel %vm859, %v828, 0.0
        %957 = vadd.xlane.f32.xlu0 %v956
        %v958 = vpop.xlane.xlu0 %957
        %v959 = vsel %vm859, %v829, 0.0
        %960 = vadd.xlane.f32.xlu0 %v959
        %v961 = vpop.xlane.xlu0 %960
        %v962 = vsel %vm859, %v830, 0.0
        %963 = vadd.xlane.f32.xlu0 %v962
        %v964 = vpop.xlane.xlu0 %963
        %v965 = vsel %vm859, %v831, 0.0
        %966 = vadd.xlane.f32.xlu0 %v965
        %v967 = vpop.xlane.xlu0 %966
        %v968 = vsel %vm859, %v832, 0.0
        %969 = vadd.xlane.f32.xlu0 %v968
        %v970 = vpop.xlane.xlu0 %969
        %v971 = vsel %vm859, %v833, 0.0
        %972 = vadd.xlane.f32.xlu0 %v971
        %v973 = vpop.xlane.xlu0 %972
        %v974 = vsel %vm859, %v834, 0.0
        %975 = vadd.xlane.f32.xlu0 %v974
        %v976 = vpop.xlane.xlu0 %975
        %v977 = vsel %vm859, %v835, 0.0
        %978 = vadd.xlane.f32.xlu0 %v977
        %v979 = vpop.xlane.xlu0 %978
        %v980 = vsel %vm859, %v836, 0.0
        %981 = vadd.xlane.f32.xlu0 %v980
        %v982 = vpop.xlane.xlu0 %981
        %v983 = vsel %vm859, %v837, 0.0
        %984 = vadd.xlane.f32.xlu0 %v983
        %v985 = vpop.xlane.xlu0 %984
        %v986 = vsel %vm859, %v838, 0.0
        %987 = vadd.xlane.f32.xlu0 %v986
        %v988 = vpop.xlane.xlu0 %987
        %v989 = vsel %vm859, %v839, 0.0
        %990 = vadd.xlane.f32.xlu0 %v989
        %v991 = vpop.xlane.xlu0 %990
        %v992 = vsel %vm859, %v840, 0.0
        %993 = vadd.xlane.f32.xlu0 %v992
        %v994 = vpop.xlane.xlu0 %993
        %v995 = vsel %vm859, %v841, 0.0
        %996 = vadd.xlane.f32.xlu0 %v995
        %v997 = vpop.xlane.xlu0 %996
        %v998 = vsel %vm859, %v842, 0.0
        %999 = vadd.xlane.f32.xlu0 %v998
        %v1000 = vpop.xlane.xlu0 %999
        %v1001 = vsel %vm859, %v843, 0.0
        %1002 = vadd.xlane.f32.xlu0 %v1001
        %v1003 = vpop.xlane.xlu0 %1002
        %v1004 = vsel %vm859, %v844, 0.0
        %1005 = vadd.xlane.f32.xlu0 %v1004
        %v1006 = vpop.xlane.xlu0 %1005
        %v1007 = vsel %vm859, %v845, 0.0
        %1008 = vadd.xlane.f32.xlu0 %v1007
        %v1009 = vpop.xlane.xlu0 %1008
        %v1010 = vsel %vm859, %v846, 0.0
        %1011 = vadd.xlane.f32.xlu0 %v1010
        %v1012 = vpop.xlane.xlu0 %1011
        %v1013 = vsel %vm859, %v847, 0.0
        %1014 = vadd.xlane.f32.xlu0 %v1013
        %v1015 = vpop.xlane.xlu0 %1014
        %v1016 = vsel %vm859, %v848, 0.0
        %1017 = vadd.xlane.f32.xlu0 %v1016
        %v1018 = vpop.xlane.xlu0 %1017
        %v1019 = vsel %vm859, %v849, 0.0
        %1020 = vadd.xlane.f32.xlu0 %v1019
        %v1021 = vpop.xlane.xlu0 %1020
        %v1022 = vsel %vm859, %v850, 0.0
        %1023 = vadd.xlane.f32.xlu0 %v1022
        %v1024 = vpop.xlane.xlu0 %1023
        %v1025 = vsel %vm859, %v851, 0.0
        %1026 = vadd.xlane.f32.xlu0 %v1025
        %v1027 = vpop.xlane.xlu0 %1026
        %v1028 = vsel %vm859, %v852, 0.0
        %1029 = vadd.xlane.f32.xlu0 %v1028
        %v1030 = vpop.xlane.xlu0 %1029
        %v1031 = vsel %vm859, %v853, 0.0
        %1032 = vadd.xlane.f32.xlu0 %v1031
        %v1033 = vpop.xlane.xlu0 %1032
        %v1034 = vsel %vm859, %v854, 0.0
        %1035 = vadd.xlane.f32.xlu0 %v1034
        %v1036 = vpop.xlane.xlu0 %1035
        %v1037 = vsel %vm859, %v855, 0.0
        %1038 = vadd.xlane.f32.xlu0 %v1037
        %v1039 = vpop.xlane.xlu0 %1038
        %v1040 = vsel %vm859, %v856, 0.0
        %1041 = vadd.xlane.f32.xlu0 %v1040
        %v1042 = vpop.xlane.xlu0 %1041
        %v1043 = vsel %vm859, %v857, 0.0
        %1044 = vadd.xlane.f32.xlu0 %v1043
        %v1045 = vpop.xlane.xlu0 %1044
        %v1046 = vsel %vm859, %v858, 0.0
        %1047 = vadd.xlane.f32.xlu0 %v1046
        %v1048 = vpop.xlane.xlu0 %1047
        %v1049 = vld [vmem:[%s216 + $0x8] sm:$0xff]
        %v1050 = vld [vmem:[%s216 + $0x20] sm:$0xff]
        %v1051 = vld [vmem:[%s216 + $0x38] sm:$0xff]
        %v1052 = vld [vmem:[%s216 + $0x50] sm:$0xff]
        %v1053 = vld [vmem:[%s216 + $0x68] sm:$0xff]
        %v1054 = vld [vmem:[%s216 + $0x80] sm:$0xff]
        %v1055 = vld [vmem:[%s216 + $0x98] sm:$0xff]
        %v1056 = vld [vmem:[%s216 + $0xb0] sm:$0xff]
        %v1057 = vld [vmem:[%s216 + $0xc8] sm:$0xff]
        %v1058 = vld [vmem:[%s216 + $0xe0] sm:$0xff]
        %v1059 = vld [vmem:[%s216 + $0xf8] sm:$0xff]
        %v1060 = vld [vmem:[%s216 + $0x110] sm:$0xff]
        %v1061 = vld [vmem:[%s216 + $0x128] sm:$0xff]
        %v1062 = vld [vmem:[%s216 + $0x140] sm:$0xff]
        %v1063 = vld [vmem:[%s216 + $0x158] sm:$0xff]
        %v1064 = vld [vmem:[%s216 + $0x170] sm:$0xff]
        %v1065 = vld [vmem:[%s216 + $0x188] sm:$0xff]
        %v1066 = vld [vmem:[%s216 + $0x1a0] sm:$0xff]
        %v1067 = vld [vmem:[%s216 + $0x1b8] sm:$0xff]
        %v1068 = vld [vmem:[%s216 + $0x1d0] sm:$0xff]
        %v1069 = vld [vmem:[%s216 + $0x1e8] sm:$0xff]
        %v1070 = vld [vmem:[%s216 + $0x200] sm:$0xff]
        %v1071 = vld [vmem:[%s216 + $0x218] sm:$0xff]
        %v1072 = vld [vmem:[%s216 + $0x230] sm:$0xff]
        %v1073 = vld [vmem:[%s216 + $0x248] sm:$0xff]
        %v1074 = vld [vmem:[%s216 + $0x260] sm:$0xff]
        %v1075 = vld [vmem:[%s216 + $0x278] sm:$0xff]
        %v1076 = vld [vmem:[%s216 + $0x290] sm:$0xff]
        %v1077 = vld [vmem:[%s216 + $0x2a8] sm:$0xff]
        %v1078 = vld [vmem:[%s216 + $0x2c0] sm:$0xff]
        %v1079 = vld [vmem:[%s216 + $0x2d8] sm:$0xff]
        %v1080 = vld [vmem:[%s216 + $0x2f0] sm:$0xff]
        %v1081 = vld [vmem:[%s216 + $0x308] sm:$0xff]
        %v1082 = vld [vmem:[%s216 + $0x320] sm:$0xff]
        %v1083 = vld [vmem:[%s216 + $0x338] sm:$0xff]
        %v1084 = vld [vmem:[%s216 + $0x350] sm:$0xff]
        %v1085 = vld [vmem:[%s216 + $0x368] sm:$0xff]
        %v1086 = vld [vmem:[%s216 + $0x380] sm:$0xff]
        %v1087 = vld [vmem:[%s216 + $0x398] sm:$0xff]
        %v1088 = vld [vmem:[%s216 + $0x3b0] sm:$0xff]
        %v1089 = vld [vmem:[%s216 + $0x3c8] sm:$0xff]
        %v1090 = vld [vmem:[%s216 + $0x3e0] sm:$0xff]
        %v1091 = vld [vmem:[%s216 + $0x3f8] sm:$0xff]
        %v1092 = vld [vmem:[%s216 + $0x410] sm:$0xff]
        %v1093 = vld [vmem:[%s216 + $0x428] sm:$0xff]
        %v1094 = vld [vmem:[%s216 + $0x440] sm:$0xff]
        %v1095 = vld [vmem:[%s216 + $0x458] sm:$0xff]
        %v1096 = vld [vmem:[%s216 + $0x470] sm:$0xff]
        %v1097 = vld [vmem:[%s216 + $0x488] sm:$0xff]
        %v1098 = vld [vmem:[%s216 + $0x4a0] sm:$0xff]
        %v1099 = vld [vmem:[%s216 + $0x4b8] sm:$0xff]
        %v1100 = vld [vmem:[%s216 + $0x4d0] sm:$0xff]
        %v1101 = vld [vmem:[%s216 + $0x4e8] sm:$0xff]
        %v1102 = vld [vmem:[%s216 + $0x500] sm:$0xff]
        %v1103 = vld [vmem:[%s216 + $0x518] sm:$0xff]
        %v1104 = vld [vmem:[%s216 + $0x530] sm:$0xff]
        %v1105 = vld [vmem:[%s216 + $0x548] sm:$0xff]
        %v1106 = vld [vmem:[%s216 + $0x560] sm:$0xff]
        %v1107 = vld [vmem:[%s216 + $0x578] sm:$0xff]
        %v1108 = vld [vmem:[%s216 + $0x590] sm:$0xff]
        %v1109 = vld [vmem:[%s216 + $0x5a8] sm:$0xff]
        %v1110 = vld [vmem:[%s216 + $0x5c0] sm:$0xff]
        %v1111 = vld [vmem:[%s216 + $0x5d8] sm:$0xff]
        %1112 = vmatprep.subr.mxu0 0.0
        %1113 = vmatpush1.msra.mxu0 %v275
        %1114 = vmatprep.subr.mxu0 0.0
        %1115 = vmatpush1.msra.mxu0 %v274
        %1116 = vmatprep.subr.mxu0 0.0
        %1117 = vmatpush1.msra.mxu0 %v273
        %1118 = vmatprep.subr.mxu0 0.0
        %1119 = vmatpush1.msra.mxu0 %v272
        %1120 = vmatprep.subr.mxu0 0.0
        %1121 = vmatpush1.msra.mxu0 %v271
        %1122 = vmatprep.subr.mxu0 0.0
        %1123 = vmatpush1.msra.mxu0 %v270
        %1124 = vmatprep.subr.mxu0 0.0
        %1125 = vmatpush1.msra.mxu0 %v269
        %1126 = vmatprep.subr.mxu0 0.0
        %1127 = vmatpush1.msra.mxu0 %v268
        %1128 = vmatprep.subr.mxu0 0.0
        %1129 = vmatpush1.msra.mxu0 %v267
        %1130 = vmatprep.subr.mxu0 0.0
        %1131 = vmatpush1.msra.mxu0 %v266
        %1132 = vmatprep.subr.mxu0 0.0
        %1133 = vmatpush1.msra.mxu0 %v265
        %1134 = vmatprep.subr.mxu0 0.0
        %1135 = vmatpush1.msra.mxu0 %v264
        %1136 = vmatprep.subr.mxu0 0.0
        %1137 = vmatpush1.msra.mxu0 %v263
        %1138 = vmatprep.subr.mxu0 0.0
        %1139 = vmatpush1.msra.mxu0 %v262
        %1140 = vmatprep.subr.mxu0 0.0
        %1141 = vmatpush1.msra.mxu0 %v261
        %1142 = vmatprep.subr.mxu0 0.0
        %1143 = vmatpush1.msra.mxu0 %v260
        %1144 = vmatprep.subr.mxu0 0.0
        %1145 = vmatpush2.msra.mxu0 0.0
        %1146 = vmatprep.subr.mxu0 0.0
        %1147 = vmatpush2.msra.mxu0 0.0
        %1148 = vmatprep.subr.mxu0 0.0
        %1149 = vmatpush2.msra.mxu0 0.0
        %1150 = vmatprep.subr.mxu0 0.0
        %1151 = vmatpush2.msra.mxu0 0.0
        %1152 = vmatprep.subr.mxu0 0.0
        %1153 = vmatpush2.msra.mxu0 0.0
        %1154 = vmatprep.subr.mxu0 0.0
        %1155 = vmatpush2.msra.mxu0 0.0
        %1156 = vmatprep.subr.mxu0 0.0
        %1157 = vmatpush2.msra.mxu0 0.0
        %1158 = vmatprep.subr.mxu0 0.0
        %1159 = vmatpush2.msra.mxu0 0.0
        %1160 = vmatprep.subr.mxu0 0.0
        %1161 = vmatpush2.msra.mxu0 0.0
        %1162 = vmatprep.subr.mxu0 0.0
        %1163 = vmatpush2.msra.mxu0 0.0
        %1164 = vmatprep.subr.mxu0 0.0
        %1165 = vmatpush2.msra.mxu0 0.0
        %1166 = vmatprep.subr.mxu0 0.0
        %1167 = vmatpush2.msra.mxu0 0.0
        %1168 = vmatprep.subr.mxu0 0.0
        %1169 = vmatpush2.msra.mxu0 0.0
        %1170 = vmatprep.subr.mxu0 0.0
        %1171 = vmatpush2.msra.mxu0 0.0
        %1172 = vmatprep.subr.mxu0 0.0
        %1173 = vmatpush2.msra.mxu0 0.0
        %1174 = vmatprep.subr.mxu0 0.0
        %1175 = vmatpush2.msra.mxu0 0.0
        %1176 = vmatprep.mubr.f32.mxu0 0.0
        %1177 = vmatmul.mubr.f32.gmra.mxu0 %v1049
        %v1178 = vpop.f32.mrf.mxu0
        %v1179 = vadd.f32 %v345, %v1178
        %v1180 = vpop.f32.mrf.mxu0
        %1181 = vmatprep.mubr.f32.mxu0 0.0
        %1182 = vmatmul.mubr.f32.gmra.mxu0 %v1050
        %v1183 = vpop.f32.mrf.mxu0
        %v1184 = vadd.f32 %v345, %v1183
        %v1185 = vpop.f32.mrf.mxu0
        %1186 = vmatprep.mubr.f32.mxu0 0.0
        %1187 = vmatmul.mubr.f32.gmra.mxu0 %v1051
        %v1188 = vpop.f32.mrf.mxu0
        %v1189 = vadd.f32 %v345, %v1188
        %v1190 = vpop.f32.mrf.mxu0
        %1191 = vmatprep.mubr.f32.mxu0 0.0
        %1192 = vmatmul.mubr.f32.gmra.mxu0 %v1052
        %v1193 = vpop.f32.mrf.mxu0
        %v1194 = vadd.f32 %v345, %v1193
        %v1195 = vpop.f32.mrf.mxu0
        %1196 = vmatprep.mubr.f32.mxu0 0.0
        %1197 = vmatmul.mubr.f32.gmra.mxu0 %v1053
        %v1198 = vpop.f32.mrf.mxu0
        %v1199 = vadd.f32 %v345, %v1198
        %v1200 = vpop.f32.mrf.mxu0
        %1201 = vmatprep.mubr.f32.mxu0 0.0
        %1202 = vmatmul.mubr.f32.gmra.mxu0 %v1054
        %v1203 = vpop.f32.mrf.mxu0
        %v1204 = vadd.f32 %v345, %v1203
        %v1205 = vpop.f32.mrf.mxu0
        %1206 = vmatprep.mubr.f32.mxu0 0.0
        %1207 = vmatmul.mubr.f32.gmra.mxu0 %v1055
        %v1208 = vpop.f32.mrf.mxu0
        %v1209 = vadd.f32 %v345, %v1208
        %v1210 = vpop.f32.mrf.mxu0
        %1211 = vmatprep.mubr.f32.mxu0 0.0
        %1212 = vmatmul.mubr.f32.gmra.mxu0 %v1056
        %v1213 = vpop.f32.mrf.mxu0
        %v1214 = vadd.f32 %v345, %v1213
        %v1215 = vpop.f32.mrf.mxu0
        %1216 = vmatprep.mubr.f32.mxu0 0.0
        %1217 = vmatmul.mubr.f32.gmra.mxu0 %v1057
        %v1218 = vpop.f32.mrf.mxu0
        %v1219 = vadd.f32 %v345, %v1218
        %v1220 = vpop.f32.mrf.mxu0
        %1221 = vmatprep.mubr.f32.mxu0 0.0
        %1222 = vmatmul.mubr.f32.gmra.mxu0 %v1058
        %v1223 = vpop.f32.mrf.mxu0
        %v1224 = vadd.f32 %v345, %v1223
        %v1225 = vpop.f32.mrf.mxu0
        %1226 = vmatprep.mubr.f32.mxu0 0.0
        %1227 = vmatmul.mubr.f32.gmra.mxu0 %v1059
        %v1228 = vpop.f32.mrf.mxu0
        %v1229 = vadd.f32 %v345, %v1228
        %v1230 = vpop.f32.mrf.mxu0
        %1231 = vmatprep.mubr.f32.mxu0 0.0
        %1232 = vmatmul.mubr.f32.gmra.mxu0 %v1060
        %v1233 = vpop.f32.mrf.mxu0
        %v1234 = vadd.f32 %v345, %v1233
        %v1235 = vpop.f32.mrf.mxu0
        %1236 = vmatprep.mubr.f32.mxu0 0.0
        %1237 = vmatmul.mubr.f32.gmra.mxu0 %v1061
        %v1238 = vpop.f32.mrf.mxu0
        %v1239 = vadd.f32 %v345, %v1238
        %v1240 = vpop.f32.mrf.mxu0
        %1241 = vmatprep.mubr.f32.mxu0 0.0
        %1242 = vmatmul.mubr.f32.gmra.mxu0 %v1062
        %v1243 = vpop.f32.mrf.mxu0
        %v1244 = vadd.f32 %v345, %v1243
        %v1245 = vpop.f32.mrf.mxu0
        %1246 = vmatprep.mubr.f32.mxu0 0.0
        %1247 = vmatmul.mubr.f32.gmra.mxu0 %v1063
        %v1248 = vpop.f32.mrf.mxu0
        %v1249 = vadd.f32 %v345, %v1248
        %v1250 = vpop.f32.mrf.mxu0
        %1251 = vmatprep.mubr.f32.mxu0 0.0
        %1252 = vmatmul.mubr.f32.gmra.mxu0 %v1064
        %v1253 = vpop.f32.mrf.mxu0
        %v1254 = vadd.f32 %v345, %v1253
        %v1255 = vpop.f32.mrf.mxu0
        %1256 = vmatprep.mubr.f32.mxu0 0.0
        %1257 = vmatmul.mubr.f32.gmra.mxu0 %v1065
        %v1258 = vpop.f32.mrf.mxu0
        %v1259 = vadd.f32 %v345, %v1258
        %v1260 = vpop.f32.mrf.mxu0
        %1261 = vmatprep.mubr.f32.mxu0 0.0
        %1262 = vmatmul.mubr.f32.gmra.mxu0 %v1066
        %v1263 = vpop.f32.mrf.mxu0
        %v1264 = vadd.f32 %v345, %v1263
        %v1265 = vpop.f32.mrf.mxu0
        %1266 = vmatprep.mubr.f32.mxu0 0.0
        %1267 = vmatmul.mubr.f32.gmra.mxu0 %v1067
        %v1268 = vpop.f32.mrf.mxu0
        %v1269 = vadd.f32 %v345, %v1268
        %v1270 = vpop.f32.mrf.mxu0
        %1271 = vmatprep.mubr.f32.mxu0 0.0
        %1272 = vmatmul.mubr.f32.gmra.mxu0 %v1068
        %v1273 = vpop.f32.mrf.mxu0
        %v1274 = vadd.f32 %v345, %v1273
        %v1275 = vpop.f32.mrf.mxu0
        %1276 = vmatprep.mubr.f32.mxu0 0.0
        %1277 = vmatmul.mubr.f32.gmra.mxu0 %v1069
        %v1278 = vpop.f32.mrf.mxu0
        %v1279 = vadd.f32 %v345, %v1278
        %v1280 = vpop.f32.mrf.mxu0
        %1281 = vmatprep.mubr.f32.mxu0 0.0
        %1282 = vmatmul.mubr.f32.gmra.mxu0 %v1070
        %v1283 = vpop.f32.mrf.mxu0
        %v1284 = vadd.f32 %v345, %v1283
        %v1285 = vpop.f32.mrf.mxu0
        %1286 = vmatprep.mubr.f32.mxu0 0.0
        %1287 = vmatmul.mubr.f32.gmra.mxu0 %v1071
        %v1288 = vpop.f32.mrf.mxu0
        %v1289 = vadd.f32 %v345, %v1288
        %v1290 = vpop.f32.mrf.mxu0
        %1291 = vmatprep.mubr.f32.mxu0 0.0
        %1292 = vmatmul.mubr.f32.gmra.mxu0 %v1072
        %v1293 = vpop.f32.mrf.mxu0
        %v1294 = vadd.f32 %v345, %v1293
        %v1295 = vpop.f32.mrf.mxu0
        %1296 = vmatprep.mubr.f32.mxu0 0.0
        %1297 = vmatmul.mubr.f32.gmra.mxu0 %v1073
        %v1298 = vpop.f32.mrf.mxu0
        %v1299 = vadd.f32 %v345, %v1298
        %v1300 = vpop.f32.mrf.mxu0
        %1301 = vmatprep.mubr.f32.mxu0 0.0
        %1302 = vmatmul.mubr.f32.gmra.mxu0 %v1074
        %v1303 = vpop.f32.mrf.mxu0
        %v1304 = vadd.f32 %v345, %v1303
        %v1305 = vpop.f32.mrf.mxu0
        %1306 = vmatprep.mubr.f32.mxu0 0.0
        %1307 = vmatmul.mubr.f32.gmra.mxu0 %v1075
        %v1308 = vpop.f32.mrf.mxu0
        %v1309 = vadd.f32 %v345, %v1308
        %v1310 = vpop.f32.mrf.mxu0
        %1311 = vmatprep.mubr.f32.mxu0 0.0
        %1312 = vmatmul.mubr.f32.gmra.mxu0 %v1076
        %v1313 = vpop.f32.mrf.mxu0
        %v1314 = vadd.f32 %v345, %v1313
        %v1315 = vpop.f32.mrf.mxu0
        %1316 = vmatprep.mubr.f32.mxu0 0.0
        %1317 = vmatmul.mubr.f32.gmra.mxu0 %v1077
        %v1318 = vpop.f32.mrf.mxu0
        %v1319 = vadd.f32 %v345, %v1318
        %v1320 = vpop.f32.mrf.mxu0
        %1321 = vmatprep.mubr.f32.mxu0 0.0
        %1322 = vmatmul.mubr.f32.gmra.mxu0 %v1078
        %v1323 = vpop.f32.mrf.mxu0
        %v1324 = vadd.f32 %v345, %v1323
        %v1325 = vpop.f32.mrf.mxu0
        %1326 = vmatprep.mubr.f32.mxu0 0.0
        %1327 = vmatmul.mubr.f32.gmra.mxu0 %v1079
        %v1328 = vpop.f32.mrf.mxu0
        %v1329 = vadd.f32 %v345, %v1328
        %v1330 = vpop.f32.mrf.mxu0
        %1331 = vmatprep.mubr.f32.mxu0 0.0
        %1332 = vmatmul.mubr.f32.gmra.mxu0 %v1080
        %v1333 = vpop.f32.mrf.mxu0
        %v1334 = vadd.f32 %v345, %v1333
        %v1335 = vpop.f32.mrf.mxu0
        %1336 = vmatprep.mubr.f32.mxu0 0.0
        %1337 = vmatmul.mubr.f32.gmra.mxu0 %v1081
        %v1338 = vpop.f32.mrf.mxu0
        %v1339 = vadd.f32 %v345, %v1338
        %v1340 = vpop.f32.mrf.mxu0
        %1341 = vmatprep.mubr.f32.mxu0 0.0
        %1342 = vmatmul.mubr.f32.gmra.mxu0 %v1082
        %v1343 = vpop.f32.mrf.mxu0
        %v1344 = vadd.f32 %v345, %v1343
        %v1345 = vpop.f32.mrf.mxu0
        %1346 = vmatprep.mubr.f32.mxu0 0.0
        %1347 = vmatmul.mubr.f32.gmra.mxu0 %v1083
        %v1348 = vpop.f32.mrf.mxu0
        %v1349 = vadd.f32 %v345, %v1348
        %v1350 = vpop.f32.mrf.mxu0
        %1351 = vmatprep.mubr.f32.mxu0 0.0
        %1352 = vmatmul.mubr.f32.gmra.mxu0 %v1084
        %v1353 = vpop.f32.mrf.mxu0
        %v1354 = vadd.f32 %v345, %v1353
        %v1355 = vpop.f32.mrf.mxu0
        %1356 = vmatprep.mubr.f32.mxu0 0.0
        %1357 = vmatmul.mubr.f32.gmra.mxu0 %v1085
        %v1358 = vpop.f32.mrf.mxu0
        %v1359 = vadd.f32 %v345, %v1358
        %v1360 = vpop.f32.mrf.mxu0
        %1361 = vmatprep.mubr.f32.mxu0 0.0
        %1362 = vmatmul.mubr.f32.gmra.mxu0 %v1086
        %v1363 = vpop.f32.mrf.mxu0
        %v1364 = vadd.f32 %v345, %v1363
        %v1365 = vpop.f32.mrf.mxu0
        %1366 = vmatprep.mubr.f32.mxu0 0.0
        %1367 = vmatmul.mubr.f32.gmra.mxu0 %v1087
        %v1368 = vpop.f32.mrf.mxu0
        %v1369 = vadd.f32 %v345, %v1368
        %v1370 = vpop.f32.mrf.mxu0
        %1371 = vmatprep.mubr.f32.mxu0 0.0
        %1372 = vmatmul.mubr.f32.gmra.mxu0 %v1088
        %v1373 = vpop.f32.mrf.mxu0
        %v1374 = vadd.f32 %v345, %v1373
        %v1375 = vpop.f32.mrf.mxu0
        %1376 = vmatprep.mubr.f32.mxu0 0.0
        %1377 = vmatmul.mubr.f32.gmra.mxu0 %v1089
        %v1378 = vpop.f32.mrf.mxu0
        %v1379 = vadd.f32 %v345, %v1378
        %v1380 = vpop.f32.mrf.mxu0
        %1381 = vmatprep.mubr.f32.mxu0 0.0
        %1382 = vmatmul.mubr.f32.gmra.mxu0 %v1090
        %v1383 = vpop.f32.mrf.mxu0
        %v1384 = vadd.f32 %v345, %v1383
        %v1385 = vpop.f32.mrf.mxu0
        %1386 = vmatprep.mubr.f32.mxu0 0.0
        %1387 = vmatmul.mubr.f32.gmra.mxu0 %v1091
        %v1388 = vpop.f32.mrf.mxu0
        %v1389 = vadd.f32 %v345, %v1388
        %v1390 = vpop.f32.mrf.mxu0
        %1391 = vmatprep.mubr.f32.mxu0 0.0
        %1392 = vmatmul.mubr.f32.gmra.mxu0 %v1092
        %v1393 = vpop.f32.mrf.mxu0
        %v1394 = vadd.f32 %v345, %v1393
        %v1395 = vpop.f32.mrf.mxu0
        %1396 = vmatprep.mubr.f32.mxu0 0.0
        %1397 = vmatmul.mubr.f32.gmra.mxu0 %v1093
        %v1398 = vpop.f32.mrf.mxu0
        %v1399 = vadd.f32 %v345, %v1398
        %v1400 = vpop.f32.mrf.mxu0
        %1401 = vmatprep.mubr.f32.mxu0 0.0
        %1402 = vmatmul.mubr.f32.gmra.mxu0 %v1094
        %v1403 = vpop.f32.mrf.mxu0
        %v1404 = vadd.f32 %v345, %v1403
        %v1405 = vpop.f32.mrf.mxu0
        %1406 = vmatprep.mubr.f32.mxu0 0.0
        %1407 = vmatmul.mubr.f32.gmra.mxu0 %v1095
        %v1408 = vpop.f32.mrf.mxu0
        %v1409 = vadd.f32 %v345, %v1408
        %v1410 = vpop.f32.mrf.mxu0
        %1411 = vmatprep.mubr.f32.mxu0 0.0
        %1412 = vmatmul.mubr.f32.gmra.mxu0 %v1096
        %v1413 = vpop.f32.mrf.mxu0
        %v1414 = vadd.f32 %v345, %v1413
        %v1415 = vpop.f32.mrf.mxu0
        %1416 = vmatprep.mubr.f32.mxu0 0.0
        %1417 = vmatmul.mubr.f32.gmra.mxu0 %v1097
        %v1418 = vpop.f32.mrf.mxu0
        %v1419 = vadd.f32 %v345, %v1418
        %v1420 = vpop.f32.mrf.mxu0
        %1421 = vmatprep.mubr.f32.mxu0 0.0
        %1422 = vmatmul.mubr.f32.gmra.mxu0 %v1098
        %v1423 = vpop.f32.mrf.mxu0
        %v1424 = vadd.f32 %v345, %v1423
        %v1425 = vpop.f32.mrf.mxu0
        %1426 = vmatprep.mubr.f32.mxu0 0.0
        %1427 = vmatmul.mubr.f32.gmra.mxu0 %v1099
        %v1428 = vpop.f32.mrf.mxu0
        %v1429 = vadd.f32 %v345, %v1428
        %v1430 = vpop.f32.mrf.mxu0
        %1431 = vmatprep.mubr.f32.mxu0 0.0
        %1432 = vmatmul.mubr.f32.gmra.mxu0 %v1100
        %v1433 = vpop.f32.mrf.mxu0
        %v1434 = vadd.f32 %v345, %v1433
        %v1435 = vpop.f32.mrf.mxu0
        %1436 = vmatprep.mubr.f32.mxu0 0.0
        %1437 = vmatmul.mubr.f32.gmra.mxu0 %v1101
        %v1438 = vpop.f32.mrf.mxu0
        %v1439 = vadd.f32 %v345, %v1438
        %v1440 = vpop.f32.mrf.mxu0
        %1441 = vmatprep.mubr.f32.mxu0 0.0
        %1442 = vmatmul.mubr.f32.gmra.mxu0 %v1102
        %v1443 = vpop.f32.mrf.mxu0
        %v1444 = vadd.f32 %v345, %v1443
        %v1445 = vpop.f32.mrf.mxu0
        %1446 = vmatprep.mubr.f32.mxu0 0.0
        %1447 = vmatmul.mubr.f32.gmra.mxu0 %v1103
        %v1448 = vpop.f32.mrf.mxu0
        %v1449 = vadd.f32 %v345, %v1448
        %v1450 = vpop.f32.mrf.mxu0
        %1451 = vmatprep.mubr.f32.mxu0 0.0
        %1452 = vmatmul.mubr.f32.gmra.mxu0 %v1104
        %v1453 = vpop.f32.mrf.mxu0
        %v1454 = vadd.f32 %v345, %v1453
        %v1455 = vpop.f32.mrf.mxu0
        %1456 = vmatprep.mubr.f32.mxu0 0.0
        %1457 = vmatmul.mubr.f32.gmra.mxu0 %v1105
        %v1458 = vpop.f32.mrf.mxu0
        %v1459 = vadd.f32 %v345, %v1458
        %v1460 = vpop.f32.mrf.mxu0
        %1461 = vmatprep.mubr.f32.mxu0 0.0
        %1462 = vmatmul.mubr.f32.gmra.mxu0 %v1106
        %v1463 = vpop.f32.mrf.mxu0
        %v1464 = vadd.f32 %v345, %v1463
        %v1465 = vpop.f32.mrf.mxu0
        %1466 = vmatprep.mubr.f32.mxu0 0.0
        %1467 = vmatmul.mubr.f32.gmra.mxu0 %v1107
        %v1468 = vpop.f32.mrf.mxu0
        %v1469 = vadd.f32 %v345, %v1468
        %v1470 = vpop.f32.mrf.mxu0
        %1471 = vmatprep.mubr.f32.mxu0 0.0
        %1472 = vmatmul.mubr.f32.gmra.mxu0 %v1108
        %v1473 = vpop.f32.mrf.mxu0
        %v1474 = vadd.f32 %v345, %v1473
        %v1475 = vpop.f32.mrf.mxu0
        %1476 = vmatprep.mubr.f32.mxu0 0.0
        %1477 = vmatmul.mubr.f32.gmra.mxu0 %v1109
        %v1478 = vpop.f32.mrf.mxu0
        %v1479 = vadd.f32 %v345, %v1478
        %v1480 = vpop.f32.mrf.mxu0
        %1481 = vmatprep.mubr.f32.mxu0 0.0
        %1482 = vmatmul.mubr.f32.gmra.mxu0 %v1110
        %v1483 = vpop.f32.mrf.mxu0
        %v1484 = vadd.f32 %v345, %v1483
        %v1485 = vpop.f32.mrf.mxu0
        %1486 = vmatprep.mubr.f32.mxu0 0.0
        %1487 = vmatmul.mubr.f32.gmra.mxu0 %v1111
        %v1488 = vpop.f32.mrf.mxu0
        %v1489 = vadd.f32 %v345, %v1488
        %v1490 = vpop.f32.mrf.mxu0
        %1491 = vdwg.mxu0
        %v1492 = vtanh.pop %v1179
        %v1493 = vtanh.pop %v1184
        %v1494 = vtanh.pop %v1189
        %v1495 = vtanh.pop %v1194
        %v1496 = vtanh.pop %v1199
        %v1497 = vtanh.pop %v1204
        %v1498 = vtanh.pop %v1209
        %v1499 = vtanh.pop %v1214
        %v1500 = vtanh.pop %v1219
        %v1501 = vtanh.pop %v1224
        %v1502 = vtanh.pop %v1229
        %v1503 = vtanh.pop %v1234
        %v1504 = vtanh.pop %v1239
        %v1505 = vtanh.pop %v1244
        %v1506 = vtanh.pop %v1249
        %v1507 = vtanh.pop %v1254
        %v1508 = vtanh.pop %v1259
        %v1509 = vtanh.pop %v1264
        %v1510 = vtanh.pop %v1269
        %v1511 = vtanh.pop %v1274
        %v1512 = vtanh.pop %v1279
        %v1513 = vtanh.pop %v1284
        %v1514 = vtanh.pop %v1289
        %v1515 = vtanh.pop %v1294
        %v1516 = vtanh.pop %v1299
        %v1517 = vtanh.pop %v1304
        %v1518 = vtanh.pop %v1309
        %v1519 = vtanh.pop %v1314
        %v1520 = vtanh.pop %v1319
        %v1521 = vtanh.pop %v1324
        %v1522 = vtanh.pop %v1329
        %v1523 = vtanh.pop %v1334
        %v1524 = vtanh.pop %v1339
        %v1525 = vtanh.pop %v1344
        %v1526 = vtanh.pop %v1349
        %v1527 = vtanh.pop %v1354
        %v1528 = vtanh.pop %v1359
        %v1529 = vtanh.pop %v1364
        %v1530 = vtanh.pop %v1369
        %v1531 = vtanh.pop %v1374
        %v1532 = vtanh.pop %v1379
        %v1533 = vtanh.pop %v1384
        %v1534 = vtanh.pop %v1389
        %v1535 = vtanh.pop %v1394
        %v1536 = vtanh.pop %v1399
        %v1537 = vtanh.pop %v1404
        %v1538 = vtanh.pop %v1409
        %v1539 = vtanh.pop %v1414
        %v1540 = vtanh.pop %v1419
        %v1541 = vtanh.pop %v1424
        %v1542 = vtanh.pop %v1429
        %v1543 = vtanh.pop %v1434
        %v1544 = vtanh.pop %v1439
        %v1545 = vtanh.pop %v1444
        %v1546 = vtanh.pop %v1449
        %v1547 = vtanh.pop %v1454
        %v1548 = vtanh.pop %v1459
        %v1549 = vtanh.pop %v1464
        %v1550 = vtanh.pop %v1469
        %v1551 = vtanh.pop %v1474
        %v1552 = vtanh.pop %v1479
        %v1553 = vtanh.pop %v1484
        %v1554 = vtanh.pop %v1489
        %v1555 = vmul.f32 %v1492, %v794
        %v1556 = vmul.f32 %v1493, %v794
        %v1557 = vmul.f32 %v1494, %v794
        %v1558 = vmul.f32 %v1495, %v794
        %v1559 = vmul.f32 %v1496, %v794
        %v1560 = vmul.f32 %v1497, %v794
        %v1561 = vmul.f32 %v1498, %v794
        %v1562 = vmul.f32 %v1499, %v794
        %v1563 = vmul.f32 %v1500, %v794
        %v1564 = vmul.f32 %v1501, %v794
        %v1565 = vmul.f32 %v1502, %v794
        %v1566 = vmul.f32 %v1503, %v794
        %v1567 = vmul.f32 %v1504, %v794
        %v1568 = vmul.f32 %v1505, %v794
        %v1569 = vmul.f32 %v1506, %v794
        %v1570 = vmul.f32 %v1507, %v794
        %v1571 = vmul.f32 %v1508, %v794
        %v1572 = vmul.f32 %v1509, %v794
        %v1573 = vmul.f32 %v1510, %v794
        %v1574 = vmul.f32 %v1511, %v794
        %v1575 = vmul.f32 %v1512, %v794
        %v1576 = vmul.f32 %v1513, %v794
        %v1577 = vmul.f32 %v1514, %v794
        %v1578 = vmul.f32 %v1515, %v794
        %v1579 = vmul.f32 %v1516, %v794
        %v1580 = vmul.f32 %v1517, %v794
        %v1581 = vmul.f32 %v1518, %v794
        %v1582 = vmul.f32 %v1519, %v794
        %v1583 = vmul.f32 %v1520, %v794
        %v1584 = vmul.f32 %v1521, %v794
        %v1585 = vmul.f32 %v1522, %v794
        %v1586 = vmul.f32 %v1523, %v794
        %v1587 = vmul.f32 %v1524, %v794
        %v1588 = vmul.f32 %v1525, %v794
        %v1589 = vmul.f32 %v1526, %v794
        %v1590 = vmul.f32 %v1527, %v794
        %v1591 = vmul.f32 %v1528, %v794
        %v1592 = vmul.f32 %v1529, %v794
        %v1593 = vmul.f32 %v1530, %v794
        %v1594 = vmul.f32 %v1531, %v794
        %v1595 = vmul.f32 %v1532, %v794
        %v1596 = vmul.f32 %v1533, %v794
        %v1597 = vmul.f32 %v1534, %v794
        %v1598 = vmul.f32 %v1535, %v794
        %v1599 = vmul.f32 %v1536, %v794
        %v1600 = vmul.f32 %v1537, %v794
        %v1601 = vmul.f32 %v1538, %v794
        %v1602 = vmul.f32 %v1539, %v794
        %v1603 = vmul.f32 %v1540, %v794
        %v1604 = vmul.f32 %v1541, %v794
        %v1605 = vmul.f32 %v1542, %v794
        %v1606 = vmul.f32 %v1543, %v794
        %v1607 = vmul.f32 %v1544, %v794
        %v1608 = vmul.f32 %v1545, %v794
        %v1609 = vmul.f32 %v1546, %v794
        %v1610 = vmul.f32 %v1547, %v794
        %v1611 = vmul.f32 %v1548, %v794
        %v1612 = vmul.f32 %v1549, %v794
        %v1613 = vmul.f32 %v1550, %v794
        %v1614 = vmul.f32 %v1551, %v794
        %v1615 = vmul.f32 %v1552, %v794
        %v1616 = vmul.f32 %v1553, %v794
        %v1617 = vmul.f32 %v1554, %v794
        %v1618 = vsel %vm859, %v1555, 0.0
        %1619 = vadd.xlane.f32.xlu0 %v1618
        %v1620 = vpop.xlane.xlu0 %1619
        %v1621 = vsel %vm859, %v1556, 0.0
        %1622 = vadd.xlane.f32.xlu0 %v1621
        %v1623 = vpop.xlane.xlu0 %1622
        %v1624 = vsel %vm859, %v1557, 0.0
        %1625 = vadd.xlane.f32.xlu0 %v1624
        %v1626 = vpop.xlane.xlu0 %1625
        %v1627 = vsel %vm859, %v1558, 0.0
        %1628 = vadd.xlane.f32.xlu0 %v1627
        %v1629 = vpop.xlane.xlu0 %1628
        %v1630 = vsel %vm859, %v1559, 0.0
        %1631 = vadd.xlane.f32.xlu0 %v1630
        %v1632 = vpop.xlane.xlu0 %1631
        %v1633 = vsel %vm859, %v1560, 0.0
        %1634 = vadd.xlane.f32.xlu0 %v1633
        %v1635 = vpop.xlane.xlu0 %1634
        %v1636 = vsel %vm859, %v1561, 0.0
        %1637 = vadd.xlane.f32.xlu0 %v1636
        %v1638 = vpop.xlane.xlu0 %1637
        %v1639 = vsel %vm859, %v1562, 0.0
        %1640 = vadd.xlane.f32.xlu0 %v1639
        %v1641 = vpop.xlane.xlu0 %1640
        %v1642 = vsel %vm859, %v1563, 0.0
        %1643 = vadd.xlane.f32.xlu0 %v1642
        %v1644 = vpop.xlane.xlu0 %1643
        %v1645 = vsel %vm859, %v1564, 0.0
        %1646 = vadd.xlane.f32.xlu0 %v1645
        %v1647 = vpop.xlane.xlu0 %1646
        %v1648 = vsel %vm859, %v1565, 0.0
        %1649 = vadd.xlane.f32.xlu0 %v1648
        %v1650 = vpop.xlane.xlu0 %1649
        %v1651 = vsel %vm859, %v1566, 0.0
        %1652 = vadd.xlane.f32.xlu0 %v1651
        %v1653 = vpop.xlane.xlu0 %1652
        %v1654 = vsel %vm859, %v1567, 0.0
        %1655 = vadd.xlane.f32.xlu0 %v1654
        %v1656 = vpop.xlane.xlu0 %1655
        %v1657 = vsel %vm859, %v1568, 0.0
        %1658 = vadd.xlane.f32.xlu0 %v1657
        %v1659 = vpop.xlane.xlu0 %1658
        %v1660 = vsel %vm859, %v1569, 0.0
        %1661 = vadd.xlane.f32.xlu0 %v1660
        %v1662 = vpop.xlane.xlu0 %1661
        %v1663 = vsel %vm859, %v1570, 0.0
        %1664 = vadd.xlane.f32.xlu0 %v1663
        %v1665 = vpop.xlane.xlu0 %1664
        %v1666 = vsel %vm859, %v1571, 0.0
        %1667 = vadd.xlane.f32.xlu0 %v1666
        %v1668 = vpop.xlane.xlu0 %1667
        %v1669 = vsel %vm859, %v1572, 0.0
        %1670 = vadd.xlane.f32.xlu0 %v1669
        %v1671 = vpop.xlane.xlu0 %1670
        %v1672 = vsel %vm859, %v1573, 0.0
        %1673 = vadd.xlane.f32.xlu0 %v1672
        %v1674 = vpop.xlane.xlu0 %1673
        %v1675 = vsel %vm859, %v1574, 0.0
        %1676 = vadd.xlane.f32.xlu0 %v1675
        %v1677 = vpop.xlane.xlu0 %1676
        %v1678 = vsel %vm859, %v1575, 0.0
        %1679 = vadd.xlane.f32.xlu0 %v1678
        %v1680 = vpop.xlane.xlu0 %1679
        %v1681 = vsel %vm859, %v1576, 0.0
        %1682 = vadd.xlane.f32.xlu0 %v1681
        %v1683 = vpop.xlane.xlu0 %1682
        %v1684 = vsel %vm859, %v1577, 0.0
        %1685 = vadd.xlane.f32.xlu0 %v1684
        %v1686 = vpop.xlane.xlu0 %1685
        %v1687 = vsel %vm859, %v1578, 0.0
        %1688 = vadd.xlane.f32.xlu0 %v1687
        %v1689 = vpop.xlane.xlu0 %1688
        %v1690 = vsel %vm859, %v1579, 0.0
        %1691 = vadd.xlane.f32.xlu0 %v1690
        %v1692 = vpop.xlane.xlu0 %1691
        %v1693 = vsel %vm859, %v1580, 0.0
        %1694 = vadd.xlane.f32.xlu0 %v1693
        %v1695 = vpop.xlane.xlu0 %1694
        %v1696 = vsel %vm859, %v1581, 0.0
        %1697 = vadd.xlane.f32.xlu0 %v1696
        %v1698 = vpop.xlane.xlu0 %1697
        %v1699 = vsel %vm859, %v1582, 0.0
        %1700 = vadd.xlane.f32.xlu0 %v1699
        %v1701 = vpop.xlane.xlu0 %1700
        %v1702 = vsel %vm859, %v1583, 0.0
        %1703 = vadd.xlane.f32.xlu0 %v1702
        %v1704 = vpop.xlane.xlu0 %1703
        %v1705 = vsel %vm859, %v1584, 0.0
        %1706 = vadd.xlane.f32.xlu0 %v1705
        %v1707 = vpop.xlane.xlu0 %1706
        %v1708 = vsel %vm859, %v1585, 0.0
        %1709 = vadd.xlane.f32.xlu0 %v1708
        %v1710 = vpop.xlane.xlu0 %1709
        %v1711 = vsel %vm859, %v1586, 0.0
        %1712 = vadd.xlane.f32.xlu0 %v1711
        %v1713 = vpop.xlane.xlu0 %1712
        %v1714 = vsel %vm859, %v1587, 0.0
        %1715 = vadd.xlane.f32.xlu0 %v1714
        %v1716 = vpop.xlane.xlu0 %1715
        %v1717 = vsel %vm859, %v1588, 0.0
        %1718 = vadd.xlane.f32.xlu0 %v1717
        %v1719 = vpop.xlane.xlu0 %1718
        %v1720 = vsel %vm859, %v1589, 0.0
        %1721 = vadd.xlane.f32.xlu0 %v1720
        %v1722 = vpop.xlane.xlu0 %1721
        %v1723 = vsel %vm859, %v1590, 0.0
        %1724 = vadd.xlane.f32.xlu0 %v1723
        %v1725 = vpop.xlane.xlu0 %1724
        %v1726 = vsel %vm859, %v1591, 0.0
        %1727 = vadd.xlane.f32.xlu0 %v1726
        %v1728 = vpop.xlane.xlu0 %1727
        %v1729 = vsel %vm859, %v1592, 0.0
        %1730 = vadd.xlane.f32.xlu0 %v1729
        %v1731 = vpop.xlane.xlu0 %1730
        %v1732 = vsel %vm859, %v1593, 0.0
        %1733 = vadd.xlane.f32.xlu0 %v1732
        %v1734 = vpop.xlane.xlu0 %1733
        %v1735 = vsel %vm859, %v1594, 0.0
        %1736 = vadd.xlane.f32.xlu0 %v1735
        %v1737 = vpop.xlane.xlu0 %1736
        %v1738 = vsel %vm859, %v1595, 0.0
        %1739 = vadd.xlane.f32.xlu0 %v1738
        %v1740 = vpop.xlane.xlu0 %1739
        %v1741 = vsel %vm859, %v1596, 0.0
        %1742 = vadd.xlane.f32.xlu0 %v1741
        %v1743 = vpop.xlane.xlu0 %1742
        %v1744 = vsel %vm859, %v1597, 0.0
        %1745 = vadd.xlane.f32.xlu0 %v1744
        %v1746 = vpop.xlane.xlu0 %1745
        %v1747 = vsel %vm859, %v1598, 0.0
        %1748 = vadd.xlane.f32.xlu0 %v1747
        %v1749 = vpop.xlane.xlu0 %1748
        %v1750 = vsel %vm859, %v1599, 0.0
        %1751 = vadd.xlane.f32.xlu0 %v1750
        %v1752 = vpop.xlane.xlu0 %1751
        %v1753 = vsel %vm859, %v1600, 0.0
        %1754 = vadd.xlane.f32.xlu0 %v1753
        %v1755 = vpop.xlane.xlu0 %1754
        %v1756 = vsel %vm859, %v1601, 0.0
        %1757 = vadd.xlane.f32.xlu0 %v1756
        %v1758 = vpop.xlane.xlu0 %1757
        %v1759 = vsel %vm859, %v1602, 0.0
        %1760 = vadd.xlane.f32.xlu0 %v1759
        %v1761 = vpop.xlane.xlu0 %1760
        %v1762 = vsel %vm859, %v1603, 0.0
        %1763 = vadd.xlane.f32.xlu0 %v1762
        %v1764 = vpop.xlane.xlu0 %1763
        %v1765 = vsel %vm859, %v1604, 0.0
        %1766 = vadd.xlane.f32.xlu0 %v1765
        %v1767 = vpop.xlane.xlu0 %1766
        %v1768 = vsel %vm859, %v1605, 0.0
        %1769 = vadd.xlane.f32.xlu0 %v1768
        %v1770 = vpop.xlane.xlu0 %1769
        %v1771 = vsel %vm859, %v1606, 0.0
        %1772 = vadd.xlane.f32.xlu0 %v1771
        %v1773 = vpop.xlane.xlu0 %1772
        %v1774 = vsel %vm859, %v1607, 0.0
        %1775 = vadd.xlane.f32.xlu0 %v1774
        %v1776 = vpop.xlane.xlu0 %1775
        %v1777 = vsel %vm859, %v1608, 0.0
        %1778 = vadd.xlane.f32.xlu0 %v1777
        %v1779 = vpop.xlane.xlu0 %1778
        %v1780 = vsel %vm859, %v1609, 0.0
        %1781 = vadd.xlane.f32.xlu0 %v1780
        %v1782 = vpop.xlane.xlu0 %1781
        %v1783 = vsel %vm859, %v1610, 0.0
        %1784 = vadd.xlane.f32.xlu0 %v1783
        %v1785 = vpop.xlane.xlu0 %1784
        %v1786 = vsel %vm859, %v1611, 0.0
        %1787 = vadd.xlane.f32.xlu0 %v1786
        %v1788 = vpop.xlane.xlu0 %1787
        %v1789 = vsel %vm859, %v1612, 0.0
        %1790 = vadd.xlane.f32.xlu0 %v1789
        %v1791 = vpop.xlane.xlu0 %1790
        %v1792 = vsel %vm859, %v1613, 0.0
        %1793 = vadd.xlane.f32.xlu0 %v1792
        %v1794 = vpop.xlane.xlu0 %1793
        %v1795 = vsel %vm859, %v1614, 0.0
        %1796 = vadd.xlane.f32.xlu0 %v1795
        %v1797 = vpop.xlane.xlu0 %1796
        %v1798 = vsel %vm859, %v1615, 0.0
        %1799 = vadd.xlane.f32.xlu0 %v1798
        %v1800 = vpop.xlane.xlu0 %1799
        %v1801 = vsel %vm859, %v1616, 0.0
        %1802 = vadd.xlane.f32.xlu0 %v1801
        %v1803 = vpop.xlane.xlu0 %1802
        %v1804 = vsel %vm859, %v1617, 0.0
        %1805 = vadd.xlane.f32.xlu0 %v1804
        %v1806 = vpop.xlane.xlu0 %1805
        %v1807 = vld [vmem:[%s216 + $0x10] sm:$0xff]
        %v1808 = vld [vmem:[%s216 + $0x28] sm:$0xff]
        %v1809 = vld [vmem:[%s216 + $0x40] sm:$0xff]
        %v1810 = vld [vmem:[%s216 + $0x58] sm:$0xff]
        %v1811 = vld [vmem:[%s216 + $0x70] sm:$0xff]
        %v1812 = vld [vmem:[%s216 + $0x88] sm:$0xff]
        %v1813 = vld [vmem:[%s216 + $0xa0] sm:$0xff]
        %v1814 = vld [vmem:[%s216 + $0xb8] sm:$0xff]
        %v1815 = vld [vmem:[%s216 + $0xd0] sm:$0xff]
        %v1816 = vld [vmem:[%s216 + $0xe8] sm:$0xff]
        %v1817 = vld [vmem:[%s216 + $0x100] sm:$0xff]
        %v1818 = vld [vmem:[%s216 + $0x118] sm:$0xff]
        %v1819 = vld [vmem:[%s216 + $0x130] sm:$0xff]
        %v1820 = vld [vmem:[%s216 + $0x148] sm:$0xff]
        %v1821 = vld [vmem:[%s216 + $0x160] sm:$0xff]
        %v1822 = vld [vmem:[%s216 + $0x178] sm:$0xff]
        %v1823 = vld [vmem:[%s216 + $0x190] sm:$0xff]
        %v1824 = vld [vmem:[%s216 + $0x1a8] sm:$0xff]
        %v1825 = vld [vmem:[%s216 + $0x1c0] sm:$0xff]
        %v1826 = vld [vmem:[%s216 + $0x1d8] sm:$0xff]
        %v1827 = vld [vmem:[%s216 + $0x1f0] sm:$0xff]
        %v1828 = vld [vmem:[%s216 + $0x208] sm:$0xff]
        %v1829 = vld [vmem:[%s216 + $0x220] sm:$0xff]
        %v1830 = vld [vmem:[%s216 + $0x238] sm:$0xff]
        %v1831 = vld [vmem:[%s216 + $0x250] sm:$0xff]
        %v1832 = vld [vmem:[%s216 + $0x268] sm:$0xff]
        %v1833 = vld [vmem:[%s216 + $0x280] sm:$0xff]
        %v1834 = vld [vmem:[%s216 + $0x298] sm:$0xff]
        %v1835 = vld [vmem:[%s216 + $0x2b0] sm:$0xff]
        %v1836 = vld [vmem:[%s216 + $0x2c8] sm:$0xff]
        %v1837 = vld [vmem:[%s216 + $0x2e0] sm:$0xff]
        %v1838 = vld [vmem:[%s216 + $0x2f8] sm:$0xff]
        %v1839 = vld [vmem:[%s216 + $0x310] sm:$0xff]
        %v1840 = vld [vmem:[%s216 + $0x328] sm:$0xff]
        %v1841 = vld [vmem:[%s216 + $0x340] sm:$0xff]
        %v1842 = vld [vmem:[%s216 + $0x358] sm:$0xff]
        %v1843 = vld [vmem:[%s216 + $0x370] sm:$0xff]
        %v1844 = vld [vmem:[%s216 + $0x388] sm:$0xff]
        %v1845 = vld [vmem:[%s216 + $0x3a0] sm:$0xff]
        %v1846 = vld [vmem:[%s216 + $0x3b8] sm:$0xff]
        %v1847 = vld [vmem:[%s216 + $0x3d0] sm:$0xff]
        %v1848 = vld [vmem:[%s216 + $0x3e8] sm:$0xff]
        %v1849 = vld [vmem:[%s216 + $0x400] sm:$0xff]
        %v1850 = vld [vmem:[%s216 + $0x418] sm:$0xff]
        %v1851 = vld [vmem:[%s216 + $0x430] sm:$0xff]
        %v1852 = vld [vmem:[%s216 + $0x448] sm:$0xff]
        %v1853 = vld [vmem:[%s216 + $0x460] sm:$0xff]
        %v1854 = vld [vmem:[%s216 + $0x478] sm:$0xff]
        %v1855 = vld [vmem:[%s216 + $0x490] sm:$0xff]
        %v1856 = vld [vmem:[%s216 + $0x4a8] sm:$0xff]
        %v1857 = vld [vmem:[%s216 + $0x4c0] sm:$0xff]
        %v1858 = vld [vmem:[%s216 + $0x4d8] sm:$0xff]
        %v1859 = vld [vmem:[%s216 + $0x4f0] sm:$0xff]
        %v1860 = vld [vmem:[%s216 + $0x508] sm:$0xff]
        %v1861 = vld [vmem:[%s216 + $0x520] sm:$0xff]
        %v1862 = vld [vmem:[%s216 + $0x538] sm:$0xff]
        %v1863 = vld [vmem:[%s216 + $0x550] sm:$0xff]
        %v1864 = vld [vmem:[%s216 + $0x568] sm:$0xff]
        %v1865 = vld [vmem:[%s216 + $0x580] sm:$0xff]
        %v1866 = vld [vmem:[%s216 + $0x598] sm:$0xff]
        %v1867 = vld [vmem:[%s216 + $0x5b0] sm:$0xff]
        %v1868 = vld [vmem:[%s216 + $0x5c8] sm:$0xff]
        %v1869 = vld [vmem:[%s216 + $0x5e0] sm:$0xff]
        %1870 = vmatprep.subr.mxu0 0.0
        %1871 = vmatpush1.msra.mxu0 %v275
        %1872 = vmatprep.subr.mxu0 0.0
        %1873 = vmatpush1.msra.mxu0 %v274
        %1874 = vmatprep.subr.mxu0 0.0
        %1875 = vmatpush1.msra.mxu0 %v273
        %1876 = vmatprep.subr.mxu0 0.0
        %1877 = vmatpush1.msra.mxu0 %v272
        %1878 = vmatprep.subr.mxu0 0.0
        %1879 = vmatpush1.msra.mxu0 %v271
        %1880 = vmatprep.subr.mxu0 0.0
        %1881 = vmatpush1.msra.mxu0 %v270
        %1882 = vmatprep.subr.mxu0 0.0
        %1883 = vmatpush1.msra.mxu0 %v269
        %1884 = vmatprep.subr.mxu0 0.0
        %1885 = vmatpush1.msra.mxu0 %v268
        %1886 = vmatprep.subr.mxu0 0.0
        %1887 = vmatpush1.msra.mxu0 %v267
        %1888 = vmatprep.subr.mxu0 0.0
        %1889 = vmatpush1.msra.mxu0 %v266
        %1890 = vmatprep.subr.mxu0 0.0
        %1891 = vmatpush1.msra.mxu0 %v265
        %1892 = vmatprep.subr.mxu0 0.0
        %1893 = vmatpush1.msra.mxu0 %v264
        %1894 = vmatprep.subr.mxu0 0.0
        %1895 = vmatpush1.msra.mxu0 %v263
        %1896 = vmatprep.subr.mxu0 0.0
        %1897 = vmatpush1.msra.mxu0 %v262
        %1898 = vmatprep.subr.mxu0 0.0
        %1899 = vmatpush1.msra.mxu0 %v261
        %1900 = vmatprep.subr.mxu0 0.0
        %1901 = vmatpush1.msra.mxu0 %v260
        %1902 = vmatprep.subr.mxu0 0.0
        %1903 = vmatpush2.msra.mxu0 0.0
        %1904 = vmatprep.subr.mxu0 0.0
        %1905 = vmatpush2.msra.mxu0 0.0
        %1906 = vmatprep.subr.mxu0 0.0
        %1907 = vmatpush2.msra.mxu0 0.0
        %1908 = vmatprep.subr.mxu0 0.0
        %1909 = vmatpush2.msra.mxu0 0.0
        %1910 = vmatprep.subr.mxu0 0.0
        %1911 = vmatpush2.msra.mxu0 0.0
        %1912 = vmatprep.subr.mxu0 0.0
        %1913 = vmatpush2.msra.mxu0 0.0
        %1914 = vmatprep.subr.mxu0 0.0
        %1915 = vmatpush2.msra.mxu0 0.0
        %1916 = vmatprep.subr.mxu0 0.0
        %1917 = vmatpush2.msra.mxu0 0.0
        %1918 = vmatprep.subr.mxu0 0.0
        %1919 = vmatpush2.msra.mxu0 0.0
        %1920 = vmatprep.subr.mxu0 0.0
        %1921 = vmatpush2.msra.mxu0 0.0
        %1922 = vmatprep.subr.mxu0 0.0
        %1923 = vmatpush2.msra.mxu0 0.0
        %1924 = vmatprep.subr.mxu0 0.0
        %1925 = vmatpush2.msra.mxu0 0.0
        %1926 = vmatprep.subr.mxu0 0.0
        %1927 = vmatpush2.msra.mxu0 0.0
        %1928 = vmatprep.subr.mxu0 0.0
        %1929 = vmatpush2.msra.mxu0 0.0
        %1930 = vmatprep.subr.mxu0 0.0
        %1931 = vmatpush2.msra.mxu0 0.0
        %1932 = vmatprep.subr.mxu0 0.0
        %1933 = vmatpush2.msra.mxu0 0.0
        %1934 = vmatprep.mubr.f32.mxu0 0.0
        %1935 = vmatmul.mubr.f32.gmra.mxu0 %v1807
        %v1936 = vpop.f32.mrf.mxu0
        %v1937 = vadd.f32 %v345, %v1936
        %v1938 = vpop.f32.mrf.mxu0
        %1939 = vmatprep.mubr.f32.mxu0 0.0
        %1940 = vmatmul.mubr.f32.gmra.mxu0 %v1808
        %v1941 = vpop.f32.mrf.mxu0
        %v1942 = vadd.f32 %v345, %v1941
        %v1943 = vpop.f32.mrf.mxu0
        %1944 = vmatprep.mubr.f32.mxu0 0.0
        %1945 = vmatmul.mubr.f32.gmra.mxu0 %v1809
        %v1946 = vpop.f32.mrf.mxu0
        %v1947 = vadd.f32 %v345, %v1946
        %v1948 = vpop.f32.mrf.mxu0
        %1949 = vmatprep.mubr.f32.mxu0 0.0
        %1950 = vmatmul.mubr.f32.gmra.mxu0 %v1810
        %v1951 = vpop.f32.mrf.mxu0
        %v1952 = vadd.f32 %v345, %v1951
        %v1953 = vpop.f32.mrf.mxu0
        %1954 = vmatprep.mubr.f32.mxu0 0.0
        %1955 = vmatmul.mubr.f32.gmra.mxu0 %v1811
        %v1956 = vpop.f32.mrf.mxu0
        %v1957 = vadd.f32 %v345, %v1956
        %v1958 = vpop.f32.mrf.mxu0
        %1959 = vmatprep.mubr.f32.mxu0 0.0
        %1960 = vmatmul.mubr.f32.gmra.mxu0 %v1812
        %v1961 = vpop.f32.mrf.mxu0
        %v1962 = vadd.f32 %v345, %v1961
        %v1963 = vpop.f32.mrf.mxu0
        %1964 = vmatprep.mubr.f32.mxu0 0.0
        %1965 = vmatmul.mubr.f32.gmra.mxu0 %v1813
        %v1966 = vpop.f32.mrf.mxu0
        %v1967 = vadd.f32 %v345, %v1966
        %v1968 = vpop.f32.mrf.mxu0
        %1969 = vmatprep.mubr.f32.mxu0 0.0
        %1970 = vmatmul.mubr.f32.gmra.mxu0 %v1814
        %v1971 = vpop.f32.mrf.mxu0
        %v1972 = vadd.f32 %v345, %v1971
        %v1973 = vpop.f32.mrf.mxu0
        %1974 = vmatprep.mubr.f32.mxu0 0.0
        %1975 = vmatmul.mubr.f32.gmra.mxu0 %v1815
        %v1976 = vpop.f32.mrf.mxu0
        %v1977 = vadd.f32 %v345, %v1976
        %v1978 = vpop.f32.mrf.mxu0
        %1979 = vmatprep.mubr.f32.mxu0 0.0
        %1980 = vmatmul.mubr.f32.gmra.mxu0 %v1816
        %v1981 = vpop.f32.mrf.mxu0
        %v1982 = vadd.f32 %v345, %v1981
        %v1983 = vpop.f32.mrf.mxu0
        %1984 = vmatprep.mubr.f32.mxu0 0.0
        %1985 = vmatmul.mubr.f32.gmra.mxu0 %v1817
        %v1986 = vpop.f32.mrf.mxu0
        %v1987 = vadd.f32 %v345, %v1986
        %v1988 = vpop.f32.mrf.mxu0
        %1989 = vmatprep.mubr.f32.mxu0 0.0
        %1990 = vmatmul.mubr.f32.gmra.mxu0 %v1818
        %v1991 = vpop.f32.mrf.mxu0
        %v1992 = vadd.f32 %v345, %v1991
        %v1993 = vpop.f32.mrf.mxu0
        %1994 = vmatprep.mubr.f32.mxu0 0.0
        %1995 = vmatmul.mubr.f32.gmra.mxu0 %v1819
        %v1996 = vpop.f32.mrf.mxu0
        %v1997 = vadd.f32 %v345, %v1996
        %v1998 = vpop.f32.mrf.mxu0
        %1999 = vmatprep.mubr.f32.mxu0 0.0
        %2000 = vmatmul.mubr.f32.gmra.mxu0 %v1820
        %v2001 = vpop.f32.mrf.mxu0
        %v2002 = vadd.f32 %v345, %v2001
        %v2003 = vpop.f32.mrf.mxu0
        %2004 = vmatprep.mubr.f32.mxu0 0.0
        %2005 = vmatmul.mubr.f32.gmra.mxu0 %v1821
        %v2006 = vpop.f32.mrf.mxu0
        %v2007 = vadd.f32 %v345, %v2006
        %v2008 = vpop.f32.mrf.mxu0
        %2009 = vmatprep.mubr.f32.mxu0 0.0
        %2010 = vmatmul.mubr.f32.gmra.mxu0 %v1822
        %v2011 = vpop.f32.mrf.mxu0
        %v2012 = vadd.f32 %v345, %v2011
        %v2013 = vpop.f32.mrf.mxu0
        %2014 = vmatprep.mubr.f32.mxu0 0.0
        %2015 = vmatmul.mubr.f32.gmra.mxu0 %v1823
        %v2016 = vpop.f32.mrf.mxu0
        %v2017 = vadd.f32 %v345, %v2016
        %v2018 = vpop.f32.mrf.mxu0
        %2019 = vmatprep.mubr.f32.mxu0 0.0
        %2020 = vmatmul.mubr.f32.gmra.mxu0 %v1824
        %v2021 = vpop.f32.mrf.mxu0
        %v2022 = vadd.f32 %v345, %v2021
        %v2023 = vpop.f32.mrf.mxu0
        %2024 = vmatprep.mubr.f32.mxu0 0.0
        %2025 = vmatmul.mubr.f32.gmra.mxu0 %v1825
        %v2026 = vpop.f32.mrf.mxu0
        %v2027 = vadd.f32 %v345, %v2026
        %v2028 = vpop.f32.mrf.mxu0
        %2029 = vmatprep.mubr.f32.mxu0 0.0
        %2030 = vmatmul.mubr.f32.gmra.mxu0 %v1826
        %v2031 = vpop.f32.mrf.mxu0
        %v2032 = vadd.f32 %v345, %v2031
        %v2033 = vpop.f32.mrf.mxu0
        %2034 = vmatprep.mubr.f32.mxu0 0.0
        %2035 = vmatmul.mubr.f32.gmra.mxu0 %v1827
        %v2036 = vpop.f32.mrf.mxu0
        %v2037 = vadd.f32 %v345, %v2036
        %v2038 = vpop.f32.mrf.mxu0
        %2039 = vmatprep.mubr.f32.mxu0 0.0
        %2040 = vmatmul.mubr.f32.gmra.mxu0 %v1828
        %v2041 = vpop.f32.mrf.mxu0
        %v2042 = vadd.f32 %v345, %v2041
        %v2043 = vpop.f32.mrf.mxu0
        %2044 = vmatprep.mubr.f32.mxu0 0.0
        %2045 = vmatmul.mubr.f32.gmra.mxu0 %v1829
        %v2046 = vpop.f32.mrf.mxu0
        %v2047 = vadd.f32 %v345, %v2046
        %v2048 = vpop.f32.mrf.mxu0
        %2049 = vmatprep.mubr.f32.mxu0 0.0
        %2050 = vmatmul.mubr.f32.gmra.mxu0 %v1830
        %v2051 = vpop.f32.mrf.mxu0
        %v2052 = vadd.f32 %v345, %v2051
        %v2053 = vpop.f32.mrf.mxu0
        %2054 = vmatprep.mubr.f32.mxu0 0.0
        %2055 = vmatmul.mubr.f32.gmra.mxu0 %v1831
        %v2056 = vpop.f32.mrf.mxu0
        %v2057 = vadd.f32 %v345, %v2056
        %v2058 = vpop.f32.mrf.mxu0
        %2059 = vmatprep.mubr.f32.mxu0 0.0
        %2060 = vmatmul.mubr.f32.gmra.mxu0 %v1832
        %v2061 = vpop.f32.mrf.mxu0
        %v2062 = vadd.f32 %v345, %v2061
        %v2063 = vpop.f32.mrf.mxu0
        %2064 = vmatprep.mubr.f32.mxu0 0.0
        %2065 = vmatmul.mubr.f32.gmra.mxu0 %v1833
        %v2066 = vpop.f32.mrf.mxu0
        %v2067 = vadd.f32 %v345, %v2066
        %v2068 = vpop.f32.mrf.mxu0
        %2069 = vmatprep.mubr.f32.mxu0 0.0
        %2070 = vmatmul.mubr.f32.gmra.mxu0 %v1834
        %v2071 = vpop.f32.mrf.mxu0
        %v2072 = vadd.f32 %v345, %v2071
        %v2073 = vpop.f32.mrf.mxu0
        %2074 = vmatprep.mubr.f32.mxu0 0.0
        %2075 = vmatmul.mubr.f32.gmra.mxu0 %v1835
        %v2076 = vpop.f32.mrf.mxu0
        %v2077 = vadd.f32 %v345, %v2076
        %v2078 = vpop.f32.mrf.mxu0
        %2079 = vmatprep.mubr.f32.mxu0 0.0
        %2080 = vmatmul.mubr.f32.gmra.mxu0 %v1836
        %v2081 = vpop.f32.mrf.mxu0
        %v2082 = vadd.f32 %v345, %v2081
        %v2083 = vpop.f32.mrf.mxu0
        %2084 = vmatprep.mubr.f32.mxu0 0.0
        %2085 = vmatmul.mubr.f32.gmra.mxu0 %v1837
        %v2086 = vpop.f32.mrf.mxu0
        %v2087 = vadd.f32 %v345, %v2086
        %v2088 = vpop.f32.mrf.mxu0
        %2089 = vmatprep.mubr.f32.mxu0 0.0
        %2090 = vmatmul.mubr.f32.gmra.mxu0 %v1838
        %v2091 = vpop.f32.mrf.mxu0
        %v2092 = vadd.f32 %v345, %v2091
        %v2093 = vpop.f32.mrf.mxu0
        %2094 = vmatprep.mubr.f32.mxu0 0.0
        %2095 = vmatmul.mubr.f32.gmra.mxu0 %v1839
        %v2096 = vpop.f32.mrf.mxu0
        %v2097 = vadd.f32 %v345, %v2096
        %v2098 = vpop.f32.mrf.mxu0
        %2099 = vmatprep.mubr.f32.mxu0 0.0
        %2100 = vmatmul.mubr.f32.gmra.mxu0 %v1840
        %v2101 = vpop.f32.mrf.mxu0
        %v2102 = vadd.f32 %v345, %v2101
        %v2103 = vpop.f32.mrf.mxu0
        %2104 = vmatprep.mubr.f32.mxu0 0.0
        %2105 = vmatmul.mubr.f32.gmra.mxu0 %v1841
        %v2106 = vpop.f32.mrf.mxu0
        %v2107 = vadd.f32 %v345, %v2106
        %v2108 = vpop.f32.mrf.mxu0
        %2109 = vmatprep.mubr.f32.mxu0 0.0
        %2110 = vmatmul.mubr.f32.gmra.mxu0 %v1842
        %v2111 = vpop.f32.mrf.mxu0
        %v2112 = vadd.f32 %v345, %v2111
        %v2113 = vpop.f32.mrf.mxu0
        %2114 = vmatprep.mubr.f32.mxu0 0.0
        %2115 = vmatmul.mubr.f32.gmra.mxu0 %v1843
        %v2116 = vpop.f32.mrf.mxu0
        %v2117 = vadd.f32 %v345, %v2116
        %v2118 = vpop.f32.mrf.mxu0
        %2119 = vmatprep.mubr.f32.mxu0 0.0
        %2120 = vmatmul.mubr.f32.gmra.mxu0 %v1844
        %v2121 = vpop.f32.mrf.mxu0
        %v2122 = vadd.f32 %v345, %v2121
        %v2123 = vpop.f32.mrf.mxu0
        %2124 = vmatprep.mubr.f32.mxu0 0.0
        %2125 = vmatmul.mubr.f32.gmra.mxu0 %v1845
        %v2126 = vpop.f32.mrf.mxu0
        %v2127 = vadd.f32 %v345, %v2126
        %v2128 = vpop.f32.mrf.mxu0
        %2129 = vmatprep.mubr.f32.mxu0 0.0
        %2130 = vmatmul.mubr.f32.gmra.mxu0 %v1846
        %v2131 = vpop.f32.mrf.mxu0
        %v2132 = vadd.f32 %v345, %v2131
        %v2133 = vpop.f32.mrf.mxu0
        %2134 = vmatprep.mubr.f32.mxu0 0.0
        %2135 = vmatmul.mubr.f32.gmra.mxu0 %v1847
        %v2136 = vpop.f32.mrf.mxu0
        %v2137 = vadd.f32 %v345, %v2136
        %v2138 = vpop.f32.mrf.mxu0
        %2139 = vmatprep.mubr.f32.mxu0 0.0
        %2140 = vmatmul.mubr.f32.gmra.mxu0 %v1848
        %v2141 = vpop.f32.mrf.mxu0
        %v2142 = vadd.f32 %v345, %v2141
        %v2143 = vpop.f32.mrf.mxu0
        %2144 = vmatprep.mubr.f32.mxu0 0.0
        %2145 = vmatmul.mubr.f32.gmra.mxu0 %v1849
        %v2146 = vpop.f32.mrf.mxu0
        %v2147 = vadd.f32 %v345, %v2146
        %v2148 = vpop.f32.mrf.mxu0
        %2149 = vmatprep.mubr.f32.mxu0 0.0
        %2150 = vmatmul.mubr.f32.gmra.mxu0 %v1850
        %v2151 = vpop.f32.mrf.mxu0
        %v2152 = vadd.f32 %v345, %v2151
        %v2153 = vpop.f32.mrf.mxu0
        %2154 = vmatprep.mubr.f32.mxu0 0.0
        %2155 = vmatmul.mubr.f32.gmra.mxu0 %v1851
        %v2156 = vpop.f32.mrf.mxu0
        %v2157 = vadd.f32 %v345, %v2156
        %v2158 = vpop.f32.mrf.mxu0
        %2159 = vmatprep.mubr.f32.mxu0 0.0
        %2160 = vmatmul.mubr.f32.gmra.mxu0 %v1852
        %v2161 = vpop.f32.mrf.mxu0
        %v2162 = vadd.f32 %v345, %v2161
        %v2163 = vpop.f32.mrf.mxu0
        %2164 = vmatprep.mubr.f32.mxu0 0.0
        %2165 = vmatmul.mubr.f32.gmra.mxu0 %v1853
        %v2166 = vpop.f32.mrf.mxu0
        %v2167 = vadd.f32 %v345, %v2166
        %v2168 = vpop.f32.mrf.mxu0
        %2169 = vmatprep.mubr.f32.mxu0 0.0
        %2170 = vmatmul.mubr.f32.gmra.mxu0 %v1854
        %v2171 = vpop.f32.mrf.mxu0
        %v2172 = vadd.f32 %v345, %v2171
        %v2173 = vpop.f32.mrf.mxu0
        %2174 = vmatprep.mubr.f32.mxu0 0.0
        %2175 = vmatmul.mubr.f32.gmra.mxu0 %v1855
        %v2176 = vpop.f32.mrf.mxu0
        %v2177 = vadd.f32 %v345, %v2176
        %v2178 = vpop.f32.mrf.mxu0
        %2179 = vmatprep.mubr.f32.mxu0 0.0
        %2180 = vmatmul.mubr.f32.gmra.mxu0 %v1856
        %v2181 = vpop.f32.mrf.mxu0
        %v2182 = vadd.f32 %v345, %v2181
        %v2183 = vpop.f32.mrf.mxu0
        %2184 = vmatprep.mubr.f32.mxu0 0.0
        %2185 = vmatmul.mubr.f32.gmra.mxu0 %v1857
        %v2186 = vpop.f32.mrf.mxu0
        %v2187 = vadd.f32 %v345, %v2186
        %v2188 = vpop.f32.mrf.mxu0
        %2189 = vmatprep.mubr.f32.mxu0 0.0
        %2190 = vmatmul.mubr.f32.gmra.mxu0 %v1858
        %v2191 = vpop.f32.mrf.mxu0
        %v2192 = vadd.f32 %v345, %v2191
        %v2193 = vpop.f32.mrf.mxu0
        %2194 = vmatprep.mubr.f32.mxu0 0.0
        %2195 = vmatmul.mubr.f32.gmra.mxu0 %v1859
        %v2196 = vpop.f32.mrf.mxu0
        %v2197 = vadd.f32 %v345, %v2196
        %v2198 = vpop.f32.mrf.mxu0
        %2199 = vmatprep.mubr.f32.mxu0 0.0
        %2200 = vmatmul.mubr.f32.gmra.mxu0 %v1860
        %v2201 = vpop.f32.mrf.mxu0
        %v2202 = vadd.f32 %v345, %v2201
        %v2203 = vpop.f32.mrf.mxu0
        %2204 = vmatprep.mubr.f32.mxu0 0.0
        %2205 = vmatmul.mubr.f32.gmra.mxu0 %v1861
        %v2206 = vpop.f32.mrf.mxu0
        %v2207 = vadd.f32 %v345, %v2206
        %v2208 = vpop.f32.mrf.mxu0
        %2209 = vmatprep.mubr.f32.mxu0 0.0
        %2210 = vmatmul.mubr.f32.gmra.mxu0 %v1862
        %v2211 = vpop.f32.mrf.mxu0
        %v2212 = vadd.f32 %v345, %v2211
        %v2213 = vpop.f32.mrf.mxu0
        %2214 = vmatprep.mubr.f32.mxu0 0.0
        %2215 = vmatmul.mubr.f32.gmra.mxu0 %v1863
        %v2216 = vpop.f32.mrf.mxu0
        %v2217 = vadd.f32 %v345, %v2216
        %v2218 = vpop.f32.mrf.mxu0
        %2219 = vmatprep.mubr.f32.mxu0 0.0
        %2220 = vmatmul.mubr.f32.gmra.mxu0 %v1864
        %v2221 = vpop.f32.mrf.mxu0
        %v2222 = vadd.f32 %v345, %v2221
        %v2223 = vpop.f32.mrf.mxu0
        %2224 = vmatprep.mubr.f32.mxu0 0.0
        %2225 = vmatmul.mubr.f32.gmra.mxu0 %v1865
        %v2226 = vpop.f32.mrf.mxu0
        %v2227 = vadd.f32 %v345, %v2226
        %v2228 = vpop.f32.mrf.mxu0
        %2229 = vmatprep.mubr.f32.mxu0 0.0
        %2230 = vmatmul.mubr.f32.gmra.mxu0 %v1866
        %v2231 = vpop.f32.mrf.mxu0
        %v2232 = vadd.f32 %v345, %v2231
        %v2233 = vpop.f32.mrf.mxu0
        %2234 = vmatprep.mubr.f32.mxu0 0.0
        %2235 = vmatmul.mubr.f32.gmra.mxu0 %v1867
        %v2236 = vpop.f32.mrf.mxu0
        %v2237 = vadd.f32 %v345, %v2236
        %v2238 = vpop.f32.mrf.mxu0
        %2239 = vmatprep.mubr.f32.mxu0 0.0
        %2240 = vmatmul.mubr.f32.gmra.mxu0 %v1868
        %v2241 = vpop.f32.mrf.mxu0
        %v2242 = vadd.f32 %v345, %v2241
        %v2243 = vpop.f32.mrf.mxu0
        %2244 = vmatprep.mubr.f32.mxu0 0.0
        %2245 = vmatmul.mubr.f32.gmra.mxu0 %v1869
        %v2246 = vpop.f32.mrf.mxu0
        %v2247 = vadd.f32 %v345, %v2246
        %v2248 = vpop.f32.mrf.mxu0
        %2249 = vdwg.mxu0
        %v2250 = vtanh.pop %v1937
        %v2251 = vtanh.pop %v1942
        %v2252 = vtanh.pop %v1947
        %v2253 = vtanh.pop %v1952
        %v2254 = vtanh.pop %v1957
        %v2255 = vtanh.pop %v1962
        %v2256 = vtanh.pop %v1967
        %v2257 = vtanh.pop %v1972
        %v2258 = vtanh.pop %v1977
        %v2259 = vtanh.pop %v1982
        %v2260 = vtanh.pop %v1987
        %v2261 = vtanh.pop %v1992
        %v2262 = vtanh.pop %v1997
        %v2263 = vtanh.pop %v2002
        %v2264 = vtanh.pop %v2007
        %v2265 = vtanh.pop %v2012
        %v2266 = vtanh.pop %v2017
        %v2267 = vtanh.pop %v2022
        %v2268 = vtanh.pop %v2027
        %v2269 = vtanh.pop %v2032
        %v2270 = vtanh.pop %v2037
        %v2271 = vtanh.pop %v2042
        %v2272 = vtanh.pop %v2047
        %v2273 = vtanh.pop %v2052
        %v2274 = vtanh.pop %v2057
        %v2275 = vtanh.pop %v2062
        %v2276 = vtanh.pop %v2067
        %v2277 = vtanh.pop %v2072
        %v2278 = vtanh.pop %v2077
        %v2279 = vtanh.pop %v2082
        %v2280 = vtanh.pop %v2087
        %v2281 = vtanh.pop %v2092
        %v2282 = vtanh.pop %v2097
        %v2283 = vtanh.pop %v2102
        %v2284 = vtanh.pop %v2107
        %v2285 = vtanh.pop %v2112
        %v2286 = vtanh.pop %v2117
        %v2287 = vtanh.pop %v2122
        %v2288 = vtanh.pop %v2127
        %v2289 = vtanh.pop %v2132
        %v2290 = vtanh.pop %v2137
        %v2291 = vtanh.pop %v2142
        %v2292 = vtanh.pop %v2147
        %v2293 = vtanh.pop %v2152
        %v2294 = vtanh.pop %v2157
        %v2295 = vtanh.pop %v2162
        %v2296 = vtanh.pop %v2167
        %v2297 = vtanh.pop %v2172
        %v2298 = vtanh.pop %v2177
        %v2299 = vtanh.pop %v2182
        %v2300 = vtanh.pop %v2187
        %v2301 = vtanh.pop %v2192
        %v2302 = vtanh.pop %v2197
        %v2303 = vtanh.pop %v2202
        %v2304 = vtanh.pop %v2207
        %v2305 = vtanh.pop %v2212
        %v2306 = vtanh.pop %v2217
        %v2307 = vtanh.pop %v2222
        %v2308 = vtanh.pop %v2227
        %v2309 = vtanh.pop %v2232
        %v2310 = vtanh.pop %v2237
        %v2311 = vtanh.pop %v2242
        %v2312 = vtanh.pop %v2247
        %v2313 = vmul.f32 %v2250, %v794
        %v2314 = vmul.f32 %v2251, %v794
        %v2315 = vmul.f32 %v2252, %v794
        %v2316 = vmul.f32 %v2253, %v794
        %v2317 = vmul.f32 %v2254, %v794
        %v2318 = vmul.f32 %v2255, %v794
        %v2319 = vmul.f32 %v2256, %v794
        %v2320 = vmul.f32 %v2257, %v794
        %v2321 = vmul.f32 %v2258, %v794
        %v2322 = vmul.f32 %v2259, %v794
        %v2323 = vmul.f32 %v2260, %v794
        %v2324 = vmul.f32 %v2261, %v794
        %v2325 = vmul.f32 %v2262, %v794
        %v2326 = vmul.f32 %v2263, %v794
        %v2327 = vmul.f32 %v2264, %v794
        %v2328 = vmul.f32 %v2265, %v794
        %v2329 = vmul.f32 %v2266, %v794
        %v2330 = vmul.f32 %v2267, %v794
        %v2331 = vmul.f32 %v2268, %v794
        %v2332 = vmul.f32 %v2269, %v794
        %v2333 = vmul.f32 %v2270, %v794
        %v2334 = vmul.f32 %v2271, %v794
        %v2335 = vmul.f32 %v2272, %v794
        %v2336 = vmul.f32 %v2273, %v794
        %v2337 = vmul.f32 %v2274, %v794
        %v2338 = vmul.f32 %v2275, %v794
        %v2339 = vmul.f32 %v2276, %v794
        %v2340 = vmul.f32 %v2277, %v794
        %v2341 = vmul.f32 %v2278, %v794
        %v2342 = vmul.f32 %v2279, %v794
        %v2343 = vmul.f32 %v2280, %v794
        %v2344 = vmul.f32 %v2281, %v794
        %v2345 = vmul.f32 %v2282, %v794
        %v2346 = vmul.f32 %v2283, %v794
        %v2347 = vmul.f32 %v2284, %v794
        %v2348 = vmul.f32 %v2285, %v794
        %v2349 = vmul.f32 %v2286, %v794
        %v2350 = vmul.f32 %v2287, %v794
        %v2351 = vmul.f32 %v2288, %v794
        %v2352 = vmul.f32 %v2289, %v794
        %v2353 = vmul.f32 %v2290, %v794
        %v2354 = vmul.f32 %v2291, %v794
        %v2355 = vmul.f32 %v2292, %v794
        %v2356 = vmul.f32 %v2293, %v794
        %v2357 = vmul.f32 %v2294, %v794
        %v2358 = vmul.f32 %v2295, %v794
        %v2359 = vmul.f32 %v2296, %v794
        %v2360 = vmul.f32 %v2297, %v794
        %v2361 = vmul.f32 %v2298, %v794
        %v2362 = vmul.f32 %v2299, %v794
        %v2363 = vmul.f32 %v2300, %v794
        %v2364 = vmul.f32 %v2301, %v794
        %v2365 = vmul.f32 %v2302, %v794
        %v2366 = vmul.f32 %v2303, %v794
        %v2367 = vmul.f32 %v2304, %v794
        %v2368 = vmul.f32 %v2305, %v794
        %v2369 = vmul.f32 %v2306, %v794
        %v2370 = vmul.f32 %v2307, %v794
        %v2371 = vmul.f32 %v2308, %v794
        %v2372 = vmul.f32 %v2309, %v794
        %v2373 = vmul.f32 %v2310, %v794
        %v2374 = vmul.f32 %v2311, %v794
        %v2375 = vmul.f32 %v2312, %v794
        %v2376 = vsel %vm859, %v2313, 0.0
        %2377 = vadd.xlane.f32.xlu0 %v2376
        %v2378 = vpop.xlane.xlu0 %2377
        %v2379 = vsel %vm859, %v2314, 0.0
        %2380 = vadd.xlane.f32.xlu0 %v2379
        %v2381 = vpop.xlane.xlu0 %2380
        %v2382 = vsel %vm859, %v2315, 0.0
        %2383 = vadd.xlane.f32.xlu0 %v2382
        %v2384 = vpop.xlane.xlu0 %2383
        %v2385 = vsel %vm859, %v2316, 0.0
        %2386 = vadd.xlane.f32.xlu0 %v2385
        %v2387 = vpop.xlane.xlu0 %2386
        %v2388 = vsel %vm859, %v2317, 0.0
        %2389 = vadd.xlane.f32.xlu0 %v2388
        %v2390 = vpop.xlane.xlu0 %2389
        %v2391 = vsel %vm859, %v2318, 0.0
        %2392 = vadd.xlane.f32.xlu0 %v2391
        %v2393 = vpop.xlane.xlu0 %2392
        %v2394 = vsel %vm859, %v2319, 0.0
        %2395 = vadd.xlane.f32.xlu0 %v2394
        %v2396 = vpop.xlane.xlu0 %2395
        %v2397 = vsel %vm859, %v2320, 0.0
        %2398 = vadd.xlane.f32.xlu0 %v2397
        %v2399 = vpop.xlane.xlu0 %2398
        %v2400 = vsel %vm859, %v2321, 0.0
        %2401 = vadd.xlane.f32.xlu0 %v2400
        %v2402 = vpop.xlane.xlu0 %2401
        %v2403 = vsel %vm859, %v2322, 0.0
        %2404 = vadd.xlane.f32.xlu0 %v2403
        %v2405 = vpop.xlane.xlu0 %2404
        %v2406 = vsel %vm859, %v2323, 0.0
        %2407 = vadd.xlane.f32.xlu0 %v2406
        %v2408 = vpop.xlane.xlu0 %2407
        %v2409 = vsel %vm859, %v2324, 0.0
        %2410 = vadd.xlane.f32.xlu0 %v2409
        %v2411 = vpop.xlane.xlu0 %2410
        %v2412 = vsel %vm859, %v2325, 0.0
        %2413 = vadd.xlane.f32.xlu0 %v2412
        %v2414 = vpop.xlane.xlu0 %2413
        %v2415 = vsel %vm859, %v2326, 0.0
        %2416 = vadd.xlane.f32.xlu0 %v2415
        %v2417 = vpop.xlane.xlu0 %2416
        %v2418 = vsel %vm859, %v2327, 0.0
        %2419 = vadd.xlane.f32.xlu0 %v2418
        %v2420 = vpop.xlane.xlu0 %2419
        %v2421 = vsel %vm859, %v2328, 0.0
        %2422 = vadd.xlane.f32.xlu0 %v2421
        %v2423 = vpop.xlane.xlu0 %2422
        %v2424 = vsel %vm859, %v2329, 0.0
        %2425 = vadd.xlane.f32.xlu0 %v2424
        %v2426 = vpop.xlane.xlu0 %2425
        %v2427 = vsel %vm859, %v2330, 0.0
        %2428 = vadd.xlane.f32.xlu0 %v2427
        %v2429 = vpop.xlane.xlu0 %2428
        %v2430 = vsel %vm859, %v2331, 0.0
        %2431 = vadd.xlane.f32.xlu0 %v2430
        %v2432 = vpop.xlane.xlu0 %2431
        %v2433 = vsel %vm859, %v2332, 0.0
        %2434 = vadd.xlane.f32.xlu0 %v2433
        %v2435 = vpop.xlane.xlu0 %2434
        %v2436 = vsel %vm859, %v2333, 0.0
        %2437 = vadd.xlane.f32.xlu0 %v2436
        %v2438 = vpop.xlane.xlu0 %2437
        %v2439 = vsel %vm859, %v2334, 0.0
        %2440 = vadd.xlane.f32.xlu0 %v2439
        %v2441 = vpop.xlane.xlu0 %2440
        %v2442 = vsel %vm859, %v2335, 0.0
        %2443 = vadd.xlane.f32.xlu0 %v2442
        %v2444 = vpop.xlane.xlu0 %2443
        %v2445 = vsel %vm859, %v2336, 0.0
        %2446 = vadd.xlane.f32.xlu0 %v2445
        %v2447 = vpop.xlane.xlu0 %2446
        %v2448 = vsel %vm859, %v2337, 0.0
        %2449 = vadd.xlane.f32.xlu0 %v2448
        %v2450 = vpop.xlane.xlu0 %2449
        %v2451 = vsel %vm859, %v2338, 0.0
        %2452 = vadd.xlane.f32.xlu0 %v2451
        %v2453 = vpop.xlane.xlu0 %2452
        %v2454 = vsel %vm859, %v2339, 0.0
        %2455 = vadd.xlane.f32.xlu0 %v2454
        %v2456 = vpop.xlane.xlu0 %2455
        %v2457 = vsel %vm859, %v2340, 0.0
        %2458 = vadd.xlane.f32.xlu0 %v2457
        %v2459 = vpop.xlane.xlu0 %2458
        %v2460 = vsel %vm859, %v2341, 0.0
        %2461 = vadd.xlane.f32.xlu0 %v2460
        %v2462 = vpop.xlane.xlu0 %2461
        %v2463 = vsel %vm859, %v2342, 0.0
        %2464 = vadd.xlane.f32.xlu0 %v2463
        %v2465 = vpop.xlane.xlu0 %2464
        %v2466 = vsel %vm859, %v2343, 0.0
        %2467 = vadd.xlane.f32.xlu0 %v2466
        %v2468 = vpop.xlane.xlu0 %2467
        %v2469 = vsel %vm859, %v2344, 0.0
        %2470 = vadd.xlane.f32.xlu0 %v2469
        %v2471 = vpop.xlane.xlu0 %2470
        %v2472 = vsel %vm859, %v2345, 0.0
        %2473 = vadd.xlane.f32.xlu0 %v2472
        %v2474 = vpop.xlane.xlu0 %2473
        %v2475 = vsel %vm859, %v2346, 0.0
        %2476 = vadd.xlane.f32.xlu0 %v2475
        %v2477 = vpop.xlane.xlu0 %2476
        %v2478 = vsel %vm859, %v2347, 0.0
        %2479 = vadd.xlane.f32.xlu0 %v2478
        %v2480 = vpop.xlane.xlu0 %2479
        %v2481 = vsel %vm859, %v2348, 0.0
        %2482 = vadd.xlane.f32.xlu0 %v2481
        %v2483 = vpop.xlane.xlu0 %2482
        %v2484 = vsel %vm859, %v2349, 0.0
        %2485 = vadd.xlane.f32.xlu0 %v2484
        %v2486 = vpop.xlane.xlu0 %2485
        %v2487 = vsel %vm859, %v2350, 0.0
        %2488 = vadd.xlane.f32.xlu0 %v2487
        %v2489 = vpop.xlane.xlu0 %2488
        %v2490 = vsel %vm859, %v2351, 0.0
        %2491 = vadd.xlane.f32.xlu0 %v2490
        %v2492 = vpop.xlane.xlu0 %2491
        %v2493 = vsel %vm859, %v2352, 0.0
        %2494 = vadd.xlane.f32.xlu0 %v2493
        %v2495 = vpop.xlane.xlu0 %2494
        %v2496 = vsel %vm859, %v2353, 0.0
        %2497 = vadd.xlane.f32.xlu0 %v2496
        %v2498 = vpop.xlane.xlu0 %2497
        %v2499 = vsel %vm859, %v2354, 0.0
        %2500 = vadd.xlane.f32.xlu0 %v2499
        %v2501 = vpop.xlane.xlu0 %2500
        %v2502 = vsel %vm859, %v2355, 0.0
        %2503 = vadd.xlane.f32.xlu0 %v2502
        %v2504 = vpop.xlane.xlu0 %2503
        %v2505 = vsel %vm859, %v2356, 0.0
        %2506 = vadd.xlane.f32.xlu0 %v2505
        %v2507 = vpop.xlane.xlu0 %2506
        %v2508 = vsel %vm859, %v2357, 0.0
        %2509 = vadd.xlane.f32.xlu0 %v2508
        %v2510 = vpop.xlane.xlu0 %2509
        %v2511 = vsel %vm859, %v2358, 0.0
        %2512 = vadd.xlane.f32.xlu0 %v2511
        %v2513 = vpop.xlane.xlu0 %2512
        %v2514 = vsel %vm859, %v2359, 0.0
        %2515 = vadd.xlane.f32.xlu0 %v2514
        %v2516 = vpop.xlane.xlu0 %2515
        %v2517 = vsel %vm859, %v2360, 0.0
        %2518 = vadd.xlane.f32.xlu0 %v2517
        %v2519 = vpop.xlane.xlu0 %2518
        %v2520 = vsel %vm859, %v2361, 0.0
        %2521 = vadd.xlane.f32.xlu0 %v2520
        %v2522 = vpop.xlane.xlu0 %2521
        %v2523 = vsel %vm859, %v2362, 0.0
        %2524 = vadd.xlane.f32.xlu0 %v2523
        %v2525 = vpop.xlane.xlu0 %2524
        %v2526 = vsel %vm859, %v2363, 0.0
        %2527 = vadd.xlane.f32.xlu0 %v2526
        %v2528 = vpop.xlane.xlu0 %2527
        %v2529 = vsel %vm859, %v2364, 0.0
        %2530 = vadd.xlane.f32.xlu0 %v2529
        %v2531 = vpop.xlane.xlu0 %2530
        %v2532 = vsel %vm859, %v2365, 0.0
        %2533 = vadd.xlane.f32.xlu0 %v2532
        %v2534 = vpop.xlane.xlu0 %2533
        %v2535 = vsel %vm859, %v2366, 0.0
        %2536 = vadd.xlane.f32.xlu0 %v2535
        %v2537 = vpop.xlane.xlu0 %2536
        %v2538 = vsel %vm859, %v2367, 0.0
        %2539 = vadd.xlane.f32.xlu0 %v2538
        %v2540 = vpop.xlane.xlu0 %2539
        %v2541 = vsel %vm859, %v2368, 0.0
        %2542 = vadd.xlane.f32.xlu0 %v2541
        %v2543 = vpop.xlane.xlu0 %2542
        %v2544 = vsel %vm859, %v2369, 0.0
        %2545 = vadd.xlane.f32.xlu0 %v2544
        %v2546 = vpop.xlane.xlu0 %2545
        %v2547 = vsel %vm859, %v2370, 0.0
        %2548 = vadd.xlane.f32.xlu0 %v2547
        %v2549 = vpop.xlane.xlu0 %2548
        %v2550 = vsel %vm859, %v2371, 0.0
        %2551 = vadd.xlane.f32.xlu0 %v2550
        %v2552 = vpop.xlane.xlu0 %2551
        %v2553 = vsel %vm859, %v2372, 0.0
        %2554 = vadd.xlane.f32.xlu0 %v2553
        %v2555 = vpop.xlane.xlu0 %2554
        %v2556 = vsel %vm859, %v2373, 0.0
        %2557 = vadd.xlane.f32.xlu0 %v2556
        %v2558 = vpop.xlane.xlu0 %2557
        %v2559 = vsel %vm859, %v2374, 0.0
        %2560 = vadd.xlane.f32.xlu0 %v2559
        %v2561 = vpop.xlane.xlu0 %2560
        %v2562 = vsel %vm859, %v2375, 0.0
        %2563 = vadd.xlane.f32.xlu0 %v2562
        %v2564 = vpop.xlane.xlu0 %2563
        %v2565 = vmax.f32 %v862, %v1620
        %v2566 = vmax.f32 %v865, %v1623
        %v2567 = vmax.f32 %v868, %v1626
        %v2568 = vmax.f32 %v871, %v1629
        %v2569 = vmax.f32 %v874, %v1632
        %v2570 = vmax.f32 %v877, %v1635
        %v2571 = vmax.f32 %v880, %v1638
        %v2572 = vmax.f32 %v883, %v1641
        %v2573 = vmax.f32 %v886, %v1644
        %v2574 = vmax.f32 %v889, %v1647
        %v2575 = vmax.f32 %v892, %v1650
        %v2576 = vmax.f32 %v895, %v1653
        %v2577 = vmax.f32 %v898, %v1656
        %v2578 = vmax.f32 %v901, %v1659
        %v2579 = vmax.f32 %v904, %v1662
        %v2580 = vmax.f32 %v907, %v1665
        %v2581 = vmax.f32 %v910, %v1668
        %v2582 = vmax.f32 %v913, %v1671
        %v2583 = vmax.f32 %v916, %v1674
        %v2584 = vmax.f32 %v919, %v1677
        %v2585 = vmax.f32 %v922, %v1680
        %v2586 = vmax.f32 %v925, %v1683
        %v2587 = vmax.f32 %v928, %v1686
        %v2588 = vmax.f32 %v931, %v1689
        %v2589 = vmax.f32 %v934, %v1692
        %v2590 = vmax.f32 %v937, %v1695
        %v2591 = vmax.f32 %v940, %v1698
        %v2592 = vmax.f32 %v943, %v1701
        %v2593 = vmax.f32 %v946, %v1704
        %v2594 = vmax.f32 %v949, %v1707
        %v2595 = vmax.f32 %v952, %v1710
        %v2596 = vmax.f32 %v955, %v1713
        %v2597 = vmax.f32 %v958, %v1716
        %v2598 = vmax.f32 %v961, %v1719
        %v2599 = vmax.f32 %v964, %v1722
        %v2600 = vmax.f32 %v967, %v1725
        %v2601 = vmax.f32 %v970, %v1728
        %v2602 = vmax.f32 %v973, %v1731
        %v2603 = vmax.f32 %v976, %v1734
        %v2604 = vmax.f32 %v979, %v1737
        %v2605 = vmax.f32 %v982, %v1740
        %v2606 = vmax.f32 %v985, %v1743
        %v2607 = vmax.f32 %v988, %v1746
        %v2608 = vmax.f32 %v991, %v1749
        %v2609 = vmax.f32 %v994, %v1752
        %v2610 = vmax.f32 %v997, %v1755
        %v2611 = vmax.f32 %v1000, %v1758
        %v2612 = vmax.f32 %v1003, %v1761
        %v2613 = vmax.f32 %v1006, %v1764
        %v2614 = vmax.f32 %v1009, %v1767
        %v2615 = vmax.f32 %v1012, %v1770
        %v2616 = vmax.f32 %v1015, %v1773
        %v2617 = vmax.f32 %v1018, %v1776
        %v2618 = vmax.f32 %v1021, %v1779
        %v2619 = vmax.f32 %v1024, %v1782
        %v2620 = vmax.f32 %v1027, %v1785
        %v2621 = vmax.f32 %v1030, %v1788
        %v2622 = vmax.f32 %v1033, %v1791
        %v2623 = vmax.f32 %v1036, %v1794
        %v2624 = vmax.f32 %v1039, %v1797
        %v2625 = vmax.f32 %v1042, %v1800
        %v2626 = vmax.f32 %v1045, %v1803
        %v2627 = vmax.f32 %v1048, %v1806
        %v2628 = vmax.f32 %v2565, %v2378
        %v2629 = vmax.f32 %v2566, %v2381
        %v2630 = vmax.f32 %v2567, %v2384
        %v2631 = vmax.f32 %v2568, %v2387
        %v2632 = vmax.f32 %v2569, %v2390
        %v2633 = vmax.f32 %v2570, %v2393
        %v2634 = vmax.f32 %v2571, %v2396
        %v2635 = vmax.f32 %v2572, %v2399
        %v2636 = vmax.f32 %v2573, %v2402
        %v2637 = vmax.f32 %v2574, %v2405
        %v2638 = vmax.f32 %v2575, %v2408
        %v2639 = vmax.f32 %v2576, %v2411
        %v2640 = vmax.f32 %v2577, %v2414
        %v2641 = vmax.f32 %v2578, %v2417
        %v2642 = vmax.f32 %v2579, %v2420
        %v2643 = vmax.f32 %v2580, %v2423
        %v2644 = vmax.f32 %v2581, %v2426
        %v2645 = vmax.f32 %v2582, %v2429
        %v2646 = vmax.f32 %v2583, %v2432
        %v2647 = vmax.f32 %v2584, %v2435
        %v2648 = vmax.f32 %v2585, %v2438
        %v2649 = vmax.f32 %v2586, %v2441
        %v2650 = vmax.f32 %v2587, %v2444
        %v2651 = vmax.f32 %v2588, %v2447
        %v2652 = vmax.f32 %v2589, %v2450
        %v2653 = vmax.f32 %v2590, %v2453
        %v2654 = vmax.f32 %v2591, %v2456
        %v2655 = vmax.f32 %v2592, %v2459
        %v2656 = vmax.f32 %v2593, %v2462
        %v2657 = vmax.f32 %v2594, %v2465
        %v2658 = vmax.f32 %v2595, %v2468
        %v2659 = vmax.f32 %v2596, %v2471
        %v2660 = vmax.f32 %v2597, %v2474
        %v2661 = vmax.f32 %v2598, %v2477
        %v2662 = vmax.f32 %v2599, %v2480
        %v2663 = vmax.f32 %v2600, %v2483
        %v2664 = vmax.f32 %v2601, %v2486
        %v2665 = vmax.f32 %v2602, %v2489
        %v2666 = vmax.f32 %v2603, %v2492
        %v2667 = vmax.f32 %v2604, %v2495
        %v2668 = vmax.f32 %v2605, %v2498
        %v2669 = vmax.f32 %v2606, %v2501
        %v2670 = vmax.f32 %v2607, %v2504
        %v2671 = vmax.f32 %v2608, %v2507
        %v2672 = vmax.f32 %v2609, %v2510
        %v2673 = vmax.f32 %v2610, %v2513
        %v2674 = vmax.f32 %v2611, %v2516
        %v2675 = vmax.f32 %v2612, %v2519
        %v2676 = vmax.f32 %v2613, %v2522
        %v2677 = vmax.f32 %v2614, %v2525
        %v2678 = vmax.f32 %v2615, %v2528
        %v2679 = vmax.f32 %v2616, %v2531
        %v2680 = vmax.f32 %v2617, %v2534
        %v2681 = vmax.f32 %v2618, %v2537
        %v2682 = vmax.f32 %v2619, %v2540
        %v2683 = vmax.f32 %v2620, %v2543
        %v2684 = vmax.f32 %v2621, %v2546
        %v2685 = vmax.f32 %v2622, %v2549
        %v2686 = vmax.f32 %v2623, %v2552
        %v2687 = vmax.f32 %v2624, %v2555
        %v2688 = vmax.f32 %v2625, %v2558
        %v2689 = vmax.f32 %v2626, %v2561
        %v2690 = vmax.f32 %v2627, %v2564
        %v2691 = vsub.f32 %v862, %v2628
        %v2692 = vsub.f32 %v865, %v2629
        %v2693 = vsub.f32 %v868, %v2630
        %v2694 = vsub.f32 %v871, %v2631
        %v2695 = vsub.f32 %v874, %v2632
        %v2696 = vsub.f32 %v877, %v2633
        %v2697 = vsub.f32 %v880, %v2634
        %v2698 = vsub.f32 %v883, %v2635
        %v2699 = vsub.f32 %v886, %v2636
        %v2700 = vsub.f32 %v889, %v2637
        %v2701 = vsub.f32 %v892, %v2638
        %v2702 = vsub.f32 %v895, %v2639
        %v2703 = vsub.f32 %v898, %v2640
        %v2704 = vsub.f32 %v901, %v2641
        %v2705 = vsub.f32 %v904, %v2642
        %v2706 = vsub.f32 %v907, %v2643
        %v2707 = vsub.f32 %v910, %v2644
        %v2708 = vsub.f32 %v913, %v2645
        %v2709 = vsub.f32 %v916, %v2646
        %v2710 = vsub.f32 %v919, %v2647
        %v2711 = vsub.f32 %v922, %v2648
        %v2712 = vsub.f32 %v925, %v2649
        %v2713 = vsub.f32 %v928, %v2650
        %v2714 = vsub.f32 %v931, %v2651
        %v2715 = vsub.f32 %v934, %v2652
        %v2716 = vsub.f32 %v937, %v2653
        %v2717 = vsub.f32 %v940, %v2654
        %v2718 = vsub.f32 %v943, %v2655
        %v2719 = vsub.f32 %v946, %v2656
        %v2720 = vsub.f32 %v949, %v2657
        %v2721 = vsub.f32 %v952, %v2658
        %v2722 = vsub.f32 %v955, %v2659
        %v2723 = vsub.f32 %v958, %v2660
        %v2724 = vsub.f32 %v961, %v2661
        %v2725 = vsub.f32 %v964, %v2662
        %v2726 = vsub.f32 %v967, %v2663
        %v2727 = vsub.f32 %v970, %v2664
        %v2728 = vsub.f32 %v973, %v2665
        %v2729 = vsub.f32 %v976, %v2666
        %v2730 = vsub.f32 %v979, %v2667
        %v2731 = vsub.f32 %v982, %v2668
        %v2732 = vsub.f32 %v985, %v2669
        %v2733 = vsub.f32 %v988, %v2670
        %v2734 = vsub.f32 %v991, %v2671
        %v2735 = vsub.f32 %v994, %v2672
        %v2736 = vsub.f32 %v997, %v2673
        %v2737 = vsub.f32 %v1000, %v2674
        %v2738 = vsub.f32 %v1003, %v2675
        %v2739 = vsub.f32 %v1006, %v2676
        %v2740 = vsub.f32 %v1009, %v2677
        %v2741 = vsub.f32 %v1012, %v2678
        %v2742 = vsub.f32 %v1015, %v2679
        %v2743 = vsub.f32 %v1018, %v2680
        %v2744 = vsub.f32 %v1021, %v2681
        %v2745 = vsub.f32 %v1024, %v2682
        %v2746 = vsub.f32 %v1027, %v2683
        %v2747 = vsub.f32 %v1030, %v2684
        %v2748 = vsub.f32 %v1033, %v2685
        %v2749 = vsub.f32 %v1036, %v2686
        %v2750 = vsub.f32 %v1039, %v2687
        %v2751 = vsub.f32 %v1042, %v2688
        %v2752 = vsub.f32 %v1045, %v2689
        %v2753 = vsub.f32 %v1048, %v2690
        %v2754 = vmul.f32 %v2691, 1.442695
        %v2755 = vpow.pop %v2754
        %v2756 = vmul.f32 %v2692, 1.442695
        %v2757 = vpow.pop %v2756
        %v2758 = vmul.f32 %v2693, 1.442695
        %v2759 = vpow.pop %v2758
        %v2760 = vmul.f32 %v2694, 1.442695
        %v2761 = vpow.pop %v2760
        %v2762 = vmul.f32 %v2695, 1.442695
        %v2763 = vpow.pop %v2762
        %v2764 = vmul.f32 %v2696, 1.442695
        %v2765 = vpow.pop %v2764
        %v2766 = vmul.f32 %v2697, 1.442695
        %v2767 = vpow.pop %v2766
        %v2768 = vmul.f32 %v2698, 1.442695
        %v2769 = vpow.pop %v2768
        %v2770 = vmul.f32 %v2699, 1.442695
        %v2771 = vpow.pop %v2770
        %v2772 = vmul.f32 %v2700, 1.442695
        %v2773 = vpow.pop %v2772
        %v2774 = vmul.f32 %v2701, 1.442695
        %v2775 = vpow.pop %v2774
        %v2776 = vmul.f32 %v2702, 1.442695
        %v2777 = vpow.pop %v2776
        %v2778 = vmul.f32 %v2703, 1.442695
        %v2779 = vpow.pop %v2778
        %v2780 = vmul.f32 %v2704, 1.442695
        %v2781 = vpow.pop %v2780
        %v2782 = vmul.f32 %v2705, 1.442695
        %v2783 = vpow.pop %v2782
        %v2784 = vmul.f32 %v2706, 1.442695
        %v2785 = vpow.pop %v2784
        %v2786 = vmul.f32 %v2707, 1.442695
        %v2787 = vpow.pop %v2786
        %v2788 = vmul.f32 %v2708, 1.442695
        %v2789 = vpow.pop %v2788
        %v2790 = vmul.f32 %v2709, 1.442695
        %v2791 = vpow.pop %v2790
        %v2792 = vmul.f32 %v2710, 1.442695
        %v2793 = vpow.pop %v2792
        %v2794 = vmul.f32 %v2711, 1.442695
        %v2795 = vpow.pop %v2794
        %v2796 = vmul.f32 %v2712, 1.442695
        %v2797 = vpow.pop %v2796
        %v2798 = vmul.f32 %v2713, 1.442695
        %v2799 = vpow.pop %v2798
        %v2800 = vmul.f32 %v2714, 1.442695
        %v2801 = vpow.pop %v2800
        %v2802 = vmul.f32 %v2715, 1.442695
        %v2803 = vpow.pop %v2802
        %v2804 = vmul.f32 %v2716, 1.442695
        %v2805 = vpow.pop %v2804
        %v2806 = vmul.f32 %v2717, 1.442695
        %v2807 = vpow.pop %v2806
        %v2808 = vmul.f32 %v2718, 1.442695
        %v2809 = vpow.pop %v2808
        %v2810 = vmul.f32 %v2719, 1.442695
        %v2811 = vpow.pop %v2810
        %v2812 = vmul.f32 %v2720, 1.442695
        %v2813 = vpow.pop %v2812
        %v2814 = vmul.f32 %v2721, 1.442695
        %v2815 = vpow.pop %v2814
        %v2816 = vmul.f32 %v2722, 1.442695
        %v2817 = vpow.pop %v2816
        %v2818 = vmul.f32 %v2723, 1.442695
        %v2819 = vpow.pop %v2818
        %v2820 = vmul.f32 %v2724, 1.442695
        %v2821 = vpow.pop %v2820
        %v2822 = vmul.f32 %v2725, 1.442695
        %v2823 = vpow.pop %v2822
        %v2824 = vmul.f32 %v2726, 1.442695
        %v2825 = vpow.pop %v2824
        %v2826 = vmul.f32 %v2727, 1.442695
        %v2827 = vpow.pop %v2826
        %v2828 = vmul.f32 %v2728, 1.442695
        %v2829 = vpow.pop %v2828
        %v2830 = vmul.f32 %v2729, 1.442695
        %v2831 = vpow.pop %v2830
        %v2832 = vmul.f32 %v2730, 1.442695
        %v2833 = vpow.pop %v2832
        %v2834 = vmul.f32 %v2731, 1.442695
        %v2835 = vpow.pop %v2834
        %v2836 = vmul.f32 %v2732, 1.442695
        %v2837 = vpow.pop %v2836
        %v2838 = vmul.f32 %v2733, 1.442695
        %v2839 = vpow.pop %v2838
        %v2840 = vmul.f32 %v2734, 1.442695
        %v2841 = vpow.pop %v2840
        %v2842 = vmul.f32 %v2735, 1.442695
        %v2843 = vpow.pop %v2842
        %v2844 = vmul.f32 %v2736, 1.442695
        %v2845 = vpow.pop %v2844
        %v2846 = vmul.f32 %v2737, 1.442695
        %v2847 = vpow.pop %v2846
        %v2848 = vmul.f32 %v2738, 1.442695
        %v2849 = vpow.pop %v2848
        %v2850 = vmul.f32 %v2739, 1.442695
        %v2851 = vpow.pop %v2850
        %v2852 = vmul.f32 %v2740, 1.442695
        %v2853 = vpow.pop %v2852
        %v2854 = vmul.f32 %v2741, 1.442695
        %v2855 = vpow.pop %v2854
        %v2856 = vmul.f32 %v2742, 1.442695
        %v2857 = vpow.pop %v2856
        %v2858 = vmul.f32 %v2743, 1.442695
        %v2859 = vpow.pop %v2858
        %v2860 = vmul.f32 %v2744, 1.442695
        %v2861 = vpow.pop %v2860
        %v2862 = vmul.f32 %v2745, 1.442695
        %v2863 = vpow.pop %v2862
        %v2864 = vmul.f32 %v2746, 1.442695
        %v2865 = vpow.pop %v2864
        %v2866 = vmul.f32 %v2747, 1.442695
        %v2867 = vpow.pop %v2866
        %v2868 = vmul.f32 %v2748, 1.442695
        %v2869 = vpow.pop %v2868
        %v2870 = vmul.f32 %v2749, 1.442695
        %v2871 = vpow.pop %v2870
        %v2872 = vmul.f32 %v2750, 1.442695
        %v2873 = vpow.pop %v2872
        %v2874 = vmul.f32 %v2751, 1.442695
        %v2875 = vpow.pop %v2874
        %v2876 = vmul.f32 %v2752, 1.442695
        %v2877 = vpow.pop %v2876
        %v2878 = vmul.f32 %v2753, 1.442695
        %v2879 = vpow.pop %v2878
        %v2880 = vsub.f32 %v1620, %v2628
        %v2881 = vsub.f32 %v1623, %v2629
        %v2882 = vsub.f32 %v1626, %v2630
        %v2883 = vsub.f32 %v1629, %v2631
        %v2884 = vsub.f32 %v1632, %v2632
        %v2885 = vsub.f32 %v1635, %v2633
        %v2886 = vsub.f32 %v1638, %v2634
        %v2887 = vsub.f32 %v1641, %v2635
        %v2888 = vsub.f32 %v1644, %v2636
        %v2889 = vsub.f32 %v1647, %v2637
        %v2890 = vsub.f32 %v1650, %v2638
        %v2891 = vsub.f32 %v1653, %v2639
        %v2892 = vsub.f32 %v1656, %v2640
        %v2893 = vsub.f32 %v1659, %v2641
        %v2894 = vsub.f32 %v1662, %v2642
        %v2895 = vsub.f32 %v1665, %v2643
        %v2896 = vsub.f32 %v1668, %v2644
        %v2897 = vsub.f32 %v1671, %v2645
        %v2898 = vsub.f32 %v1674, %v2646
        %v2899 = vsub.f32 %v1677, %v2647
        %v2900 = vsub.f32 %v1680, %v2648
        %v2901 = vsub.f32 %v1683, %v2649
        %v2902 = vsub.f32 %v1686, %v2650
        %v2903 = vsub.f32 %v1689, %v2651
        %v2904 = vsub.f32 %v1692, %v2652
        %v2905 = vsub.f32 %v1695, %v2653
        %v2906 = vsub.f32 %v1698, %v2654
        %v2907 = vsub.f32 %v1701, %v2655
        %v2908 = vsub.f32 %v1704, %v2656
        %v2909 = vsub.f32 %v1707, %v2657
        %v2910 = vsub.f32 %v1710, %v2658
        %v2911 = vsub.f32 %v1713, %v2659
        %v2912 = vsub.f32 %v1716, %v2660
        %v2913 = vsub.f32 %v1719, %v2661
        %v2914 = vsub.f32 %v1722, %v2662
        %v2915 = vsub.f32 %v1725, %v2663
        %v2916 = vsub.f32 %v1728, %v2664
        %v2917 = vsub.f32 %v1731, %v2665
        %v2918 = vsub.f32 %v1734, %v2666
        %v2919 = vsub.f32 %v1737, %v2667
        %v2920 = vsub.f32 %v1740, %v2668
        %v2921 = vsub.f32 %v1743, %v2669
        %v2922 = vsub.f32 %v1746, %v2670
        %v2923 = vsub.f32 %v1749, %v2671
        %v2924 = vsub.f32 %v1752, %v2672
        %v2925 = vsub.f32 %v1755, %v2673
        %v2926 = vsub.f32 %v1758, %v2674
        %v2927 = vsub.f32 %v1761, %v2675
        %v2928 = vsub.f32 %v1764, %v2676
        %v2929 = vsub.f32 %v1767, %v2677
        %v2930 = vsub.f32 %v1770, %v2678
        %v2931 = vsub.f32 %v1773, %v2679
        %v2932 = vsub.f32 %v1776, %v2680
        %v2933 = vsub.f32 %v1779, %v2681
        %v2934 = vsub.f32 %v1782, %v2682
        %v2935 = vsub.f32 %v1785, %v2683
        %v2936 = vsub.f32 %v1788, %v2684
        %v2937 = vsub.f32 %v1791, %v2685
        %v2938 = vsub.f32 %v1794, %v2686
        %v2939 = vsub.f32 %v1797, %v2687
        %v2940 = vsub.f32 %v1800, %v2688
        %v2941 = vsub.f32 %v1803, %v2689
        %v2942 = vsub.f32 %v1806, %v2690
        %v2943 = vmul.f32 %v2880, 1.442695
        %v2944 = vpow.pop %v2943
        %v2945 = vmul.f32 %v2881, 1.442695
        %v2946 = vpow.pop %v2945
        %v2947 = vmul.f32 %v2882, 1.442695
        %v2948 = vpow.pop %v2947
        %v2949 = vmul.f32 %v2883, 1.442695
        %v2950 = vpow.pop %v2949
        %v2951 = vmul.f32 %v2884, 1.442695
        %v2952 = vpow.pop %v2951
        %v2953 = vmul.f32 %v2885, 1.442695
        %v2954 = vpow.pop %v2953
        %v2955 = vmul.f32 %v2886, 1.442695
        %v2956 = vpow.pop %v2955
        %v2957 = vmul.f32 %v2887, 1.442695
        %v2958 = vpow.pop %v2957
        %v2959 = vmul.f32 %v2888, 1.442695
        %v2960 = vpow.pop %v2959
        %v2961 = vmul.f32 %v2889, 1.442695
        %v2962 = vpow.pop %v2961
        %v2963 = vmul.f32 %v2890, 1.442695
        %v2964 = vpow.pop %v2963
        %v2965 = vmul.f32 %v2891, 1.442695
        %v2966 = vpow.pop %v2965
        %v2967 = vmul.f32 %v2892, 1.442695
        %v2968 = vpow.pop %v2967
        %v2969 = vmul.f32 %v2893, 1.442695
        %v2970 = vpow.pop %v2969
        %v2971 = vmul.f32 %v2894, 1.442695
        %v2972 = vpow.pop %v2971
        %v2973 = vmul.f32 %v2895, 1.442695
        %v2974 = vpow.pop %v2973
        %v2975 = vmul.f32 %v2896, 1.442695
        %v2976 = vpow.pop %v2975
        %v2977 = vmul.f32 %v2897, 1.442695
        %v2978 = vpow.pop %v2977
        %v2979 = vmul.f32 %v2898, 1.442695
        %v2980 = vpow.pop %v2979
        %v2981 = vmul.f32 %v2899, 1.442695
        %v2982 = vpow.pop %v2981
        %v2983 = vmul.f32 %v2900, 1.442695
        %v2984 = vpow.pop %v2983
        %v2985 = vmul.f32 %v2901, 1.442695
        %v2986 = vpow.pop %v2985
        %v2987 = vmul.f32 %v2902, 1.442695
        %v2988 = vpow.pop %v2987
        %v2989 = vmul.f32 %v2903, 1.442695
        %v2990 = vpow.pop %v2989
        %v2991 = vmul.f32 %v2904, 1.442695
        %v2992 = vpow.pop %v2991
        %v2993 = vmul.f32 %v2905, 1.442695
        %v2994 = vpow.pop %v2993
        %v2995 = vmul.f32 %v2906, 1.442695
        %v2996 = vpow.pop %v2995
        %v2997 = vmul.f32 %v2907, 1.442695
        %v2998 = vpow.pop %v2997
        %v2999 = vmul.f32 %v2908, 1.442695
        %v3000 = vpow.pop %v2999
        %v3001 = vmul.f32 %v2909, 1.442695
        %v3002 = vpow.pop %v3001
        %v3003 = vmul.f32 %v2910, 1.442695
        %v3004 = vpow.pop %v3003
        %v3005 = vmul.f32 %v2911, 1.442695
        %v3006 = vpow.pop %v3005
        %v3007 = vmul.f32 %v2912, 1.442695
        %v3008 = vpow.pop %v3007
        %v3009 = vmul.f32 %v2913, 1.442695
        %v3010 = vpow.pop %v3009
        %v3011 = vmul.f32 %v2914, 1.442695
        %v3012 = vpow.pop %v3011
        %v3013 = vmul.f32 %v2915, 1.442695
        %v3014 = vpow.pop %v3013
        %v3015 = vmul.f32 %v2916, 1.442695
        %v3016 = vpow.pop %v3015
        %v3017 = vmul.f32 %v2917, 1.442695
        %v3018 = vpow.pop %v3017
        %v3019 = vmul.f32 %v2918, 1.442695
        %v3020 = vpow.pop %v3019
        %v3021 = vmul.f32 %v2919, 1.442695
        %v3022 = vpow.pop %v3021
        %v3023 = vmul.f32 %v2920, 1.442695
        %v3024 = vpow.pop %v3023
        %v3025 = vmul.f32 %v2921, 1.442695
        %v3026 = vpow.pop %v3025
        %v3027 = vmul.f32 %v2922, 1.442695
        %v3028 = vpow.pop %v3027
        %v3029 = vmul.f32 %v2923, 1.442695
        %v3030 = vpow.pop %v3029
        %v3031 = vmul.f32 %v2924, 1.442695
        %v3032 = vpow.pop %v3031
        %v3033 = vmul.f32 %v2925, 1.442695
        %v3034 = vpow.pop %v3033
        %v3035 = vmul.f32 %v2926, 1.442695
        %v3036 = vpow.pop %v3035
        %v3037 = vmul.f32 %v2927, 1.442695
        %v3038 = vpow.pop %v3037
        %v3039 = vmul.f32 %v2928, 1.442695
        %v3040 = vpow.pop %v3039
        %v3041 = vmul.f32 %v2929, 1.442695
        %v3042 = vpow.pop %v3041
        %v3043 = vmul.f32 %v2930, 1.442695
        %v3044 = vpow.pop %v3043
        %v3045 = vmul.f32 %v2931, 1.442695
        %v3046 = vpow.pop %v3045
        %v3047 = vmul.f32 %v2932, 1.442695
        %v3048 = vpow.pop %v3047
        %v3049 = vmul.f32 %v2933, 1.442695
        %v3050 = vpow.pop %v3049
        %v3051 = vmul.f32 %v2934, 1.442695
        %v3052 = vpow.pop %v3051
        %v3053 = vmul.f32 %v2935, 1.442695
        %v3054 = vpow.pop %v3053
        %v3055 = vmul.f32 %v2936, 1.442695
        %v3056 = vpow.pop %v3055
        %v3057 = vmul.f32 %v2937, 1.442695
        %v3058 = vpow.pop %v3057
        %v3059 = vmul.f32 %v2938, 1.442695
        %v3060 = vpow.pop %v3059
        %v3061 = vmul.f32 %v2939, 1.442695
        %v3062 = vpow.pop %v3061
        %v3063 = vmul.f32 %v2940, 1.442695
        %v3064 = vpow.pop %v3063
        %v3065 = vmul.f32 %v2941, 1.442695
        %v3066 = vpow.pop %v3065
        %v3067 = vmul.f32 %v2942, 1.442695
        %v3068 = vpow.pop %v3067
        %v3069 = vsub.f32 %v2378, %v2628
        %v3070 = vsub.f32 %v2381, %v2629
        %v3071 = vsub.f32 %v2384, %v2630
        %v3072 = vsub.f32 %v2387, %v2631
        %v3073 = vsub.f32 %v2390, %v2632
        %v3074 = vsub.f32 %v2393, %v2633
        %v3075 = vsub.f32 %v2396, %v2634
        %v3076 = vsub.f32 %v2399, %v2635
        %v3077 = vsub.f32 %v2402, %v2636
        %v3078 = vsub.f32 %v2405, %v2637
        %v3079 = vsub.f32 %v2408, %v2638
        %v3080 = vsub.f32 %v2411, %v2639
        %v3081 = vsub.f32 %v2414, %v2640
        %v3082 = vsub.f32 %v2417, %v2641
        %v3083 = vsub.f32 %v2420, %v2642
        %v3084 = vsub.f32 %v2423, %v2643
        %v3085 = vsub.f32 %v2426, %v2644
        %v3086 = vsub.f32 %v2429, %v2645
        %v3087 = vsub.f32 %v2432, %v2646
        %v3088 = vsub.f32 %v2435, %v2647
        %v3089 = vsub.f32 %v2438, %v2648
        %v3090 = vsub.f32 %v2441, %v2649
        %v3091 = vsub.f32 %v2444, %v2650
        %v3092 = vsub.f32 %v2447, %v2651
        %v3093 = vsub.f32 %v2450, %v2652
        %v3094 = vsub.f32 %v2453, %v2653
        %v3095 = vsub.f32 %v2456, %v2654
        %v3096 = vsub.f32 %v2459, %v2655
        %v3097 = vsub.f32 %v2462, %v2656
        %v3098 = vsub.f32 %v2465, %v2657
        %v3099 = vsub.f32 %v2468, %v2658
        %v3100 = vsub.f32 %v2471, %v2659
        %v3101 = vsub.f32 %v2474, %v2660
        %v3102 = vsub.f32 %v2477, %v2661
        %v3103 = vsub.f32 %v2480, %v2662
        %v3104 = vsub.f32 %v2483, %v2663
        %v3105 = vsub.f32 %v2486, %v2664
        %v3106 = vsub.f32 %v2489, %v2665
        %v3107 = vsub.f32 %v2492, %v2666
        %v3108 = vsub.f32 %v2495, %v2667
        %v3109 = vsub.f32 %v2498, %v2668
        %v3110 = vsub.f32 %v2501, %v2669
        %v3111 = vsub.f32 %v2504, %v2670
        %v3112 = vsub.f32 %v2507, %v2671
        %v3113 = vsub.f32 %v2510, %v2672
        %v3114 = vsub.f32 %v2513, %v2673
        %v3115 = vsub.f32 %v2516, %v2674
        %v3116 = vsub.f32 %v2519, %v2675
        %v3117 = vsub.f32 %v2522, %v2676
        %v3118 = vsub.f32 %v2525, %v2677
        %v3119 = vsub.f32 %v2528, %v2678
        %v3120 = vsub.f32 %v2531, %v2679
        %v3121 = vsub.f32 %v2534, %v2680
        %v3122 = vsub.f32 %v2537, %v2681
        %v3123 = vsub.f32 %v2540, %v2682
        %v3124 = vsub.f32 %v2543, %v2683
        %v3125 = vsub.f32 %v2546, %v2684
        %v3126 = vsub.f32 %v2549, %v2685
        %v3127 = vsub.f32 %v2552, %v2686
        %v3128 = vsub.f32 %v2555, %v2687
        %v3129 = vsub.f32 %v2558, %v2688
        %v3130 = vsub.f32 %v2561, %v2689
        %v3131 = vsub.f32 %v2564, %v2690
        %v3132 = vmul.f32 %v3069, 1.442695
        %v3133 = vpow.pop %v3132
        %v3134 = vmul.f32 %v3070, 1.442695
        %v3135 = vpow.pop %v3134
        %v3136 = vmul.f32 %v3071, 1.442695
        %v3137 = vpow.pop %v3136
        %v3138 = vmul.f32 %v3072, 1.442695
        %v3139 = vpow.pop %v3138
        %v3140 = vmul.f32 %v3073, 1.442695
        %v3141 = vpow.pop %v3140
        %v3142 = vmul.f32 %v3074, 1.442695
        %v3143 = vpow.pop %v3142
        %v3144 = vmul.f32 %v3075, 1.442695
        %v3145 = vpow.pop %v3144
        %v3146 = vmul.f32 %v3076, 1.442695
        %v3147 = vpow.pop %v3146
        %v3148 = vmul.f32 %v3077, 1.442695
        %v3149 = vpow.pop %v3148
        %v3150 = vmul.f32 %v3078, 1.442695
        %v3151 = vpow.pop %v3150
        %v3152 = vmul.f32 %v3079, 1.442695
        %v3153 = vpow.pop %v3152
        %v3154 = vmul.f32 %v3080, 1.442695
        %v3155 = vpow.pop %v3154
        %v3156 = vmul.f32 %v3081, 1.442695
        %v3157 = vpow.pop %v3156
        %v3158 = vmul.f32 %v3082, 1.442695
        %v3159 = vpow.pop %v3158
        %v3160 = vmul.f32 %v3083, 1.442695
        %v3161 = vpow.pop %v3160
        %v3162 = vmul.f32 %v3084, 1.442695
        %v3163 = vpow.pop %v3162
        %v3164 = vmul.f32 %v3085, 1.442695
        %v3165 = vpow.pop %v3164
        %v3166 = vmul.f32 %v3086, 1.442695
        %v3167 = vpow.pop %v3166
        %v3168 = vmul.f32 %v3087, 1.442695
        %v3169 = vpow.pop %v3168
        %v3170 = vmul.f32 %v3088, 1.442695
        %v3171 = vpow.pop %v3170
        %v3172 = vmul.f32 %v3089, 1.442695
        %v3173 = vpow.pop %v3172
        %v3174 = vmul.f32 %v3090, 1.442695
        %v3175 = vpow.pop %v3174
        %v3176 = vmul.f32 %v3091, 1.442695
        %v3177 = vpow.pop %v3176
        %v3178 = vmul.f32 %v3092, 1.442695
        %v3179 = vpow.pop %v3178
        %v3180 = vmul.f32 %v3093, 1.442695
        %v3181 = vpow.pop %v3180
        %v3182 = vmul.f32 %v3094, 1.442695
        %v3183 = vpow.pop %v3182
        %v3184 = vmul.f32 %v3095, 1.442695
        %v3185 = vpow.pop %v3184
        %v3186 = vmul.f32 %v3096, 1.442695
        %v3187 = vpow.pop %v3186
        %v3188 = vmul.f32 %v3097, 1.442695
        %v3189 = vpow.pop %v3188
        %v3190 = vmul.f32 %v3098, 1.442695
        %v3191 = vpow.pop %v3190
        %v3192 = vmul.f32 %v3099, 1.442695
        %v3193 = vpow.pop %v3192
        %v3194 = vmul.f32 %v3100, 1.442695
        %v3195 = vpow.pop %v3194
        %v3196 = vmul.f32 %v3101, 1.442695
        %v3197 = vpow.pop %v3196
        %v3198 = vmul.f32 %v3102, 1.442695
        %v3199 = vpow.pop %v3198
        %v3200 = vmul.f32 %v3103, 1.442695
        %v3201 = vpow.pop %v3200
        %v3202 = vmul.f32 %v3104, 1.442695
        %v3203 = vpow.pop %v3202
        %v3204 = vmul.f32 %v3105, 1.442695
        %v3205 = vpow.pop %v3204
        %v3206 = vmul.f32 %v3106, 1.442695
        %v3207 = vpow.pop %v3206
        %v3208 = vmul.f32 %v3107, 1.442695
        %v3209 = vpow.pop %v3208
        %v3210 = vmul.f32 %v3108, 1.442695
        %v3211 = vpow.pop %v3210
        %v3212 = vmul.f32 %v3109, 1.442695
        %v3213 = vpow.pop %v3212
        %v3214 = vmul.f32 %v3110, 1.442695
        %v3215 = vpow.pop %v3214
        %v3216 = vmul.f32 %v3111, 1.442695
        %v3217 = vpow.pop %v3216
        %v3218 = vmul.f32 %v3112, 1.442695
        %v3219 = vpow.pop %v3218
        %v3220 = vmul.f32 %v3113, 1.442695
        %v3221 = vpow.pop %v3220
        %v3222 = vmul.f32 %v3114, 1.442695
        %v3223 = vpow.pop %v3222
        %v3224 = vmul.f32 %v3115, 1.442695
        %v3225 = vpow.pop %v3224
        %v3226 = vmul.f32 %v3116, 1.442695
        %v3227 = vpow.pop %v3226
        %v3228 = vmul.f32 %v3117, 1.442695
        %v3229 = vpow.pop %v3228
        %v3230 = vmul.f32 %v3118, 1.442695
        %v3231 = vpow.pop %v3230
        %v3232 = vmul.f32 %v3119, 1.442695
        %v3233 = vpow.pop %v3232
        %v3234 = vmul.f32 %v3120, 1.442695
        %v3235 = vpow.pop %v3234
        %v3236 = vmul.f32 %v3121, 1.442695
        %v3237 = vpow.pop %v3236
        %v3238 = vmul.f32 %v3122, 1.442695
        %v3239 = vpow.pop %v3238
        %v3240 = vmul.f32 %v3123, 1.442695
        %v3241 = vpow.pop %v3240
        %v3242 = vmul.f32 %v3124, 1.442695
        %v3243 = vpow.pop %v3242
        %v3244 = vmul.f32 %v3125, 1.442695
        %v3245 = vpow.pop %v3244
        %v3246 = vmul.f32 %v3126, 1.442695
        %v3247 = vpow.pop %v3246
        %v3248 = vmul.f32 %v3127, 1.442695
        %v3249 = vpow.pop %v3248
        %v3250 = vmul.f32 %v3128, 1.442695
        %v3251 = vpow.pop %v3250
        %v3252 = vmul.f32 %v3129, 1.442695
        %v3253 = vpow.pop %v3252
        %v3254 = vmul.f32 %v3130, 1.442695
        %v3255 = vpow.pop %v3254
        %v3256 = vmul.f32 %v3131, 1.442695
        %v3257 = vpow.pop %v3256
        %v3258 = vadd.f32 %v2755, %v2944
        %v3259 = vadd.f32 %v2757, %v2946
        %v3260 = vadd.f32 %v2759, %v2948
        %v3261 = vadd.f32 %v2761, %v2950
        %v3262 = vadd.f32 %v2763, %v2952
        %v3263 = vadd.f32 %v2765, %v2954
        %v3264 = vadd.f32 %v2767, %v2956
        %v3265 = vadd.f32 %v2769, %v2958
        %v3266 = vadd.f32 %v2771, %v2960
        %v3267 = vadd.f32 %v2773, %v2962
        %v3268 = vadd.f32 %v2775, %v2964
        %v3269 = vadd.f32 %v2777, %v2966
        %v3270 = vadd.f32 %v2779, %v2968
        %v3271 = vadd.f32 %v2781, %v2970
        %v3272 = vadd.f32 %v2783, %v2972
        %v3273 = vadd.f32 %v2785, %v2974
        %v3274 = vadd.f32 %v2787, %v2976
        %v3275 = vadd.f32 %v2789, %v2978
        %v3276 = vadd.f32 %v2791, %v2980
        %v3277 = vadd.f32 %v2793, %v2982
        %v3278 = vadd.f32 %v2795, %v2984
        %v3279 = vadd.f32 %v2797, %v2986
        %v3280 = vadd.f32 %v2799, %v2988
        %v3281 = vadd.f32 %v2801, %v2990
        %v3282 = vadd.f32 %v2803, %v2992
        %v3283 = vadd.f32 %v2805, %v2994
        %v3284 = vadd.f32 %v2807, %v2996
        %v3285 = vadd.f32 %v2809, %v2998
        %v3286 = vadd.f32 %v2811, %v3000
        %v3287 = vadd.f32 %v2813, %v3002
        %v3288 = vadd.f32 %v2815, %v3004
        %v3289 = vadd.f32 %v2817, %v3006
        %v3290 = vadd.f32 %v2819, %v3008
        %v3291 = vadd.f32 %v2821, %v3010
        %v3292 = vadd.f32 %v2823, %v3012
        %v3293 = vadd.f32 %v2825, %v3014
        %v3294 = vadd.f32 %v2827, %v3016
        %v3295 = vadd.f32 %v2829, %v3018
        %v3296 = vadd.f32 %v2831, %v3020
        %v3297 = vadd.f32 %v2833, %v3022
        %v3298 = vadd.f32 %v2835, %v3024
        %v3299 = vadd.f32 %v2837, %v3026
        %v3300 = vadd.f32 %v2839, %v3028
        %v3301 = vadd.f32 %v2841, %v3030
        %v3302 = vadd.f32 %v2843, %v3032
        %v3303 = vadd.f32 %v2845, %v3034
        %v3304 = vadd.f32 %v2847, %v3036
        %v3305 = vadd.f32 %v2849, %v3038
        %v3306 = vadd.f32 %v2851, %v3040
        %v3307 = vadd.f32 %v2853, %v3042
        %v3308 = vadd.f32 %v2855, %v3044
        %v3309 = vadd.f32 %v2857, %v3046
        %v3310 = vadd.f32 %v2859, %v3048
        %v3311 = vadd.f32 %v2861, %v3050
        %v3312 = vadd.f32 %v2863, %v3052
        %v3313 = vadd.f32 %v2865, %v3054
        %v3314 = vadd.f32 %v2867, %v3056
        %v3315 = vadd.f32 %v2869, %v3058
        %v3316 = vadd.f32 %v2871, %v3060
        %v3317 = vadd.f32 %v2873, %v3062
        %v3318 = vadd.f32 %v2875, %v3064
        %v3319 = vadd.f32 %v2877, %v3066
        %v3320 = vadd.f32 %v2879, %v3068
        %v3321 = vadd.f32 %v3258, %v3133
        %v3322 = vadd.f32 %v3259, %v3135
        %v3323 = vadd.f32 %v3260, %v3137
        %v3324 = vadd.f32 %v3261, %v3139
        %v3325 = vadd.f32 %v3262, %v3141
        %v3326 = vadd.f32 %v3263, %v3143
        %v3327 = vadd.f32 %v3264, %v3145
        %v3328 = vadd.f32 %v3265, %v3147
        %v3329 = vadd.f32 %v3266, %v3149
        %v3330 = vadd.f32 %v3267, %v3151
        %v3331 = vadd.f32 %v3268, %v3153
        %v3332 = vadd.f32 %v3269, %v3155
        %v3333 = vadd.f32 %v3270, %v3157
        %v3334 = vadd.f32 %v3271, %v3159
        %v3335 = vadd.f32 %v3272, %v3161
        %v3336 = vadd.f32 %v3273, %v3163
        %v3337 = vadd.f32 %v3274, %v3165
        %v3338 = vadd.f32 %v3275, %v3167
        %v3339 = vadd.f32 %v3276, %v3169
        %v3340 = vadd.f32 %v3277, %v3171
        %v3341 = vadd.f32 %v3278, %v3173
        %v3342 = vadd.f32 %v3279, %v3175
        %v3343 = vadd.f32 %v3280, %v3177
        %v3344 = vadd.f32 %v3281, %v3179
        %v3345 = vadd.f32 %v3282, %v3181
        %v3346 = vadd.f32 %v3283, %v3183
        %v3347 = vadd.f32 %v3284, %v3185
        %v3348 = vadd.f32 %v3285, %v3187
        %v3349 = vadd.f32 %v3286, %v3189
        %v3350 = vadd.f32 %v3287, %v3191
        %v3351 = vadd.f32 %v3288, %v3193
        %v3352 = vadd.f32 %v3289, %v3195
        %v3353 = vadd.f32 %v3290, %v3197
        %v3354 = vadd.f32 %v3291, %v3199
        %v3355 = vadd.f32 %v3292, %v3201
        %v3356 = vadd.f32 %v3293, %v3203
        %v3357 = vadd.f32 %v3294, %v3205
        %v3358 = vadd.f32 %v3295, %v3207
        %v3359 = vadd.f32 %v3296, %v3209
        %v3360 = vadd.f32 %v3297, %v3211
        %v3361 = vadd.f32 %v3298, %v3213
        %v3362 = vadd.f32 %v3299, %v3215
        %v3363 = vadd.f32 %v3300, %v3217
        %v3364 = vadd.f32 %v3301, %v3219
        %v3365 = vadd.f32 %v3302, %v3221
        %v3366 = vadd.f32 %v3303, %v3223
        %v3367 = vadd.f32 %v3304, %v3225
        %v3368 = vadd.f32 %v3305, %v3227
        %v3369 = vadd.f32 %v3306, %v3229
        %v3370 = vadd.f32 %v3307, %v3231
        %v3371 = vadd.f32 %v3308, %v3233
        %v3372 = vadd.f32 %v3309, %v3235
        %v3373 = vadd.f32 %v3310, %v3237
        %v3374 = vadd.f32 %v3311, %v3239
        %v3375 = vadd.f32 %v3312, %v3241
        %v3376 = vadd.f32 %v3313, %v3243
        %v3377 = vadd.f32 %v3314, %v3245
        %v3378 = vadd.f32 %v3315, %v3247
        %v3379 = vadd.f32 %v3316, %v3249
        %v3380 = vadd.f32 %v3317, %v3251
        %v3381 = vadd.f32 %v3318, %v3253
        %v3382 = vadd.f32 %v3319, %v3255
        %v3383 = vadd.f32 %v3320, %v3257
        %v3384 = vrcp.pop %v3321
        %v3385 = vrcp.pop %v3322
        %v3386 = vrcp.pop %v3323
        %v3387 = vrcp.pop %v3324
        %v3388 = vrcp.pop %v3325
        %v3389 = vrcp.pop %v3326
        %v3390 = vrcp.pop %v3327
        %v3391 = vrcp.pop %v3328
        %v3392 = vrcp.pop %v3329
        %v3393 = vrcp.pop %v3330
        %v3394 = vrcp.pop %v3331
        %v3395 = vrcp.pop %v3332
        %v3396 = vrcp.pop %v3333
        %v3397 = vrcp.pop %v3334
        %v3398 = vrcp.pop %v3335
        %v3399 = vrcp.pop %v3336
        %v3400 = vrcp.pop %v3337
        %v3401 = vrcp.pop %v3338
        %v3402 = vrcp.pop %v3339
        %v3403 = vrcp.pop %v3340
        %v3404 = vrcp.pop %v3341
        %v3405 = vrcp.pop %v3342
        %v3406 = vrcp.pop %v3343
        %v3407 = vrcp.pop %v3344
        %v3408 = vrcp.pop %v3345
        %v3409 = vrcp.pop %v3346
        %v3410 = vrcp.pop %v3347
        %v3411 = vrcp.pop %v3348
        %v3412 = vrcp.pop %v3349
        %v3413 = vrcp.pop %v3350
        %v3414 = vrcp.pop %v3351
        %v3415 = vrcp.pop %v3352
        %v3416 = vrcp.pop %v3353
        %v3417 = vrcp.pop %v3354
        %v3418 = vrcp.pop %v3355
        %v3419 = vrcp.pop %v3356
        %v3420 = vrcp.pop %v3357
        %v3421 = vrcp.pop %v3358
        %v3422 = vrcp.pop %v3359
        %v3423 = vrcp.pop %v3360
        %v3424 = vrcp.pop %v3361
        %v3425 = vrcp.pop %v3362
        %v3426 = vrcp.pop %v3363
        %v3427 = vrcp.pop %v3364
        %v3428 = vrcp.pop %v3365
        %v3429 = vrcp.pop %v3366
        %v3430 = vrcp.pop %v3367
        %v3431 = vrcp.pop %v3368
        %v3432 = vrcp.pop %v3369
        %v3433 = vrcp.pop %v3370
        %v3434 = vrcp.pop %v3371
        %v3435 = vrcp.pop %v3372
        %v3436 = vrcp.pop %v3373
        %v3437 = vrcp.pop %v3374
        %v3438 = vrcp.pop %v3375
        %v3439 = vrcp.pop %v3376
        %v3440 = vrcp.pop %v3377
        %v3441 = vrcp.pop %v3378
        %v3442 = vrcp.pop %v3379
        %v3443 = vrcp.pop %v3380
        %v3444 = vrcp.pop %v3381
        %v3445 = vrcp.pop %v3382
        %v3446 = vrcp.pop %v3383
        %v3447 = vmul.f32 %v2755, %v3384
        %v3448 = vmul.f32 %v2757, %v3385
        %v3449 = vmul.f32 %v2759, %v3386
        %v3450 = vmul.f32 %v2761, %v3387
        %v3451 = vmul.f32 %v2763, %v3388
        %v3452 = vmul.f32 %v2765, %v3389
        %v3453 = vmul.f32 %v2767, %v3390
        %v3454 = vmul.f32 %v2769, %v3391
        %v3455 = vmul.f32 %v2771, %v3392
        %v3456 = vmul.f32 %v2773, %v3393
        %v3457 = vmul.f32 %v2775, %v3394
        %v3458 = vmul.f32 %v2777, %v3395
        %v3459 = vmul.f32 %v2779, %v3396
        %v3460 = vmul.f32 %v2781, %v3397
        %v3461 = vmul.f32 %v2783, %v3398
        %v3462 = vmul.f32 %v2785, %v3399
        %v3463 = vmul.f32 %v2787, %v3400
        %v3464 = vmul.f32 %v2789, %v3401
        %v3465 = vmul.f32 %v2791, %v3402
        %v3466 = vmul.f32 %v2793, %v3403
        %v3467 = vmul.f32 %v2795, %v3404
        %v3468 = vmul.f32 %v2797, %v3405
        %v3469 = vmul.f32 %v2799, %v3406
        %v3470 = vmul.f32 %v2801, %v3407
        %v3471 = vmul.f32 %v2803, %v3408
        %v3472 = vmul.f32 %v2805, %v3409
        %v3473 = vmul.f32 %v2807, %v3410
        %v3474 = vmul.f32 %v2809, %v3411
        %v3475 = vmul.f32 %v2811, %v3412
        %v3476 = vmul.f32 %v2813, %v3413
        %v3477 = vmul.f32 %v2815, %v3414
        %v3478 = vmul.f32 %v2817, %v3415
        %v3479 = vmul.f32 %v2819, %v3416
        %v3480 = vmul.f32 %v2821, %v3417
        %v3481 = vmul.f32 %v2823, %v3418
        %v3482 = vmul.f32 %v2825, %v3419
        %v3483 = vmul.f32 %v2827, %v3420
        %v3484 = vmul.f32 %v2829, %v3421
        %v3485 = vmul.f32 %v2831, %v3422
        %v3486 = vmul.f32 %v2833, %v3423
        %v3487 = vmul.f32 %v2835, %v3424
        %v3488 = vmul.f32 %v2837, %v3425
        %v3489 = vmul.f32 %v2839, %v3426
        %v3490 = vmul.f32 %v2841, %v3427
        %v3491 = vmul.f32 %v2843, %v3428
        %v3492 = vmul.f32 %v2845, %v3429
        %v3493 = vmul.f32 %v2847, %v3430
        %v3494 = vmul.f32 %v2849, %v3431
        %v3495 = vmul.f32 %v2851, %v3432
        %v3496 = vmul.f32 %v2853, %v3433
        %v3497 = vmul.f32 %v2855, %v3434
        %v3498 = vmul.f32 %v2857, %v3435
        %v3499 = vmul.f32 %v2859, %v3436
        %v3500 = vmul.f32 %v2861, %v3437
        %v3501 = vmul.f32 %v2863, %v3438
        %v3502 = vmul.f32 %v2865, %v3439
        %v3503 = vmul.f32 %v2867, %v3440
        %v3504 = vmul.f32 %v2869, %v3441
        %v3505 = vmul.f32 %v2871, %v3442
        %v3506 = vmul.f32 %v2873, %v3443
        %v3507 = vmul.f32 %v2875, %v3444
        %v3508 = vmul.f32 %v2877, %v3445
        %v3509 = vmul.f32 %v2879, %v3446
        %v3510 = vmul.f32 %v3447, %v278
        %v3511 = vmul.f32 %v3448, %v279
        %v3512 = vmul.f32 %v3449, %v280
        %v3513 = vmul.f32 %v3450, %v281
        %v3514 = vmul.f32 %v3451, %v282
        %v3515 = vmul.f32 %v3452, %v283
        %v3516 = vmul.f32 %v3453, %v284
        %v3517 = vmul.f32 %v3454, %v285
        %v3518 = vmul.f32 %v3455, %v286
        %v3519 = vmul.f32 %v3456, %v287
        %v3520 = vmul.f32 %v3457, %v288
        %v3521 = vmul.f32 %v3458, %v289
        %v3522 = vmul.f32 %v3459, %v290
        %v3523 = vmul.f32 %v3460, %v291
        %v3524 = vmul.f32 %v3461, %v292
        %v3525 = vmul.f32 %v3462, %v293
        %v3526 = vmul.f32 %v3463, %v294
        %v3527 = vmul.f32 %v3464, %v295
        %v3528 = vmul.f32 %v3465, %v296
        %v3529 = vmul.f32 %v3466, %v297
        %v3530 = vmul.f32 %v3467, %v298
        %v3531 = vmul.f32 %v3468, %v299
        %v3532 = vmul.f32 %v3469, %v300
        %v3533 = vmul.f32 %v3470, %v301
        %v3534 = vmul.f32 %v3471, %v302
        %v3535 = vmul.f32 %v3472, %v303
        %v3536 = vmul.f32 %v3473, %v304
        %v3537 = vmul.f32 %v3474, %v305
        %v3538 = vmul.f32 %v3475, %v306
        %v3539 = vmul.f32 %v3476, %v307
        %v3540 = vmul.f32 %v3477, %v308
        %v3541 = vmul.f32 %v3478, %v309
        %v3542 = vmul.f32 %v3479, %v310
        %v3543 = vmul.f32 %v3480, %v311
        %v3544 = vmul.f32 %v3481, %v312
        %v3545 = vmul.f32 %v3482, %v313
        %v3546 = vmul.f32 %v3483, %v314
        %v3547 = vmul.f32 %v3484, %v315
        %v3548 = vmul.f32 %v3485, %v316
        %v3549 = vmul.f32 %v3486, %v317
        %v3550 = vmul.f32 %v3487, %v318
        %v3551 = vmul.f32 %v3488, %v319
        %v3552 = vmul.f32 %v3489, %v320
        %v3553 = vmul.f32 %v3490, %v321
        %v3554 = vmul.f32 %v3491, %v322
        %v3555 = vmul.f32 %v3492, %v323
        %v3556 = vmul.f32 %v3493, %v324
        %v3557 = vmul.f32 %v3494, %v325
        %v3558 = vmul.f32 %v3495, %v326
        %v3559 = vmul.f32 %v3496, %v327
        %v3560 = vmul.f32 %v3497, %v328
        %v3561 = vmul.f32 %v3498, %v329
        %v3562 = vmul.f32 %v3499, %v330
        %v3563 = vmul.f32 %v3500, %v331
        %v3564 = vmul.f32 %v3501, %v332
        %v3565 = vmul.f32 %v3502, %v333
        %v3566 = vmul.f32 %v3503, %v334
        %v3567 = vmul.f32 %v3504, %v335
        %v3568 = vmul.f32 %v3505, %v336
        %v3569 = vmul.f32 %v3506, %v337
        %v3570 = vmul.f32 %v3507, %v338
        %v3571 = vmul.f32 %v3508, %v339
        %v3572 = vmul.f32 %v3509, %v340
        %v3573 = vmul.f32 %v2944, %v3384
        %v3574 = vmul.f32 %v2946, %v3385
        %v3575 = vmul.f32 %v2948, %v3386
        %v3576 = vmul.f32 %v2950, %v3387
        %v3577 = vmul.f32 %v2952, %v3388
        %v3578 = vmul.f32 %v2954, %v3389
        %v3579 = vmul.f32 %v2956, %v3390
        %v3580 = vmul.f32 %v2958, %v3391
        %v3581 = vmul.f32 %v2960, %v3392
        %v3582 = vmul.f32 %v2962, %v3393
        %v3583 = vmul.f32 %v2964, %v3394
        %v3584 = vmul.f32 %v2966, %v3395
        %v3585 = vmul.f32 %v2968, %v3396
        %v3586 = vmul.f32 %v2970, %v3397
        %v3587 = vmul.f32 %v2972, %v3398
        %v3588 = vmul.f32 %v2974, %v3399
        %v3589 = vmul.f32 %v2976, %v3400
        %v3590 = vmul.f32 %v2978, %v3401
        %v3591 = vmul.f32 %v2980, %v3402
        %v3592 = vmul.f32 %v2982, %v3403
        %v3593 = vmul.f32 %v2984, %v3404
        %v3594 = vmul.f32 %v2986, %v3405
        %v3595 = vmul.f32 %v2988, %v3406
        %v3596 = vmul.f32 %v2990, %v3407
        %v3597 = vmul.f32 %v2992, %v3408
        %v3598 = vmul.f32 %v2994, %v3409
        %v3599 = vmul.f32 %v2996, %v3410
        %v3600 = vmul.f32 %v2998, %v3411
        %v3601 = vmul.f32 %v3000, %v3412
        %v3602 = vmul.f32 %v3002, %v3413
        %v3603 = vmul.f32 %v3004, %v3414
        %v3604 = vmul.f32 %v3006, %v3415
        %v3605 = vmul.f32 %v3008, %v3416
        %v3606 = vmul.f32 %v3010, %v3417
        %v3607 = vmul.f32 %v3012, %v3418
        %v3608 = vmul.f32 %v3014, %v3419
        %v3609 = vmul.f32 %v3016, %v3420
        %v3610 = vmul.f32 %v3018, %v3421
        %v3611 = vmul.f32 %v3020, %v3422
        %v3612 = vmul.f32 %v3022, %v3423
        %v3613 = vmul.f32 %v3024, %v3424
        %v3614 = vmul.f32 %v3026, %v3425
        %v3615 = vmul.f32 %v3028, %v3426
        %v3616 = vmul.f32 %v3030, %v3427
        %v3617 = vmul.f32 %v3032, %v3428
        %v3618 = vmul.f32 %v3034, %v3429
        %v3619 = vmul.f32 %v3036, %v3430
        %v3620 = vmul.f32 %v3038, %v3431
        %v3621 = vmul.f32 %v3040, %v3432
        %v3622 = vmul.f32 %v3042, %v3433
        %v3623 = vmul.f32 %v3044, %v3434
        %v3624 = vmul.f32 %v3046, %v3435
        %v3625 = vmul.f32 %v3048, %v3436
        %v3626 = vmul.f32 %v3050, %v3437
        %v3627 = vmul.f32 %v3052, %v3438
        %v3628 = vmul.f32 %v3054, %v3439
        %v3629 = vmul.f32 %v3056, %v3440
        %v3630 = vmul.f32 %v3058, %v3441
        %v3631 = vmul.f32 %v3060, %v3442
        %v3632 = vmul.f32 %v3062, %v3443
        %v3633 = vmul.f32 %v3064, %v3444
        %v3634 = vmul.f32 %v3066, %v3445
        %v3635 = vmul.f32 %v3068, %v3446
        %v3636 = vmul.f32 %v3573, %v1049
        %v3637 = vmul.f32 %v3574, %v1050
        %v3638 = vmul.f32 %v3575, %v1051
        %v3639 = vmul.f32 %v3576, %v1052
        %v3640 = vmul.f32 %v3577, %v1053
        %v3641 = vmul.f32 %v3578, %v1054
        %v3642 = vmul.f32 %v3579, %v1055
        %v3643 = vmul.f32 %v3580, %v1056
        %v3644 = vmul.f32 %v3581, %v1057
        %v3645 = vmul.f32 %v3582, %v1058
        %v3646 = vmul.f32 %v3583, %v1059
        %v3647 = vmul.f32 %v3584, %v1060
        %v3648 = vmul.f32 %v3585, %v1061
        %v3649 = vmul.f32 %v3586, %v1062
        %v3650 = vmul.f32 %v3587, %v1063
        %v3651 = vmul.f32 %v3588, %v1064
        %v3652 = vmul.f32 %v3589, %v1065
        %v3653 = vmul.f32 %v3590, %v1066
        %v3654 = vmul.f32 %v3591, %v1067
        %v3655 = vmul.f32 %v3592, %v1068
        %v3656 = vmul.f32 %v3593, %v1069
        %v3657 = vmul.f32 %v3594, %v1070
        %v3658 = vmul.f32 %v3595, %v1071
        %v3659 = vmul.f32 %v3596, %v1072
        %v3660 = vmul.f32 %v3597, %v1073
        %v3661 = vmul.f32 %v3598, %v1074
        %v3662 = vmul.f32 %v3599, %v1075
        %v3663 = vmul.f32 %v3600, %v1076
        %v3664 = vmul.f32 %v3601, %v1077
        %v3665 = vmul.f32 %v3602, %v1078
        %v3666 = vmul.f32 %v3603, %v1079
        %v3667 = vmul.f32 %v3604, %v1080
        %v3668 = vmul.f32 %v3605, %v1081
        %v3669 = vmul.f32 %v3606, %v1082
        %v3670 = vmul.f32 %v3607, %v1083
        %v3671 = vmul.f32 %v3608, %v1084
        %v3672 = vmul.f32 %v3609, %v1085
        %v3673 = vmul.f32 %v3610, %v1086
        %v3674 = vmul.f32 %v3611, %v1087
        %v3675 = vmul.f32 %v3612, %v1088
        %v3676 = vmul.f32 %v3613, %v1089
        %v3677 = vmul.f32 %v3614, %v1090
        %v3678 = vmul.f32 %v3615, %v1091
        %v3679 = vmul.f32 %v3616, %v1092
        %v3680 = vmul.f32 %v3617, %v1093
        %v3681 = vmul.f32 %v3618, %v1094
        %v3682 = vmul.f32 %v3619, %v1095
        %v3683 = vmul.f32 %v3620, %v1096
        %v3684 = vmul.f32 %v3621, %v1097
        %v3685 = vmul.f32 %v3622, %v1098
        %v3686 = vmul.f32 %v3623, %v1099
        %v3687 = vmul.f32 %v3624, %v1100
        %v3688 = vmul.f32 %v3625, %v1101
        %v3689 = vmul.f32 %v3626, %v1102
        %v3690 = vmul.f32 %v3627, %v1103
        %v3691 = vmul.f32 %v3628, %v1104
        %v3692 = vmul.f32 %v3629, %v1105
        %v3693 = vmul.f32 %v3630, %v1106
        %v3694 = vmul.f32 %v3631, %v1107
        %v3695 = vmul.f32 %v3632, %v1108
        %v3696 = vmul.f32 %v3633, %v1109
        %v3697 = vmul.f32 %v3634, %v1110
        %v3698 = vmul.f32 %v3635, %v1111
        %v3699 = vadd.f32 %v3510, %v3636
        %v3700 = vadd.f32 %v3511, %v3637
        %v3701 = vadd.f32 %v3512, %v3638
        %v3702 = vadd.f32 %v3513, %v3639
        %v3703 = vadd.f32 %v3514, %v3640
        %v3704 = vadd.f32 %v3515, %v3641
        %v3705 = vadd.f32 %v3516, %v3642
        %v3706 = vadd.f32 %v3517, %v3643
        %v3707 = vadd.f32 %v3518, %v3644
        %v3708 = vadd.f32 %v3519, %v3645
        %v3709 = vadd.f32 %v3520, %v3646
        %v3710 = vadd.f32 %v3521, %v3647
        %v3711 = vadd.f32 %v3522, %v3648
        %v3712 = vadd.f32 %v3523, %v3649
        %v3713 = vadd.f32 %v3524, %v3650
        %v3714 = vadd.f32 %v3525, %v3651
        %v3715 = vadd.f32 %v3526, %v3652
        %v3716 = vadd.f32 %v3527, %v3653
        %v3717 = vadd.f32 %v3528, %v3654
        %v3718 = vadd.f32 %v3529, %v3655
        %v3719 = vadd.f32 %v3530, %v3656
        %v3720 = vadd.f32 %v3531, %v3657
        %v3721 = vadd.f32 %v3532, %v3658
        %v3722 = vadd.f32 %v3533, %v3659
        %v3723 = vadd.f32 %v3534, %v3660
        %v3724 = vadd.f32 %v3535, %v3661
        %v3725 = vadd.f32 %v3536, %v3662
        %v3726 = vadd.f32 %v3537, %v3663
        %v3727 = vadd.f32 %v3538, %v3664
        %v3728 = vadd.f32 %v3539, %v3665
        %v3729 = vadd.f32 %v3540, %v3666
        %v3730 = vadd.f32 %v3541, %v3667
        %v3731 = vadd.f32 %v3542, %v3668
        %v3732 = vadd.f32 %v3543, %v3669
        %v3733 = vadd.f32 %v3544, %v3670
        %v3734 = vadd.f32 %v3545, %v3671
        %v3735 = vadd.f32 %v3546, %v3672
        %v3736 = vadd.f32 %v3547, %v3673
        %v3737 = vadd.f32 %v3548, %v3674
        %v3738 = vadd.f32 %v3549, %v3675
        %v3739 = vadd.f32 %v3550, %v3676
        %v3740 = vadd.f32 %v3551, %v3677
        %v3741 = vadd.f32 %v3552, %v3678
        %v3742 = vadd.f32 %v3553, %v3679
        %v3743 = vadd.f32 %v3554, %v3680
        %v3744 = vadd.f32 %v3555, %v3681
        %v3745 = vadd.f32 %v3556, %v3682
        %v3746 = vadd.f32 %v3557, %v3683
        %v3747 = vadd.f32 %v3558, %v3684
        %v3748 = vadd.f32 %v3559, %v3685
        %v3749 = vadd.f32 %v3560, %v3686
        %v3750 = vadd.f32 %v3561, %v3687
        %v3751 = vadd.f32 %v3562, %v3688
        %v3752 = vadd.f32 %v3563, %v3689
        %v3753 = vadd.f32 %v3564, %v3690
        %v3754 = vadd.f32 %v3565, %v3691
        %v3755 = vadd.f32 %v3566, %v3692
        %v3756 = vadd.f32 %v3567, %v3693
        %v3757 = vadd.f32 %v3568, %v3694
        %v3758 = vadd.f32 %v3569, %v3695
        %v3759 = vadd.f32 %v3570, %v3696
        %v3760 = vadd.f32 %v3571, %v3697
        %v3761 = vadd.f32 %v3572, %v3698
        %v3762 = vmul.f32 %v3133, %v3384
        %v3763 = vmul.f32 %v3135, %v3385
        %v3764 = vmul.f32 %v3137, %v3386
        %v3765 = vmul.f32 %v3139, %v3387
        %v3766 = vmul.f32 %v3141, %v3388
        %v3767 = vmul.f32 %v3143, %v3389
        %v3768 = vmul.f32 %v3145, %v3390
        %v3769 = vmul.f32 %v3147, %v3391
        %v3770 = vmul.f32 %v3149, %v3392
        %v3771 = vmul.f32 %v3151, %v3393
        %v3772 = vmul.f32 %v3153, %v3394
        %v3773 = vmul.f32 %v3155, %v3395
        %v3774 = vmul.f32 %v3157, %v3396
        %v3775 = vmul.f32 %v3159, %v3397
        %v3776 = vmul.f32 %v3161, %v3398
        %v3777 = vmul.f32 %v3163, %v3399
        %v3778 = vmul.f32 %v3165, %v3400
        %v3779 = vmul.f32 %v3167, %v3401
        %v3780 = vmul.f32 %v3169, %v3402
        %v3781 = vmul.f32 %v3171, %v3403
        %v3782 = vmul.f32 %v3173, %v3404
        %v3783 = vmul.f32 %v3175, %v3405
        %v3784 = vmul.f32 %v3177, %v3406
        %v3785 = vmul.f32 %v3179, %v3407
        %v3786 = vmul.f32 %v3181, %v3408
        %v3787 = vmul.f32 %v3183, %v3409
        %v3788 = vmul.f32 %v3185, %v3410
        %v3789 = vmul.f32 %v3187, %v3411
        %v3790 = vmul.f32 %v3189, %v3412
        %v3791 = vmul.f32 %v3191, %v3413
        %v3792 = vmul.f32 %v3193, %v3414
        %v3793 = vmul.f32 %v3195, %v3415
        %v3794 = vmul.f32 %v3197, %v3416
        %v3795 = vmul.f32 %v3199, %v3417
        %v3796 = vmul.f32 %v3201, %v3418
        %v3797 = vmul.f32 %v3203, %v3419
        %v3798 = vmul.f32 %v3205, %v3420
        %v3799 = vmul.f32 %v3207, %v3421
        %v3800 = vmul.f32 %v3209, %v3422
        %v3801 = vmul.f32 %v3211, %v3423
        %v3802 = vmul.f32 %v3213, %v3424
        %v3803 = vmul.f32 %v3215, %v3425
        %v3804 = vmul.f32 %v3217, %v3426
        %v3805 = vmul.f32 %v3219, %v3427
        %v3806 = vmul.f32 %v3221, %v3428
        %v3807 = vmul.f32 %v3223, %v3429
        %v3808 = vmul.f32 %v3225, %v3430
        %v3809 = vmul.f32 %v3227, %v3431
        %v3810 = vmul.f32 %v3229, %v3432
        %v3811 = vmul.f32 %v3231, %v3433
        %v3812 = vmul.f32 %v3233, %v3434
        %v3813 = vmul.f32 %v3235, %v3435
        %v3814 = vmul.f32 %v3237, %v3436
        %v3815 = vmul.f32 %v3239, %v3437
        %v3816 = vmul.f32 %v3241, %v3438
        %v3817 = vmul.f32 %v3243, %v3439
        %v3818 = vmul.f32 %v3245, %v3440
        %v3819 = vmul.f32 %v3247, %v3441
        %v3820 = vmul.f32 %v3249, %v3442
        %v3821 = vmul.f32 %v3251, %v3443
        %v3822 = vmul.f32 %v3253, %v3444
        %v3823 = vmul.f32 %v3255, %v3445
        %v3824 = vmul.f32 %v3257, %v3446
        %v3825 = vmul.f32 %v3762, %v1807
        %v3826 = vmul.f32 %v3763, %v1808
        %v3827 = vmul.f32 %v3764, %v1809
        %v3828 = vmul.f32 %v3765, %v1810
        %v3829 = vmul.f32 %v3766, %v1811
        %v3830 = vmul.f32 %v3767, %v1812
        %v3831 = vmul.f32 %v3768, %v1813
        %v3832 = vmul.f32 %v3769, %v1814
        %v3833 = vmul.f32 %v3770, %v1815
        %v3834 = vmul.f32 %v3771, %v1816
        %v3835 = vmul.f32 %v3772, %v1817
        %v3836 = vmul.f32 %v3773, %v1818
        %v3837 = vmul.f32 %v3774, %v1819
        %v3838 = vmul.f32 %v3775, %v1820
        %v3839 = vmul.f32 %v3776, %v1821
        %v3840 = vmul.f32 %v3777, %v1822
        %v3841 = vmul.f32 %v3778, %v1823
        %v3842 = vmul.f32 %v3779, %v1824
        %v3843 = vmul.f32 %v3780, %v1825
        %v3844 = vmul.f32 %v3781, %v1826
        %v3845 = vmul.f32 %v3782, %v1827
        %v3846 = vmul.f32 %v3783, %v1828
        %v3847 = vmul.f32 %v3784, %v1829
        %v3848 = vmul.f32 %v3785, %v1830
        %v3849 = vmul.f32 %v3786, %v1831
        %v3850 = vmul.f32 %v3787, %v1832
        %v3851 = vmul.f32 %v3788, %v1833
        %v3852 = vmul.f32 %v3789, %v1834
        %v3853 = vmul.f32 %v3790, %v1835
        %v3854 = vmul.f32 %v3791, %v1836
        %v3855 = vmul.f32 %v3792, %v1837
        %v3856 = vmul.f32 %v3793, %v1838
        %v3857 = vmul.f32 %v3794, %v1839
        %v3858 = vmul.f32 %v3795, %v1840
        %v3859 = vmul.f32 %v3796, %v1841
        %v3860 = vmul.f32 %v3797, %v1842
        %v3861 = vmul.f32 %v3798, %v1843
        %v3862 = vmul.f32 %v3799, %v1844
        %v3863 = vmul.f32 %v3800, %v1845
        %v3864 = vmul.f32 %v3801, %v1846
        %v3865 = vmul.f32 %v3802, %v1847
        %v3866 = vmul.f32 %v3803, %v1848
        %v3867 = vmul.f32 %v3804, %v1849
        %v3868 = vmul.f32 %v3805, %v1850
        %v3869 = vmul.f32 %v3806, %v1851
        %v3870 = vmul.f32 %v3807, %v1852
        %v3871 = vmul.f32 %v3808, %v1853
        %v3872 = vmul.f32 %v3809, %v1854
        %v3873 = vmul.f32 %v3810, %v1855
        %v3874 = vmul.f32 %v3811, %v1856
        %v3875 = vmul.f32 %v3812, %v1857
        %v3876 = vmul.f32 %v3813, %v1858
        %v3877 = vmul.f32 %v3814, %v1859
        %v3878 = vmul.f32 %v3815, %v1860
        %v3879 = vmul.f32 %v3816, %v1861
        %v3880 = vmul.f32 %v3817, %v1862
        %v3881 = vmul.f32 %v3818, %v1863
        %v3882 = vmul.f32 %v3819, %v1864
        %v3883 = vmul.f32 %v3820, %v1865
        %v3884 = vmul.f32 %v3821, %v1866
        %v3885 = vmul.f32 %v3822, %v1867
        %v3886 = vmul.f32 %v3823, %v1868
        %v3887 = vmul.f32 %v3824, %v1869
        %v3888 = vadd.f32 %v3699, %v3825
        %v3889 = vadd.f32 %v3700, %v3826
        %v3890 = vadd.f32 %v3701, %v3827
        %v3891 = vadd.f32 %v3702, %v3828
        %v3892 = vadd.f32 %v3703, %v3829
        %v3893 = vadd.f32 %v3704, %v3830
        %v3894 = vadd.f32 %v3705, %v3831
        %v3895 = vadd.f32 %v3706, %v3832
        %v3896 = vadd.f32 %v3707, %v3833
        %v3897 = vadd.f32 %v3708, %v3834
        %v3898 = vadd.f32 %v3709, %v3835
        %v3899 = vadd.f32 %v3710, %v3836
        %v3900 = vadd.f32 %v3711, %v3837
        %v3901 = vadd.f32 %v3712, %v3838
        %v3902 = vadd.f32 %v3713, %v3839
        %v3903 = vadd.f32 %v3714, %v3840
        %v3904 = vadd.f32 %v3715, %v3841
        %v3905 = vadd.f32 %v3716, %v3842
        %v3906 = vadd.f32 %v3717, %v3843
        %v3907 = vadd.f32 %v3718, %v3844
        %v3908 = vadd.f32 %v3719, %v3845
        %v3909 = vadd.f32 %v3720, %v3846
        %v3910 = vadd.f32 %v3721, %v3847
        %v3911 = vadd.f32 %v3722, %v3848
        %v3912 = vadd.f32 %v3723, %v3849
        %v3913 = vadd.f32 %v3724, %v3850
        %v3914 = vadd.f32 %v3725, %v3851
        %v3915 = vadd.f32 %v3726, %v3852
        %v3916 = vadd.f32 %v3727, %v3853
        %v3917 = vadd.f32 %v3728, %v3854
        %v3918 = vadd.f32 %v3729, %v3855
        %v3919 = vadd.f32 %v3730, %v3856
        %v3920 = vadd.f32 %v3731, %v3857
        %v3921 = vadd.f32 %v3732, %v3858
        %v3922 = vadd.f32 %v3733, %v3859
        %v3923 = vadd.f32 %v3734, %v3860
        %v3924 = vadd.f32 %v3735, %v3861
        %v3925 = vadd.f32 %v3736, %v3862
        %v3926 = vadd.f32 %v3737, %v3863
        %v3927 = vadd.f32 %v3738, %v3864
        %v3928 = vadd.f32 %v3739, %v3865
        %v3929 = vadd.f32 %v3740, %v3866
        %v3930 = vadd.f32 %v3741, %v3867
        %v3931 = vadd.f32 %v3742, %v3868
        %v3932 = vadd.f32 %v3743, %v3869
        %v3933 = vadd.f32 %v3744, %v3870
        %v3934 = vadd.f32 %v3745, %v3871
        %v3935 = vadd.f32 %v3746, %v3872
        %v3936 = vadd.f32 %v3747, %v3873
        %v3937 = vadd.f32 %v3748, %v3874
        %v3938 = vadd.f32 %v3749, %v3875
        %v3939 = vadd.f32 %v3750, %v3876
        %v3940 = vadd.f32 %v3751, %v3877
        %v3941 = vadd.f32 %v3752, %v3878
        %v3942 = vadd.f32 %v3753, %v3879
        %v3943 = vadd.f32 %v3754, %v3880
        %v3944 = vadd.f32 %v3755, %v3881
        %v3945 = vadd.f32 %v3756, %v3882
        %v3946 = vadd.f32 %v3757, %v3883
        %v3947 = vadd.f32 %v3758, %v3884
        %v3948 = vadd.f32 %v3759, %v3885
        %v3949 = vadd.f32 %v3760, %v3886
        %v3950 = vadd.f32 %v3761, %v3887
        %3951 = vst [vmem:[%s248] sm:$0xff] %v3888
        %3952 = vst [vmem:[%s248 + $0x8] sm:$0xff] %v3889
        %3953 = vst [vmem:[%s248 + $0x10] sm:$0xff] %v3890
        %3954 = vst [vmem:[%s248 + $0x18] sm:$0xff] %v3891
        %3955 = vst [vmem:[%s248 + $0x20] sm:$0xff] %v3892
        %3956 = vst [vmem:[%s248 + $0x28] sm:$0xff] %v3893
        %3957 = vst [vmem:[%s248 + $0x30] sm:$0xff] %v3894
        %3958 = vst [vmem:[%s248 + $0x38] sm:$0xff] %v3895
        %3959 = vst [vmem:[%s248 + $0x40] sm:$0xff] %v3896
        %3960 = vst [vmem:[%s248 + $0x48] sm:$0xff] %v3897
        %3961 = vst [vmem:[%s248 + $0x50] sm:$0xff] %v3898
        %3962 = vst [vmem:[%s248 + $0x58] sm:$0xff] %v3899
        %3963 = vst [vmem:[%s248 + $0x60] sm:$0xff] %v3900
        %3964 = vst [vmem:[%s248 + $0x68] sm:$0xff] %v3901
        %3965 = vst [vmem:[%s248 + $0x70] sm:$0xff] %v3902
        %3966 = vst [vmem:[%s248 + $0x78] sm:$0xff] %v3903
        %3967 = vst [vmem:[%s248 + $0x80] sm:$0xff] %v3904
        %3968 = vst [vmem:[%s248 + $0x88] sm:$0xff] %v3905
        %3969 = vst [vmem:[%s248 + $0x90] sm:$0xff] %v3906
        %3970 = vst [vmem:[%s248 + $0x98] sm:$0xff] %v3907
        %3971 = vst [vmem:[%s248 + $0xa0] sm:$0xff] %v3908
        %3972 = vst [vmem:[%s248 + $0xa8] sm:$0xff] %v3909
        %3973 = vst [vmem:[%s248 + $0xb0] sm:$0xff] %v3910
        %3974 = vst [vmem:[%s248 + $0xb8] sm:$0xff] %v3911
        %3975 = vst [vmem:[%s248 + $0xc0] sm:$0xff] %v3912
        %3976 = vst [vmem:[%s248 + $0xc8] sm:$0xff] %v3913
        %3977 = vst [vmem:[%s248 + $0xd0] sm:$0xff] %v3914
        %3978 = vst [vmem:[%s248 + $0xd8] sm:$0xff] %v3915
        %3979 = vst [vmem:[%s248 + $0xe0] sm:$0xff] %v3916
        %3980 = vst [vmem:[%s248 + $0xe8] sm:$0xff] %v3917
        %3981 = vst [vmem:[%s248 + $0xf0] sm:$0xff] %v3918
        %3982 = vst [vmem:[%s248 + $0xf8] sm:$0xff] %v3919
        %3983 = vst [vmem:[%s248 + $0x100] sm:$0xff] %v3920
        %3984 = vst [vmem:[%s248 + $0x108] sm:$0xff] %v3921
        %3985 = vst [vmem:[%s248 + $0x110] sm:$0xff] %v3922
        %3986 = vst [vmem:[%s248 + $0x118] sm:$0xff] %v3923
        %3987 = vst [vmem:[%s248 + $0x120] sm:$0xff] %v3924
        %3988 = vst [vmem:[%s248 + $0x128] sm:$0xff] %v3925
        %3989 = vst [vmem:[%s248 + $0x130] sm:$0xff] %v3926
        %3990 = vst [vmem:[%s248 + $0x138] sm:$0xff] %v3927
        %3991 = vst [vmem:[%s248 + $0x140] sm:$0xff] %v3928
        %3992 = vst [vmem:[%s248 + $0x148] sm:$0xff] %v3929
        %3993 = vst [vmem:[%s248 + $0x150] sm:$0xff] %v3930
        %3994 = vst [vmem:[%s248 + $0x158] sm:$0xff] %v3931
        %3995 = vst [vmem:[%s248 + $0x160] sm:$0xff] %v3932
        %3996 = vst [vmem:[%s248 + $0x168] sm:$0xff] %v3933
        %3997 = vst [vmem:[%s248 + $0x170] sm:$0xff] %v3934
        %3998 = vst [vmem:[%s248 + $0x178] sm:$0xff] %v3935
        %3999 = vst [vmem:[%s248 + $0x180] sm:$0xff] %v3936
        %4000 = vst [vmem:[%s248 + $0x188] sm:$0xff] %v3937
        %4001 = vst [vmem:[%s248 + $0x190] sm:$0xff] %v3938
        %4002 = vst [vmem:[%s248 + $0x198] sm:$0xff] %v3939
        %4003 = vst [vmem:[%s248 + $0x1a0] sm:$0xff] %v3940
        %4004 = vst [vmem:[%s248 + $0x1a8] sm:$0xff] %v3941
        %4005 = vst [vmem:[%s248 + $0x1b0] sm:$0xff] %v3942
        %4006 = vst [vmem:[%s248 + $0x1b8] sm:$0xff] %v3943
        %4007 = vst [vmem:[%s248 + $0x1c0] sm:$0xff] %v3944
        %4008 = vst [vmem:[%s248 + $0x1c8] sm:$0xff] %v3945
        %4009 = vst [vmem:[%s248 + $0x1d0] sm:$0xff] %v3946
        %4010 = vst [vmem:[%s248 + $0x1d8] sm:$0xff] %v3947
        %4011 = vst [vmem:[%s248 + $0x1e0] sm:$0xff] %v3948
        %4012 = vst [vmem:[%s248 + $0x1e8] sm:$0xff] %v3949
        %4013 = vst [vmem:[%s248 + $0x1f0] sm:$0xff] %v3950
        %s4014 = sand.u32 %s119, 1
        %s4015 = scalar_lea.sflag [#allocation4], %s4014
        %s4016 = sand.u32 %s119, 1
        %s4017 = smul.addr %s4016, 504
        %s4018 = scalar_lea.vmem [#allocation8], %s4017
        // Predicated region
        $region49: #{tpu_custom_call.1} parent=35 // pred_check
          %p4019 = pneg %p129
        $region50: #{tpu_custom_call.1} parent=35 // pred_check_branch
          %4021 = sbr.rel (%p4019) target = $region52
        $region51: #{tpu_custom_call.1} parent=35 // pred_region
          %s4022 = smul.u32 63, %s22
          %s4023 = ssub.s32 125, %s4022
          %p4024 = scmp.lt.s32.totalorder %s4023, 63
          %s4025 = scalar_select %p4024, %s4023, 63
          %s4026 = smul.u32 128, %s4025
          %s4028 = ssub.s32 8064, %s4026
          %4029 = vsyncadd %s4015, %s4028
          %p4030 = scmp.ne.s32.totalorder 0, %s4026
          %s4031 = smul.addr %s4022, 128
          %s4032 = scalar_lea.hbm %s4, %s4031
          %s4033 = smul.u32 8, %s4025
          %s4034 = sshll.u32 %s4018, 4
          %s4035 = int_to_ptr.vmem [resolvable:$true] %s4034
          %s4036 = sshll.u32 %s4033, 4
          %4040 = dma.vmem_to_hbm [thread:$0]  (%p4030), %s4035, %s4036, %s4032, %s4015, 128, 128, 8
        $region52: #{tpu_custom_call.1} parent=35 // pred_fallthru
          _
      $region36: #{tpu_custom_call.1} parent=5 // pred_fallthru
        _
      %p4041 = scmp.le.s32.totalorder 2, %s17
      // Predicated region
      $region53: #{tpu_custom_call.1} parent=5 // pred_check
        %p4042 = pneg %p4041
      $region54: #{tpu_custom_call.1} parent=5 // pred_check_branch
        %4044 = sbr.rel (%p4042) target = $region56
      $region55: #{tpu_custom_call.1} parent=5 // pred_region
        %s4045 = ssub.s32 %s17, 2
        // Predicated region
        $region57: #{tpu_custom_call.1} parent=55 // pred_check
          %p4046 = pneg %p135
        $region58: #{tpu_custom_call.1} parent=55 // pred_check_branch
          %4048 = sbr.rel (%p4046) target = $region60
        $region59: #{tpu_custom_call.1} parent=55 // pred_region
          %s4049 = sand.u32 %s120, 1
          %s4050 = scalar_lea.sflag [#allocation4], %s4049
          %s4051 = sand.u32 %s120, 1
          %s4052 = smul.addr %s4051, 504
          %s4053 = scalar_lea.vmem [#allocation8], %s4052
          %4054 = dma.done %s4050, 8064
        $region60: #{tpu_custom_call.1} parent=55 // pred_fallthru
          _
      $region56: #{tpu_custom_call.1} parent=5 // pred_fallthru
        _
    $region6: #{tpu_custom_call.1} parent=1 // loop_footer
      %s21 = sadd.s32 1, %s17
    $region7: #{tpu_custom_call.1} parent=1 // loop_footer_branch
      %16 = sbr.rel target = $region3
    $region8: #{tpu_custom_call.1} parent=1 // loop_exit
      _
    %4055 = vsyncpa [#allocation3], 1
    %s4056 = scalar_lea.sflag [#allocation3], 1
    %4057 = vsyncpa %s4056, 1
    %4058 = vsyncpa [#allocation6], 1
    %4059 = vsyncpa [#allocation4], 1
    %s4060 = scalar_lea.sflag [#allocation4], 1
    %4061 = vsyncpa %s4060, 1

</llo_original>
